<compile_context>
chip_gen: v6e
topology: v6e:2x2x1
jax: 0.10.0
libtpu: 0.0.40
codegen_flags: <defaults>
</compile_context>

<pallas_src>
import numpy as np
import jax
import jax.numpy as jnp
from jax import lax
from jax.experimental import pallas as pl
from jax.experimental.pallas import tpu as pltpu


# ------------------------------- helpers ------------------------------------
def _layernorm(x, g, b, eps):
    mean = jnp.mean(x, axis=-1, keepdims=True)
    xc = x - mean
    var = jnp.mean(xc * xc, axis=-1, keepdims=True)
    return xc * lax.rsqrt(var + eps) * g + b


def _erf_poly(x):
    # Abramowitz & Stegun 7.1.26, |error| < 1.5e-7 -> exact-GELU (erf) semantics.
    sgn = jnp.where(x >= 0.0, 1.0, -1.0)
    a = jnp.abs(x)
    t = 1.0 / (1.0 + 0.3275911 * a)
    poly = ((((1.061405429 * t - 1.453152027) * t + 1.421413741) * t
             - 0.284496736) * t + 0.254829592) * t
    return sgn * (1.0 - poly * jnp.exp(-a * a))


def _gelu_exact(x):
    return 0.5 * x * (1.0 + _erf_poly(x * 0.7071067811865476))


# ----------------------- kernel 1: LN1 + fused QKV + rotary ------------------
def _make_qkv_rope_kernel(*, num_heads, head_size, rotary_dim, hidden, eps,
                          scaling):
    hd, rd2, H = head_size, rotary_dim // 2, hidden

    def rope(t, ca, sl, sr):
        # NeoX rotate_half via lane rotations (XLU) + per-lane cos/sin tables.
        t_plus = pltpu.roll(t, hd - rd2, axis=1)    # t[(j + rd2) % hd]
        t_minus = pltpu.roll(t, rd2, axis=1)        # t[(j - rd2) % hd]
        return t * ca + t_plus * sl + t_minus * sr

    def kernel(x_ref, g1_ref, b1_ref, wqkv_ref, bqkv_ref,
               ca_ref, sl_ref, sr_ref,
               q_ref, k_ref, v_ref):
        ln = _layernorm(x_ref[...], g1_ref[...], b1_ref[...], eps)
        ln = ln.astype(jnp.bfloat16)
        # Single fused [tq, H] @ [H, 3H] matmul: full MXU column utilisation
        # instead of 3*nh narrow N=hd dots.
        qkv = jnp.dot(ln, wqkv_ref[...],
                      preferred_element_type=jnp.float32) + bqkv_ref[...]
        ca, sl, sr = ca_ref[...], sl_ref[...], sr_ref[...]
        for h in range(num_heads):          # static, lane-aligned slices
            # Fold the head_size**-0.5 softmax scale into q here (in f32,
            # before the bf16 cast) so kernel 2 never multiplies the scores.
            qh = qkv[:, h * hd:(h + 1) * hd] * scaling
            kh = qkv[:, H + h * hd:H + (h + 1) * hd]
            vh = qkv[:, 2 * H + h * hd:2 * H + (h + 1) * hd]
            q_ref[h] = rope(qh, ca, sl, sr).astype(q_ref.dtype)
            k_ref[h] = rope(kh, ca, sl, sr).astype(k_ref.dtype)
            v_ref[h] = vh.astype(v_ref.dtype)

    return kernel


# --------------------- kernel 2: causal flash attention ----------------------
def _make_attn_kernel(*, num_heads, head_size, block_q, block_kv):
    nh, hd = num_heads, head_size
    assert block_q == block_kv

    def kernel(q_ref, k_ref, v_ref, o_ref, m_ref, l_ref, acc_ref):
        i = pl.program_id(0)          # q token tile  ("parallel")
        j = pl.program_id(1)          # kv token tile ("arbitrary", reduction)

        @pl.when(j == 0)
        def _init():
            m_ref[...] = jnp.full(m_ref.shape, float("-inf"), m_ref.dtype)
            l_ref[...] = jnp.zeros(l_ref.shape, l_ref.dtype)
            acc_ref[...] = jnp.zeros(acc_ref.shape, acc_ref.dtype)

        def flash_block(masked):
            # q is pre-scaled by hd**-0.5 in kernel 1 -> no per-block scaling.
            s = jnp.einsum("hqd,hkd->hqk", q_ref[...], k_ref[...],
                           preferred_element_type=jnp.float32)
            if masked:
                # Only the diagonal block is partially masked (block_q==block_kv
                # so local indices suffice).
                row = lax.broadcasted_iota(jnp.int32, (block_q, block_kv), 0)
                col = lax.broadcasted_iota(jnp.int32, (block_q, block_kv), 1)
                s = jnp.where((col <= row)[None], s, -1e30)
            m_prev = m_ref[...]
            m_new = jnp.maximum(m_prev, s.max(axis=-1, keepdims=True))
            alpha = jnp.exp(m_prev - m_new)
            p = jnp.exp(s - m_new)
            l_ref[...] = alpha * l_ref[...] + p.sum(axis=-1, keepdims=True)
            acc_ref[...] = alpha * acc_ref[...] + jnp.einsum(
                "hqk,hkd->hqd", p.astype(jnp.bfloat16), v_ref[...],
                preferred_element_type=jnp.float32)
            m_ref[...] = m_new

        # Unmasked fast path: no iota / compare / select on full blocks.
        @pl.when(j < i)
        def _inner():
            flash_block(masked=False)

        # Diagonal block: masked, and it is the last contributing kv block ->
        # finalize softmax and write the lane-dense [tq, H] attention output.
        @pl.when(j == i)
        def _diag():
            flash_block(masked=True)
            inv_l = pl.reciprocal(l_ref[...], approx=True)
            for h in range(nh):
                o_ref[:, h * hd:(h + 1) * hd] = (
                    acc_ref[h] * inv_l[h]).astype(o_ref.dtype)
        # TODO(synk): m/l scratch is last-dim-1 (masked vst); widen to a
        # lane-dense width if the store slot ever becomes the binding unit.

    return kernel


# --------- kernel 3: dense projection + residual + LN2 + GELU MLP ------------
def _make_proj_mlp_kernel(*, eps, use_parallel_residual, n_inter_tiles):
    def kernel(x_ref, attn_ref, wd_ref, bd_ref, g2_ref, b2ln_ref,
               w1_ref, b1_ref, w2_ref, b2_ref, o_ref,
               mlpin_ref, acc_ref):
        l = pl.program_id(1)          # intermediate-dim tile (reduction)

        @pl.when(l == 0)
        def _prologue():
            x = x_ref[...]
            attn_out = jnp.dot(attn_ref[...], wd_ref[...],
                               preferred_element_type=jnp.float32) + bd_ref[...]
            if use_parallel_residual:
                resid = attn_out + x
                mlp_in = _layernorm(x, g2_ref[...], b2ln_ref[...], eps)
            else:
                attn_out = attn_out + x
                resid = attn_out
                mlp_in = _layernorm(attn_out, g2_ref[...], b2ln_ref[...], eps)
            mlpin_ref[...] = mlp_in.astype(jnp.bfloat16)
            acc_ref[...] = resid + b2_ref[...]        # fold final bias + resid

        # Streamed MLP: W1/W2 tiles over `inter` arrive via the grid pipeline.
        h1 = jnp.dot(mlpin_ref[...], w1_ref[...],
                     preferred_element_type=jnp.float32) + b1_ref[...]
        acc_ref[...] += jnp.dot(_gelu_exact(h1).astype(jnp.bfloat16), w2_ref[...],
                                preferred_element_type=jnp.float32)

        @pl.when(l == n_inter_tiles - 1)
        def _epilogue():
            o_ref[...] = acc_ref[...].astype(o_ref.dtype)

    return kernel


# ------------------------------ wrapper (glue) -------------------------------
def gpt_neox_layer(position_ids, hidden_states, params, cfg, *,
                   block_q=128, block_kv=128, block_tok=256, block_inter=512):
    T, H = hidden_states.shape
    nh = cfg["num_attention_heads"]
    hd = H // nh
    rd = int(hd * cfg["rotary_pct"])
    assert rd % 2 == 0 and 0 < rd <= hd
    rd2 = rd // 2
    eps = cfg["layer_norm_eps"]
    scaling = hd ** -0.5
    inter = params["w1"].shape[1]

    block_q = min(block_q, T)
    block_kv = min(block_kv, T)
    block_tok = min(block_tok, T)
    block_inter = min(block_inter, inter)
    assert block_q == block_kv and block_q % 8 == 0
    assert T % block_q == 0 and T % block_tok == 0 and inter % block_inter == 0
    nq = T // block_q
    ntok = T // block_tok
    ninter = inter // block_inter

    # --- host-side parameter layout + bf16 casts for the MXU (plumbing) ---
    wqkv = params["wqkv"].astype(jnp.bfloat16)             # [H, 3H] ([Q|K|V])
    bqkv = params["bqkv"].reshape(1, 3 * H)
    wd = params["wd"].astype(jnp.bfloat16)                  # [H, H]
    w1 = params["w1"].astype(jnp.bfloat16)                  # [H, inter]
    w2 = params["w2"].astype(jnp.bfloat16)                  # [inter, H]
    # TODO(synk): on v7x (64 MiB VMEM) single-buffer the grid-invariant weight
    # specs (pipeline_mode=pl.Buffered(1)) and/or quantize wd/w1/w2 to fp8 with
    # per-channel scales once real (H=4k, inter=16k) sizes are used.

    # --- NeoX rotary tables pre-broadcast to per-lane [T, hd] form ---
    inv_freq = 1.0 / (cfg["rope_theta"] **
                      (jnp.arange(0, rd, 2, dtype=jnp.float32) / rd))
    theta = position_ids.astype(jnp.float32)[:, None] * inv_freq[None, :]
    cos, sin = jnp.cos(theta), jnp.sin(theta)                       # [T, rd2]
    pass_w = hd - rd
    ca = jnp.concatenate([cos, cos, jnp.ones((T, pass_w), jnp.float32)], -1)
    sl = jnp.concatenate([-sin, jnp.zeros((T, hd - rd2), jnp.float32)], -1)
    sr = jnp.concatenate([jnp.zeros((T, rd2), jnp.float32), sin,
                          jnp.zeros((T, pass_w), jnp.float32)], -1)

    # ----------------- kernel 1: LN1 + fused QKV projection + rope -----------
    qkv_kernel = _make_qkv_rope_kernel(num_heads=nh, head_size=hd,
                                       rotary_dim=rd, hidden=H, eps=eps,
                                       scaling=scaling)
    q_rot, k_rot, v_heads = pl.pallas_call(
        qkv_kernel,
        grid_spec=pltpu.PrefetchScalarGridSpec(
            num_scalar_prefetch=0,
            grid=(ntok,),
            in_specs=[
                pl.BlockSpec((block_tok, H), lambda i: (i, 0)),      # x
                pl.BlockSpec((1, H), lambda i: (0, 0)),              # ln1 gamma
                pl.BlockSpec((1, H), lambda i: (0, 0)),              # ln1 beta
                pl.BlockSpec((H, 3 * H), lambda i: (0, 0)),          # Wqkv
                pl.BlockSpec((1, 3 * H), lambda i: (0, 0)),          # bqkv
                pl.BlockSpec((block_tok, hd), lambda i: (i, 0)),     # cos table
                pl.BlockSpec((block_tok, hd), lambda i: (i, 0)),     # -sin table
                pl.BlockSpec((block_tok, hd), lambda i: (i, 0)),     # +sin table
            ],
            out_specs=[
                pl.BlockSpec((nh, block_tok, hd), lambda i: (0, i, 0)),
                pl.BlockSpec((nh, block_tok, hd), lambda i: (0, i, 0)),
                pl.BlockSpec((nh, block_tok, hd), lambda i: (0, i, 0)),
            ],
        ),
        out_shape=[
            jax.ShapeDtypeStruct((nh, T, hd), jnp.bfloat16),
            jax.ShapeDtypeStruct((nh, T, hd), jnp.bfloat16),
            jax.ShapeDtypeStruct((nh, T, hd), jnp.bfloat16),
        ],
        compiler_params=pltpu.CompilerParams(
            dimension_semantics=("parallel",)),
    )(hidden_states, params["ln1_g"], params["ln1_b"], wqkv, bqkv, ca, sl, sr)

    # ---------------- kernel 2: causal flash attention -----------------------
    attn_kernel = _make_attn_kernel(num_heads=nh, head_size=hd,
                                    block_q=block_q, block_kv=block_kv)
    attn_out = pl.pallas_call(
        attn_kernel,
        grid_spec=pltpu.PrefetchScalarGridSpec(
            num_scalar_prefetch=0,
            grid=(nq, nq),
            in_specs=[
                pl.BlockSpec((nh, block_q, hd), lambda i, j: (0, i, 0)),
                # Clamp the kv block index to the diagonal: fully-masked
                # (j > i) steps re-use the already-resident block -> no DMA.
                pl.BlockSpec((nh, block_kv, hd),
                             lambda i, j: (0, jnp.minimum(j, i), 0)),
                pl.BlockSpec((nh, block_kv, hd),
                             lambda i, j: (0, jnp.minimum(j, i), 0)),
            ],
            out_specs=pl.BlockSpec((block_q, H), lambda i, j: (i, 0)),
            scratch_shapes=[
                pltpu.VMEM((nh, block_q, 1), jnp.float32),   # running max
                pltpu.VMEM((nh, block_q, 1), jnp.float32),   # running denom
                pltpu.VMEM((nh, block_q, hd), jnp.float32),  # attention accum
            ],
        ),
        out_shape=jax.ShapeDtypeStruct((T, H), jnp.bfloat16),
        compiler_params=pltpu.CompilerParams(
            dimension_semantics=("parallel", "arbitrary")),
    )(q_rot, k_rot, v_heads)

    # ------ kernel 3: dense projection + residual + LN2 + GELU MLP -----------
    mlp_kernel = _make_proj_mlp_kernel(
        eps=eps, use_parallel_residual=cfg["use_parallel_residual"],
        n_inter_tiles=ninter)
    out = pl.pallas_call(
        mlp_kernel,
        grid_spec=pltpu.PrefetchScalarGridSpec(
            num_scalar_prefetch=0,
            grid=(ntok, ninter),
            in_specs=[
                pl.BlockSpec((block_tok, H), lambda i, l: (i, 0)),   # x
                pl.BlockSpec((block_tok, H), lambda i, l: (i, 0)),   # attn out
                pl.BlockSpec((H, H), lambda i, l: (0, 0)),           # Wd
                pl.BlockSpec((1, H), lambda i, l: (0, 0)),           # bd
                pl.BlockSpec((1, H), lambda i, l: (0, 0)),           # ln2 gamma
                pl.BlockSpec((1, H), lambda i, l: (0, 0)),           # ln2 beta
                pl.BlockSpec((H, block_inter), lambda i, l: (0, l)), # W1 tile
                pl.BlockSpec((1, block_inter), lambda i, l: (0, l)), # b1 tile
                pl.BlockSpec((block_inter, H), lambda i, l: (l, 0)), # W2 tile
                pl.BlockSpec((1, H), lambda i, l: (0, 0)),           # b2
            ],
            out_specs=pl.BlockSpec((block_tok, H), lambda i, l: (i, 0)),
            scratch_shapes=[
                pltpu.VMEM((block_tok, H), jnp.bfloat16),    # LN2(mlp_in) cache
                pltpu.VMEM((block_tok, H), jnp.float32),     # output accum
            ],
        ),
        out_shape=jax.ShapeDtypeStruct((T, H), hidden_states.dtype),
        compiler_params=pltpu.CompilerParams(
            dimension_semantics=("parallel", "arbitrary")),
    )(hidden_states, attn_out, wd, params["bd"],
      params["ln2_g"], params["ln2_b"], w1, params["b1"], w2, params["b2"])
    return out


# --------------------------- pure-JAX reference ------------------------------
def gpt_neox_layer_reference(position_ids, hidden_states, params, cfg):
    T, H = hidden_states.shape
    nh = cfg["num_attention_heads"]
    hd = H // nh
    rd = int(hd * cfg["rotary_pct"])
    rd2 = rd // 2
    eps = cfg["layer_norm_eps"]

    def ln(v, g, b):
        m = v.mean(-1, keepdims=True)
        var = ((v - m) ** 2).mean(-1, keepdims=True)
        return (v - m) / jnp.sqrt(var + eps) * g + b

    x = hidden_states
    attn_in = ln(x, params["ln1_g"], params["ln1_b"])
    qkv = attn_in @ params["wqkv"] + params["bqkv"]
    q, k, v = jnp.split(qkv, 3, axis=-1)
    q, k, v = (t.reshape(T, nh, hd) for t in (q, k, v))

    inv_freq = 1.0 / (cfg["rope_theta"] **
                      (jnp.arange(0, rd, 2, dtype=jnp.float32) / rd))
    th = position_ids.astype(jnp.float32)[:, None] * inv_freq[None, :]
    cos, sin = jnp.cos(th)[:, None, :], jnp.sin(th)[:, None, :]

    def rope(t):
        t1, t2, tp = t[..., :rd2], t[..., rd2:rd], t[..., rd:]
        return jnp.concatenate(
            [t1 * cos - t2 * sin, t2 * cos + t1 * sin, tp], axis=-1)

    q, k = rope(q), rope(k)
    scores = jnp.einsum("qhd,khd->hqk", q, k) * hd ** -0.5
    mask = jnp.tril(jnp.ones((T, T), dtype=bool))
    scores = jnp.where(mask[None], scores, -1e30)
    p = jax.nn.softmax(scores, axis=-1)
    attn = jnp.einsum("hqk,khd->qhd", p, v).reshape(T, H)
    attn_out = attn @ params["wd"] + params["bd"]

    if cfg["use_parallel_residual"]:
        mlp_in = ln(x, params["ln2_g"], params["ln2_b"])
    else:
        attn_out = attn_out + x
        mlp_in = ln(attn_out, params["ln2_g"], params["ln2_b"])
    h1 = mlp_in @ params["w1"] + params["b1"]
    g = 0.5 * h1 * (1.0 + jax.scipy.special.erf(h1 * 0.7071067811865476))
    mlp_out = g @ params["w2"] + params["b2"]
    if cfg["use_parallel_residual"]:
        return mlp_out + attn_out + x
    return mlp_out + attn_out


# ----------------------------------- main ------------------------------------
if __name__ == "__main__":
    # seq=512, hidden=256, 2 heads of 128 (lane-dense head dim), MLP 4*H.
    # Attention runs a 4x4 causal grid with 128-token tiles; the MLP kernel
    # streams W1/W2 over 2 intermediate tiles of 512.
    T, H, NH, INTER = 512, 256, 2, 1024

    key = jax.random.PRNGKey(0)
    ks = jax.random.split(key, 13)

    def rnd(k, shape, scale):
        return scale * jax.random.normal(k, shape, dtype=jnp.float32)

    params = {
        "ln1_g": 1.0 + rnd(ks[0], (1, H), 0.05), "ln1_b": rnd(ks[1], (1, H), 0.05),
        "ln2_g": 1.0 + rnd(ks[2], (1, H), 0.05), "ln2_b": rnd(ks[3], (1, H), 0.05),
        "wqkv": rnd(ks[4], (H, 3 * H), 0.05),    "bqkv": rnd(ks[5], (1, 3 * H), 0.02),
        "wd":   rnd(ks[6], (H, H), 0.05),        "bd":   rnd(ks[7], (1, H), 0.02),
        "w1":   rnd(ks[8], (H, INTER), 0.05),    "b1":   rnd(ks[9], (1, INTER), 0.02),
        "w2":   rnd(ks[10], (INTER, H), 0.05),   "b2":   rnd(ks[11], (1, H), 0.02),
    }
    hidden_states = rnd(ks[12], (T, H), 1.0)
    position_ids = jnp.arange(T, dtype=jnp.int32)
    # kv_cache / attn_metadata: modeled as causal prefill with an empty cache.

    for parallel_residual, rotary_pct in ((True, 0.25), (False, 1.0)):
        cfg = dict(num_attention_heads=NH, rotary_pct=rotary_pct,
                   rope_theta=10000.0, layer_norm_eps=1e-5,
                   use_parallel_residual=parallel_residual)
        out = jax.block_until_ready(
            gpt_neox_layer(position_ids, hidden_states, params, cfg,
                           block_q=128, block_kv=128,
                           block_tok=256, block_inter=512))
        ref = gpt_neox_layer_reference(position_ids, hidden_states, params, cfg)
        assert out.shape == (T, H) and out.dtype == jnp.float32
        # bf16 MXU operands / bf16 attention round-trip vs f32 reference.
        np.testing.assert_allclose(np.asarray(out), np.asarray(ref),
                                   rtol=5e-2, atol=5e-2)
    print("KERNEL_OK")
</pallas_src>

<mosaic_0001>
module attributes {stable_mosaic.version = 11 : i64} {
  func.func @kernel(%arg0: i32, %arg1: memref<256x256xf32, #tpu.memory_space<vmem>>, %arg2: memref<1x256xf32, #tpu.memory_space<vmem>>, %arg3: memref<1x256xf32, #tpu.memory_space<vmem>>, %arg4: memref<256x768xbf16, #tpu.memory_space<vmem>>, %arg5: memref<1x768xf32, #tpu.memory_space<vmem>>, %arg6: memref<256x128xf32, #tpu.memory_space<vmem>>, %arg7: memref<256x128xf32, #tpu.memory_space<vmem>>, %arg8: memref<256x128xf32, #tpu.memory_space<vmem>>, %arg9: memref<2x256x128xbf16, #tpu.memory_space<vmem>>, %arg10: memref<2x256x128xbf16, #tpu.memory_space<vmem>>, %arg11: memref<2x256x128xbf16, #tpu.memory_space<vmem>>) attributes {dimension_semantics = [#tpu.dimension_semantics<parallel>], iteration_bounds = array<i64: 2>, scalar_prefetch = 0 : i64, scratch_operands = 0 : i64, tpu.core_type = #tpu.core_type<tc>, window_params = [{transform_indices = @transform_0, window_bounds = array<i64: 256, 256>}, {pipeline_mode = #tpu.pipeline_mode<synchronous>, transform_indices = @transform_1, window_bounds = array<i64: 1, 256>}, {pipeline_mode = #tpu.pipeline_mode<synchronous>, transform_indices = @transform_2, window_bounds = array<i64: 1, 256>}, {pipeline_mode = #tpu.pipeline_mode<synchronous>, transform_indices = @transform_3, window_bounds = array<i64: 256, 768>}, {pipeline_mode = #tpu.pipeline_mode<synchronous>, transform_indices = @transform_4, window_bounds = array<i64: 1, 768>}, {transform_indices = @transform_5, window_bounds = array<i64: 256, 128>}, {transform_indices = @transform_6, window_bounds = array<i64: 256, 128>}, {transform_indices = @transform_7, window_bounds = array<i64: 256, 128>}, {transform_indices = @transform_8, window_bounds = array<i64: 2, 256, 128>}, {transform_indices = @transform_9, window_bounds = array<i64: 2, 256, 128>}, {transform_indices = @transform_10, window_bounds = array<i64: 2, 256, 128>}]} {
    %c0 = arith.constant 0 : index
    %c0_0 = arith.constant 0 : index
    %0 = vector.load %arg1[%c0, %c0_0] : memref<256x256xf32, #tpu.memory_space<vmem>>, vector<256x256xf32>
    %c0_1 = arith.constant 0 : index
    %c0_2 = arith.constant 0 : index
    %1 = vector.load %arg2[%c0_1, %c0_2] : memref<1x256xf32, #tpu.memory_space<vmem>>, vector<1x256xf32>
    %c0_3 = arith.constant 0 : index
    %c0_4 = arith.constant 0 : index
    %2 = vector.load %arg3[%c0_3, %c0_4] : memref<1x256xf32, #tpu.memory_space<vmem>>, vector<1x256xf32>
    %cst = arith.constant dense<0.000000e+00> : vector<256xf32>
    %3 = vector.multi_reduction <add>, %0, %cst [1] : vector<256x256xf32> to vector<256xf32>
    %4 = vector.shape_cast %3 : vector<256xf32> to vector<256x1xf32>
    %cst_5 = arith.constant 2.560000e+02 : f32
    %5 = vector.broadcast %cst_5 : f32 to vector<256x1xf32>
    %6 = arith.divf %4, %5 : vector<256x1xf32>
    %7 = vector.broadcast %6 : vector<256x1xf32> to vector<256x256xf32>
    %8 = arith.subf %0, %7 : vector<256x256xf32>
    %9 = arith.mulf %8, %8 : vector<256x256xf32>
    %cst_6 = arith.constant dense<0.000000e+00> : vector<256xf32>
    %10 = vector.multi_reduction <add>, %9, %cst_6 [1] : vector<256x256xf32> to vector<256xf32>
    %11 = vector.shape_cast %10 : vector<256xf32> to vector<256x1xf32>
    %cst_7 = arith.constant 2.560000e+02 : f32
    %12 = vector.broadcast %cst_7 : f32 to vector<256x1xf32>
    %13 = arith.divf %11, %12 : vector<256x1xf32>
    %cst_8 = arith.constant 9.99999974E-6 : f32
    %14 = vector.broadcast %cst_8 : f32 to vector<256x1xf32>
    %15 = arith.addf %13, %14 : vector<256x1xf32>
    %16 = math.rsqrt %15 : vector<256x1xf32>
    %17 = vector.broadcast %16 : vector<256x1xf32> to vector<256x256xf32>
    %18 = arith.mulf %8, %17 : vector<256x256xf32>
    %19 = vector.broadcast %1 : vector<1x256xf32> to vector<256x256xf32>
    %20 = arith.mulf %18, %19 : vector<256x256xf32>
    %21 = vector.broadcast %2 : vector<1x256xf32> to vector<256x256xf32>
    %22 = arith.addf %20, %21 : vector<256x256xf32>
    %23 = arith.truncf %22 : vector<256x256xf32> to vector<256x256xbf16>
    %c0_9 = arith.constant 0 : index
    %c0_10 = arith.constant 0 : index
    %24 = vector.load %arg4[%c0_9, %c0_10] : memref<256x768xbf16, #tpu.memory_space<vmem>>, vector<256x768xbf16>
    %cst_11 = arith.constant dense<0.000000e+00> : vector<256x768xf32>
    %25 = tpu.matmul %23, %24, %cst_11 {dimension_numbers = #tpu.dot_dimension_numbers<[1], [0], [0], [1], [0, 0, 1, 1], [], []>} : vector<256x256xbf16>, vector<256x768xbf16>, vector<256x768xf32> -> vector<256x768xf32>
    %c0_12 = arith.constant 0 : index
    %c0_13 = arith.constant 0 : index
    %26 = vector.load %arg5[%c0_12, %c0_13] : memref<1x768xf32, #tpu.memory_space<vmem>>, vector<1x768xf32>
    %27 = vector.broadcast %26 : vector<1x768xf32> to vector<256x768xf32>
    %28 = arith.addf %25, %27 : vector<256x768xf32>
    %c0_14 = arith.constant 0 : index
    %c0_15 = arith.constant 0 : index
    %29 = vector.load %arg6[%c0_14, %c0_15] : memref<256x128xf32, #tpu.memory_space<vmem>>, vector<256x128xf32>
    %c0_16 = arith.constant 0 : index
    %c0_17 = arith.constant 0 : index
    %30 = vector.load %arg7[%c0_16, %c0_17] : memref<256x128xf32, #tpu.memory_space<vmem>>, vector<256x128xf32>
    %c0_18 = arith.constant 0 : index
    %c0_19 = arith.constant 0 : index
    %31 = vector.load %arg8[%c0_18, %c0_19] : memref<256x128xf32, #tpu.memory_space<vmem>>, vector<256x128xf32>
    %32 = vector.extract_strided_slice %28 {offsets = [0, 0], sizes = [256, 128], strides = [1, 1]} : vector<256x768xf32> to vector<256x128xf32>
    %cst_20 = arith.constant 0.0883883461 : f32
    %33 = vector.broadcast %cst_20 : f32 to vector<256x128xf32>
    %34 = arith.mulf %32, %33 : vector<256x128xf32>
    %35 = vector.extract_strided_slice %28 {offsets = [0, 256], sizes = [256, 128], strides = [1, 1]} : vector<256x768xf32> to vector<256x128xf32>
    %36 = vector.extract_strided_slice %28 {offsets = [0, 512], sizes = [256, 128], strides = [1, 1]} : vector<256x768xf32> to vector<256x128xf32>
    %c112_i32 = arith.constant 112 : i32
    %37 = tpu.dynamic_rotate %34 by %c112_i32 dim 1 : vector<256x128xf32>, i32 -> vector<256x128xf32>
    %c16_i32 = arith.constant 16 : i32
    %38 = tpu.dynamic_rotate %34 by %c16_i32 dim 1 : vector<256x128xf32>, i32 -> vector<256x128xf32>
    %39 = arith.mulf %34, %29 : vector<256x128xf32>
    %40 = arith.mulf %37, %30 : vector<256x128xf32>
    %41 = arith.addf %39, %40 : vector<256x128xf32>
    %42 = arith.mulf %38, %31 : vector<256x128xf32>
    %43 = arith.addf %41, %42 : vector<256x128xf32>
    %44 = arith.truncf %43 : vector<256x128xf32> to vector<256x128xbf16>
    %c0_21 = arith.constant 0 : index
    %c0_22 = arith.constant 0 : index
    %c0_23 = arith.constant 0 : index
    %45 = vector.load %arg9[%c0_21, %c0_22, %c0_23] : memref<2x256x128xbf16, #tpu.memory_space<vmem>>, vector<1x256x128xbf16>
    %46 = vector.shape_cast %45 : vector<1x256x128xbf16> to vector<256x128xbf16>
    %47 = vector.shape_cast %44 : vector<256x128xbf16> to vector<1x256x128xbf16>
    tpu.vector_store %arg9[%c0_21, %c0_22, %c0_23], %47 {strides = array<i32>} : memref<2x256x128xbf16, #tpu.memory_space<vmem>>, vector<1x256x128xbf16>,
    %c112_i32_24 = arith.constant 112 : i32
    %48 = tpu.dynamic_rotate %35 by %c112_i32_24 dim 1 : vector<256x128xf32>, i32 -> vector<256x128xf32>
    %c16_i32_25 = arith.constant 16 : i32
    %49 = tpu.dynamic_rotate %35 by %c16_i32_25 dim 1 : vector<256x128xf32>, i32 -> vector<256x128xf32>
    %50 = arith.mulf %35, %29 : vector<256x128xf32>
    %51 = arith.mulf %48, %30 : vector<256x128xf32>
    %52 = arith.addf %50, %51 : vector<256x128xf32>
    %53 = arith.mulf %49, %31 : vector<256x128xf32>
    %54 = arith.addf %52, %53 : vector<256x128xf32>
    %55 = arith.truncf %54 : vector<256x128xf32> to vector<256x128xbf16>
    %c0_26 = arith.constant 0 : index
    %c0_27 = arith.constant 0 : index
    %c0_28 = arith.constant 0 : index
    %56 = vector.load %arg10[%c0_26, %c0_27, %c0_28] : memref<2x256x128xbf16, #tpu.memory_space<vmem>>, vector<1x256x128xbf16>
    %57 = vector.shape_cast %56 : vector<1x256x128xbf16> to vector<256x128xbf16>
    %58 = vector.shape_cast %55 : vector<256x128xbf16> to vector<1x256x128xbf16>
    tpu.vector_store %arg10[%c0_26, %c0_27, %c0_28], %58 {strides = array<i32>} : memref<2x256x128xbf16, #tpu.memory_space<vmem>>, vector<1x256x128xbf16>,
    %59 = arith.truncf %36 : vector<256x128xf32> to vector<256x128xbf16>
    %c0_29 = arith.constant 0 : index
    %c0_30 = arith.constant 0 : index
    %c0_31 = arith.constant 0 : index
    %60 = vector.load %arg11[%c0_29, %c0_30, %c0_31] : memref<2x256x128xbf16, #tpu.memory_space<vmem>>, vector<1x256x128xbf16>
    %61 = vector.shape_cast %60 : vector<1x256x128xbf16> to vector<256x128xbf16>
    %62 = vector.shape_cast %59 : vector<256x128xbf16> to vector<1x256x128xbf16>
    tpu.vector_store %arg11[%c0_29, %c0_30, %c0_31], %62 {strides = array<i32>} : memref<2x256x128xbf16, #tpu.memory_space<vmem>>, vector<1x256x128xbf16>,
    %63 = vector.extract_strided_slice %28 {offsets = [0, 128], sizes = [256, 128], strides = [1, 1]} : vector<256x768xf32> to vector<256x128xf32>
    %cst_32 = arith.constant 0.0883883461 : f32
    %64 = vector.broadcast %cst_32 : f32 to vector<256x128xf32>
    %65 = arith.mulf %63, %64 : vector<256x128xf32>
    %66 = vector.extract_strided_slice %28 {offsets = [0, 384], sizes = [256, 128], strides = [1, 1]} : vector<256x768xf32> to vector<256x128xf32>
    %67 = vector.extract_strided_slice %28 {offsets = [0, 640], sizes = [256, 128], strides = [1, 1]} : vector<256x768xf32> to vector<256x128xf32>
    %c112_i32_33 = arith.constant 112 : i32
    %68 = tpu.dynamic_rotate %65 by %c112_i32_33 dim 1 : vector<256x128xf32>, i32 -> vector<256x128xf32>
    %c16_i32_34 = arith.constant 16 : i32
    %69 = tpu.dynamic_rotate %65 by %c16_i32_34 dim 1 : vector<256x128xf32>, i32 -> vector<256x128xf32>
    %70 = arith.mulf %65, %29 : vector<256x128xf32>
    %71 = arith.mulf %68, %30 : vector<256x128xf32>
    %72 = arith.addf %70, %71 : vector<256x128xf32>
    %73 = arith.mulf %69, %31 : vector<256x128xf32>
    %74 = arith.addf %72, %73 : vector<256x128xf32>
    %75 = arith.truncf %74 : vector<256x128xf32> to vector<256x128xbf16>
    %c1 = arith.constant 1 : index
    %c0_35 = arith.constant 0 : index
    %c0_36 = arith.constant 0 : index
    %76 = vector.load %arg9[%c1, %c0_35, %c0_36] : memref<2x256x128xbf16, #tpu.memory_space<vmem>>, vector<1x256x128xbf16>
    %77 = vector.shape_cast %76 : vector<1x256x128xbf16> to vector<256x128xbf16>
    %78 = vector.shape_cast %75 : vector<256x128xbf16> to vector<1x256x128xbf16>
    tpu.vector_store %arg9[%c1, %c0_35, %c0_36], %78 {strides = array<i32>} : memref<2x256x128xbf16, #tpu.memory_space<vmem>>, vector<1x256x128xbf16>,
    %c112_i32_37 = arith.constant 112 : i32
    %79 = tpu.dynamic_rotate %66 by %c112_i32_37 dim 1 : vector<256x128xf32>, i32 -> vector<256x128xf32>
    %c16_i32_38 = arith.constant 16 : i32
    %80 = tpu.dynamic_rotate %66 by %c16_i32_38 dim 1 : vector<256x128xf32>, i32 -> vector<256x128xf32>
    %81 = arith.mulf %66, %29 : vector<256x128xf32>
    %82 = arith.mulf %79, %30 : vector<256x128xf32>
    %83 = arith.addf %81, %82 : vector<256x128xf32>
    %84 = arith.mulf %80, %31 : vector<256x128xf32>
    %85 = arith.addf %83, %84 : vector<256x128xf32>
    %86 = arith.truncf %85 : vector<256x128xf32> to vector<256x128xbf16>
    %c1_39 = arith.constant 1 : index
    %c0_40 = arith.constant 0 : index
    %c0_41 = arith.constant 0 : index
    %87 = vector.load %arg10[%c1_39, %c0_40, %c0_41] : memref<2x256x128xbf16, #tpu.memory_space<vmem>>, vector<1x256x128xbf16>
    %88 = vector.shape_cast %87 : vector<1x256x128xbf16> to vector<256x128xbf16>
    %89 = vector.shape_cast %86 : vector<256x128xbf16> to vector<1x256x128xbf16>
    tpu.vector_store %arg10[%c1_39, %c0_40, %c0_41], %89 {strides = array<i32>} : memref<2x256x128xbf16, #tpu.memory_space<vmem>>, vector<1x256x128xbf16>,
    %90 = arith.truncf %67 : vector<256x128xf32> to vector<256x128xbf16>
    %c1_42 = arith.constant 1 : index
    %c0_43 = arith.constant 0 : index
    %c0_44 = arith.constant 0 : index
    %91 = vector.load %arg11[%c1_42, %c0_43, %c0_44] : memref<2x256x128xbf16, #tpu.memory_space<vmem>>, vector<1x256x128xbf16>
    %92 = vector.shape_cast %91 : vector<1x256x128xbf16> to vector<256x128xbf16>
    %93 = vector.shape_cast %90 : vector<256x128xbf16> to vector<1x256x128xbf16>
    tpu.vector_store %arg11[%c1_42, %c0_43, %c0_44], %93 {strides = array<i32>} : memref<2x256x128xbf16, #tpu.memory_space<vmem>>, vector<1x256x128xbf16>,
    return
  }
  func.func @transform_0(%arg0: i32) -> (i32, i32) {
    %c0_i32 = arith.constant 0 : i32
    %c0_i32_0 = arith.constant 0 : i32
    return %arg0, %c0_i32 : i32, i32
  }
  func.func @transform_1(%arg0: i32) -> (i32, i32) {
    %c0_i32 = arith.constant 0 : i32
    %c0_i32_0 = arith.constant 0 : i32
    %c0_i32_1 = arith.constant 0 : i32
    return %c0_i32, %c0_i32_0 : i32, i32
  }
  func.func @transform_2(%arg0: i32) -> (i32, i32) {
    %c0_i32 = arith.constant 0 : i32
    %c0_i32_0 = arith.constant 0 : i32
    %c0_i32_1 = arith.constant 0 : i32
    return %c0_i32, %c0_i32_0 : i32, i32
  }
  func.func @transform_3(%arg0: i32) -> (i32, i32) {
    %c0_i32 = arith.constant 0 : i32
    %c0_i32_0 = arith.constant 0 : i32
    %c0_i32_1 = arith.constant 0 : i32
    return %c0_i32, %c0_i32_0 : i32, i32
  }
  func.func @transform_4(%arg0: i32) -> (i32, i32) {
    %c0_i32 = arith.constant 0 : i32
    %c0_i32_0 = arith.constant 0 : i32
    %c0_i32_1 = arith.constant 0 : i32
    return %c0_i32, %c0_i32_0 : i32, i32
  }
  func.func @transform_5(%arg0: i32) -> (i32, i32) {
    %c0_i32 = arith.constant 0 : i32
    %c0_i32_0 = arith.constant 0 : i32
    return %arg0, %c0_i32 : i32, i32
  }
  func.func @transform_6(%arg0: i32) -> (i32, i32) {
    %c0_i32 = arith.constant 0 : i32
    %c0_i32_0 = arith.constant 0 : i32
    return %arg0, %c0_i32 : i32, i32
  }
  func.func @transform_7(%arg0: i32) -> (i32, i32) {
    %c0_i32 = arith.constant 0 : i32
    %c0_i32_0 = arith.constant 0 : i32
    return %arg0, %c0_i32 : i32, i32
  }
  func.func @transform_8(%arg0: i32) -> (i32, i32, i32) {
    %c0_i32 = arith.constant 0 : i32
    %c0_i32_0 = arith.constant 0 : i32
    %c0_i32_1 = arith.constant 0 : i32
    return %c0_i32, %arg0, %c0_i32_0 : i32, i32, i32
  }
  func.func @transform_9(%arg0: i32) -> (i32, i32, i32) {
    %c0_i32 = arith.constant 0 : i32
    %c0_i32_0 = arith.constant 0 : i32
    %c0_i32_1 = arith.constant 0 : i32
    return %c0_i32, %arg0, %c0_i32_0 : i32, i32, i32
  }
  func.func @transform_10(%arg0: i32) -> (i32, i32, i32) {
    %c0_i32 = arith.constant 0 : i32
    %c0_i32_0 = arith.constant 0 : i32
    %c0_i32_1 = arith.constant 0 : i32
    return %c0_i32, %arg0, %c0_i32_0 : i32, i32, i32
  }
}

</mosaic_0001>

<llo_original>
// kernel: tpu_custom_call.1
$region0: #{tpu_custom_call.1}
  #allocation0 [shape = 'u32[]', space=smem, size = 0x4, offset = 0x4, fixed_abs, tag = 'smem constant byte address 0x4 - core index']
  #allocation1 [shape = 'u32[144,128]{1,0:T(1,128)}', space=vmem, size = 0x12000, scoped, tag = 'internal scratch']
  #allocation17 [shape = 's32[]', space=sflag, size = 0x4, offset = 0, fixed_abs, tag = 'sflag constant byte address 0x0 - dummy sync flag']
  #allocation19 [shape = 's32[]', space=sflag, size = 0x4, offset = 0, fixed_abs, tag = 'sflag constant byte address 0x0 - dummy sync flag']
  #allocation21 [shape = 's32[]', space=sflag, size = 0x4, offset = 0, fixed_abs, tag = 'sflag constant byte address 0x0 - dummy sync flag']
  %s0 = inlined_call_operand.hbm [shape: f32[512,256], index: 0, kind: input, shape index: {}]
  %s1 = inlined_call_operand.hbm [shape: f32[1,256], index: 1, kind: input, shape index: {}]
  %s2 = inlined_call_operand.hbm [shape: f32[1,256], index: 2, kind: input, shape index: {}]
  %s3 = inlined_call_operand.hbm [shape: bf16[256,768], index: 3, kind: input, shape index: {}]
  %s4 = inlined_call_operand.vmem [shape: f32[1,768], index: 4, kind: input, shape index: {}]
  %s5 = inlined_call_operand.hbm [shape: f32[512,128], index: 5, kind: input, shape index: {}]
  %s6 = inlined_call_operand.hbm [shape: f32[512,128], index: 6, kind: input, shape index: {}]
  %s7 = inlined_call_operand.hbm [shape: f32[512,128], index: 7, kind: input, shape index: {}]
  %s8 = inlined_call_operand.hbm [shape: bf16[2,512,128], index: 8, kind: output, shape index: {0}]
  %s9 = inlined_call_operand.hbm [shape: bf16[2,512,128], index: 9, kind: output, shape index: {1}]
  %s10 = inlined_call_operand.hbm [shape: bf16[2,512,128], index: 10, kind: output, shape index: {2}]
  %11 = xla_tuple %s8, %s9, %s10
  %s12 = sld [smem:[#allocation0]]
  $region109: #{tpu_custom_call.1} parent=0
    _
  %s14 = ssub.s32 1, %s12
  %s15 = scalar_select 0, %s14, %s12
  $region1: #{tpu_custom_call.1} parent=0
    #allocation2 [shape = 'u8[524288]{0}', space=vmem, size = 0x80000, scoped, tag = 'input window, operand 0']
    #allocation3 [shape = 's32[2]{0}', space=sflag, size = 0x8, scoped, tag = 'scoped memory for tpu_custom_call.1']
    #allocation4 [shape = 's32[2]{0}', space=sflag, size = 0x8, scoped, tag = 'scoped memory for tpu_custom_call.1']
    #allocation5 [shape = 'u8[1024]{0}', space=vmem, size = 0x400, scoped, tag = 'input window, operand 1, single buffered']
    #allocation6 [shape = 's32[1]{0}', space=sflag, size = 0x4, scoped, tag = 'scoped memory for tpu_custom_call.1']
    #allocation7 [shape = 'u8[1024]{0}', space=vmem, size = 0x400, scoped, tag = 'input window, operand 2, single buffered']
    #allocation8 [shape = 'u8[393216]{0}', space=vmem, size = 0x60000, scoped, tag = 'input window, operand 3, single buffered']
    #allocation9 [shape = 's32[1]{0}', space=sflag, size = 0x4, scoped, tag = 'scoped memory for tpu_custom_call.1']
    #allocation10 [shape = 'u8[262144]{0}', space=vmem, size = 0x40000, scoped, tag = 'input window, operand 5']
    #allocation11 [shape = 'u8[262144]{0}', space=vmem, size = 0x40000, scoped, tag = 'input window, operand 6']
    #allocation12 [shape = 'u8[262144]{0}', space=vmem, size = 0x40000, scoped, tag = 'input window, operand 7']
    #allocation13 [shape = 'u8[262144]{0}', space=vmem, size = 0x40000, scoped, tag = 'output window, operand 0']
    #allocation14 [shape = 'u8[262144]{0}', space=vmem, size = 0x40000, scoped, tag = 'output window, operand 1']
    #allocation15 [shape = 's32[2]{0}', space=sflag, size = 0x8, scoped, tag = 'scoped memory for tpu_custom_call.1']
    #allocation16 [shape = 'u8[262144]{0}', space=vmem, size = 0x40000, scoped, tag = 'output window, operand 2']
    %16 = vsyncpa [#allocation3], 0
    %s17 = scalar_lea.sflag [#allocation3], 1
    %18 = vsyncpa %s17, 0
    %19 = vsyncpa [#allocation6], 0
    %20 = vsyncpa [#allocation9], 0
    %21 = vsyncpa [#allocation4], 0
    %s22 = scalar_lea.sflag [#allocation4], 1
    %23 = vsyncpa %s22, 0
    %24 = vsyncpa [#allocation15], 0
    %s25 = scalar_lea.sflag [#allocation15], 1
    %26 = vsyncpa %s25, 0
    loop: start=0, step=1, limit=4
    $region2: #{tpu_custom_call.1} parent=1 // loop_pre_header
      _
    $region3: #{tpu_custom_call.1} parent=1 // loop_header
      %s28 = sphi 0, %s32
      %p29 = scmp.ge.s32.totalorder %s28, 4
      %s38 = sphi 0, %s40
      %s41 = sphi 0, %s38
      %s42 = sphi 0, %s41
      %s58 = sphi 0, %s42
      %s62 = sphi 0, %s62
      %s64 = sphi 0, %s62
      %s65 = sphi 0, %s64
      %s79 = sphi 0, %s65
      %s83 = sphi 0, %s83
      %s85 = sphi 0, %s83
      %s86 = sphi 0, %s85
      %s100 = sphi 0, %s86
      %s104 = sphi 0, %s104
      %s106 = sphi 0, %s104
      %s107 = sphi 0, %s106
      %s121 = sphi 0, %s107
      %s125 = sphi 0, %s125
      %s127 = sphi 0, %s125
      %s128 = sphi 0, %s127
      %s142 = sphi 0, %s128
      %s148 = sphi 0, %s150
      %s151 = sphi 0, %s148
      %s152 = sphi 0, %s151
      %s168 = sphi 0, %s152
      %s174 = sphi 0, %s176
      %s177 = sphi 0, %s174
      %s178 = sphi 0, %s177
      %s194 = sphi 0, %s178
      %s200 = sphi 0, %s202
      %s203 = sphi 0, %s200
      %s204 = sphi 0, %s203
      %s220 = sphi 0, %s204
      %s226 = sphi 0, %s228
      %s229 = sphi 0, %s226
      %s230 = sphi 0, %s229
      %s246 = sphi 0, %s230
      %s252 = sphi 0, %s254
      %s255 = sphi 0, %s252
      %s256 = sphi 0, %s255
      %s272 = sphi 0, %s256
      %s278 = sphi 0, %s280
      %s281 = sphi 0, %s278
      %s282 = sphi 0, %s281
      %s298 = sphi 0, %s282
    $region4: #{tpu_custom_call.1} parent=1 // loop_header_branch
      %31 = sbr.rel (%p29) target = $region8
    $region5: #{tpu_custom_call.1} parent=1 // loop_body
      %s33 = ssub.s32 %s28, 1
      %s34 = ssub.s32 %s28, 2
      %s35 = sadd.s32 %s28, 1
      %s36 = ssub.s32 %s28, %s35
      %p37 = scmp.eq.s32.totalorder %s36, 0
      %s39 = sadd.s32 %s38, 1
      %s40 = scalar_select %p37, %s38, %s39
      %p43 = pneg %p37
      %p44 = scmp.eq.s32.totalorder %s28, 1
      %p45 = por %p43, %p44
      %p46 = scmp.ne.s32.totalorder %s38, %s41
      %p47 = scmp.eq.s32.totalorder %s28, 0
      %p48 = por %p46, %p47
      %p49 = scmp.ne.s32.totalorder %s38, %s41
      %p50 = scmp.eq.s32.totalorder %s33, 1
      %p51 = por %p49, %p50
      %p52 = scmp.ne.s32.totalorder %s41, %s42
      %p53 = scmp.eq.s32.totalorder %s33, 0
      %p54 = por %p52, %p53
      %p55 = scmp.ne.s32.totalorder %s41, %s42
      %p56 = scmp.eq.s32.totalorder %s34, 1
      %p57 = por %p55, %p56
      %p59 = scmp.ne.s32.totalorder %s42, %s58
      %p60 = scmp.eq.s32.totalorder %s34, 0
      %p61 = por %p59, %p60
      %s63 = sadd.s32 %s62, 1
      %p66 = scmp.eq.s32.totalorder %s28, 1
      %p67 = scmp.ne.s32.totalorder %s62, %s64
      %p68 = scmp.eq.s32.totalorder %s28, 0
      %p69 = por %p67, %p68
      %p70 = scmp.ne.s32.totalorder %s62, %s64
      %p71 = scmp.eq.s32.totalorder %s33, 1
      %p72 = por %p70, %p71
      %p73 = scmp.ne.s32.totalorder %s64, %s65
      %p74 = scmp.eq.s32.totalorder %s33, 0
      %p75 = por %p73, %p74
      %p76 = scmp.ne.s32.totalorder %s64, %s65
      %p77 = scmp.eq.s32.totalorder %s34, 1
      %p78 = por %p76, %p77
      %p80 = scmp.ne.s32.totalorder %s65, %s79
      %p81 = scmp.eq.s32.totalorder %s34, 0
      %p82 = por %p80, %p81
      %s84 = sadd.s32 %s83, 1
      %p87 = scmp.eq.s32.totalorder %s28, 1
      %p88 = scmp.ne.s32.totalorder %s83, %s85
      %p89 = scmp.eq.s32.totalorder %s28, 0
      %p90 = por %p88, %p89
      %p91 = scmp.ne.s32.totalorder %s83, %s85
      %p92 = scmp.eq.s32.totalorder %s33, 1
      %p93 = por %p91, %p92
      %p94 = scmp.ne.s32.totalorder %s85, %s86
      %p95 = scmp.eq.s32.totalorder %s33, 0
      %p96 = por %p94, %p95
      %p97 = scmp.ne.s32.totalorder %s85, %s86
      %p98 = scmp.eq.s32.totalorder %s34, 1
      %p99 = por %p97, %p98
      %p101 = scmp.ne.s32.totalorder %s86, %s100
      %p102 = scmp.eq.s32.totalorder %s34, 0
      %p103 = por %p101, %p102
      %s105 = sadd.s32 %s104, 1
      %p108 = scmp.eq.s32.totalorder %s28, 1
      %p109 = scmp.ne.s32.totalorder %s104, %s106
      %p110 = scmp.eq.s32.totalorder %s28, 0
      %p111 = por %p109, %p110
      %p112 = scmp.ne.s32.totalorder %s104, %s106
      %p113 = scmp.eq.s32.totalorder %s33, 1
      %p114 = por %p112, %p113
      %p115 = scmp.ne.s32.totalorder %s106, %s107
      %p116 = scmp.eq.s32.totalorder %s33, 0
      %p117 = por %p115, %p116
      %p118 = scmp.ne.s32.totalorder %s106, %s107
      %p119 = scmp.eq.s32.totalorder %s34, 1
      %p120 = por %p118, %p119
      %p122 = scmp.ne.s32.totalorder %s107, %s121
      %p123 = scmp.eq.s32.totalorder %s34, 0
      %p124 = por %p122, %p123
      %s126 = sadd.s32 %s125, 1
      %p129 = scmp.eq.s32.totalorder %s28, 1
      %p130 = scmp.ne.s32.totalorder %s125, %s127
      %p131 = scmp.eq.s32.totalorder %s28, 0
      %p132 = por %p130, %p131
      %p133 = scmp.ne.s32.totalorder %s125, %s127
      %p134 = scmp.eq.s32.totalorder %s33, 1
      %p135 = por %p133, %p134
      %p136 = scmp.ne.s32.totalorder %s127, %s128
      %p137 = scmp.eq.s32.totalorder %s33, 0
      %p138 = por %p136, %p137
      %p139 = scmp.ne.s32.totalorder %s127, %s128
      %p140 = scmp.eq.s32.totalorder %s34, 1
      %p141 = por %p139, %p140
      %p143 = scmp.ne.s32.totalorder %s128, %s142
      %p144 = scmp.eq.s32.totalorder %s34, 0
      %p145 = por %p143, %p144
      %s146 = ssub.s32 %s28, %s35
      %p147 = scmp.eq.s32.totalorder %s146, 0
      %s149 = sadd.s32 %s148, 1
      %s150 = scalar_select %p147, %s148, %s149
      %p153 = pneg %p147
      %p154 = scmp.eq.s32.totalorder %s28, 1
      %p155 = por %p153, %p154
      %p156 = scmp.ne.s32.totalorder %s148, %s151
      %p157 = scmp.eq.s32.totalorder %s28, 0
      %p158 = por %p156, %p157
      %p159 = scmp.ne.s32.totalorder %s148, %s151
      %p160 = scmp.eq.s32.totalorder %s33, 1
      %p161 = por %p159, %p160
      %p162 = scmp.ne.s32.totalorder %s151, %s152
      %p163 = scmp.eq.s32.totalorder %s33, 0
      %p164 = por %p162, %p163
      %p165 = scmp.ne.s32.totalorder %s151, %s152
      %p166 = scmp.eq.s32.totalorder %s34, 1
      %p167 = por %p165, %p166
      %p169 = scmp.ne.s32.totalorder %s152, %s168
      %p170 = scmp.eq.s32.totalorder %s34, 0
      %p171 = por %p169, %p170
      %s172 = ssub.s32 %s28, %s35
      %p173 = scmp.eq.s32.totalorder %s172, 0
      %s175 = sadd.s32 %s174, 1
      %s176 = scalar_select %p173, %s174, %s175
      %p179 = pneg %p173
      %p180 = scmp.eq.s32.totalorder %s28, 1
      %p181 = por %p179, %p180
      %p182 = scmp.ne.s32.totalorder %s174, %s177
      %p183 = scmp.eq.s32.totalorder %s28, 0
      %p184 = por %p182, %p183
      %p185 = scmp.ne.s32.totalorder %s174, %s177
      %p186 = scmp.eq.s32.totalorder %s33, 1
      %p187 = por %p185, %p186
      %p188 = scmp.ne.s32.totalorder %s177, %s178
      %p189 = scmp.eq.s32.totalorder %s33, 0
      %p190 = por %p188, %p189
      %p191 = scmp.ne.s32.totalorder %s177, %s178
      %p192 = scmp.eq.s32.totalorder %s34, 1
      %p193 = por %p191, %p192
      %p195 = scmp.ne.s32.totalorder %s178, %s194
      %p196 = scmp.eq.s32.totalorder %s34, 0
      %p197 = por %p195, %p196
      %s198 = ssub.s32 %s28, %s35
      %p199 = scmp.eq.s32.totalorder %s198, 0
      %s201 = sadd.s32 %s200, 1
      %s202 = scalar_select %p199, %s200, %s201
      %p205 = pneg %p199
      %p206 = scmp.eq.s32.totalorder %s28, 1
      %p207 = por %p205, %p206
      %p208 = scmp.ne.s32.totalorder %s200, %s203
      %p209 = scmp.eq.s32.totalorder %s28, 0
      %p210 = por %p208, %p209
      %p211 = scmp.ne.s32.totalorder %s200, %s203
      %p212 = scmp.eq.s32.totalorder %s33, 1
      %p213 = por %p211, %p212
      %p214 = scmp.ne.s32.totalorder %s203, %s204
      %p215 = scmp.eq.s32.totalorder %s33, 0
      %p216 = por %p214, %p215
      %p217 = scmp.ne.s32.totalorder %s203, %s204
      %p218 = scmp.eq.s32.totalorder %s34, 1
      %p219 = por %p217, %p218
      %p221 = scmp.ne.s32.totalorder %s204, %s220
      %p222 = scmp.eq.s32.totalorder %s34, 0
      %p223 = por %p221, %p222
      %s224 = ssub.s32 %s28, %s35
      %p225 = scmp.eq.s32.totalorder %s224, 0
      %s227 = sadd.s32 %s226, 1
      %s228 = scalar_select %p225, %s226, %s227
      %p231 = pneg %p225
      %p232 = scmp.eq.s32.totalorder %s28, 1
      %p233 = por %p231, %p232
      %p234 = scmp.ne.s32.totalorder %s226, %s229
      %p235 = scmp.eq.s32.totalorder %s28, 0
      %p236 = por %p234, %p235
      %p237 = scmp.ne.s32.totalorder %s226, %s229
      %p238 = scmp.eq.s32.totalorder %s33, 1
      %p239 = por %p237, %p238
      %p240 = scmp.ne.s32.totalorder %s229, %s230
      %p241 = scmp.eq.s32.totalorder %s33, 0
      %p242 = por %p240, %p241
      %p243 = scmp.ne.s32.totalorder %s229, %s230
      %p244 = scmp.eq.s32.totalorder %s34, 1
      %p245 = por %p243, %p244
      %p247 = scmp.ne.s32.totalorder %s230, %s246
      %p248 = scmp.eq.s32.totalorder %s34, 0
      %p249 = por %p247, %p248
      %s250 = ssub.s32 %s28, %s35
      %p251 = scmp.eq.s32.totalorder %s250, 0
      %s253 = sadd.s32 %s252, 1
      %s254 = scalar_select %p251, %s252, %s253
      %p257 = pneg %p251
      %p258 = scmp.eq.s32.totalorder %s28, 1
      %p259 = por %p257, %p258
      %p260 = scmp.ne.s32.totalorder %s252, %s255
      %p261 = scmp.eq.s32.totalorder %s28, 0
      %p262 = por %p260, %p261
      %p263 = scmp.ne.s32.totalorder %s252, %s255
      %p264 = scmp.eq.s32.totalorder %s33, 1
      %p265 = por %p263, %p264
      %p266 = scmp.ne.s32.totalorder %s255, %s256
      %p267 = scmp.eq.s32.totalorder %s33, 0
      %p268 = por %p266, %p267
      %p269 = scmp.ne.s32.totalorder %s255, %s256
      %p270 = scmp.eq.s32.totalorder %s34, 1
      %p271 = por %p269, %p270
      %p273 = scmp.ne.s32.totalorder %s256, %s272
      %p274 = scmp.eq.s32.totalorder %s34, 0
      %p275 = por %p273, %p274
      %s276 = ssub.s32 %s28, %s35
      %p277 = scmp.eq.s32.totalorder %s276, 0
      %s279 = sadd.s32 %s278, 1
      %s280 = scalar_select %p277, %s278, %s279
      %p283 = pneg %p277
      %p284 = scmp.eq.s32.totalorder %s28, 1
      %p285 = por %p283, %p284
      %p286 = scmp.ne.s32.totalorder %s278, %s281
      %p287 = scmp.eq.s32.totalorder %s28, 0
      %p288 = por %p286, %p287
      %p289 = scmp.ne.s32.totalorder %s278, %s281
      %p290 = scmp.eq.s32.totalorder %s33, 1
      %p291 = por %p289, %p290
      %p292 = scmp.ne.s32.totalorder %s281, %s282
      %p293 = scmp.eq.s32.totalorder %s33, 0
      %p294 = por %p292, %p293
      %p295 = scmp.ne.s32.totalorder %s281, %s282
      %p296 = scmp.eq.s32.totalorder %s34, 1
      %p297 = por %p295, %p296
      %p299 = scmp.ne.s32.totalorder %s282, %s298
      %p300 = scmp.eq.s32.totalorder %s34, 0
      %p301 = por %p299, %p300
      %p302 = scmp.le.s32.totalorder 1, %s28
      %p303 = scmp.lt.s32.totalorder %s28, 3
      %p304 = pnand %p302, %p303
      %p305 = pneg %p304
      // Predicated region
      $region9: #{tpu_custom_call.1} parent=5 // pred_check
        _
      $region10: #{tpu_custom_call.1} parent=5 // pred_check_branch
        %307 = sbr.rel (%p304) target = $region12
      $region11: #{tpu_custom_call.1} parent=5 // pred_region
        %s308 = ssub.s32 %s28, 1
        // Predicated region
        $region13: #{tpu_custom_call.1} parent=11 // pred_check
          %p309 = pneg %p75
        $region14: #{tpu_custom_call.1} parent=11 // pred_check_branch
          %311 = sbr.rel (%p309) target = $region16
        $region15: #{tpu_custom_call.1} parent=11 // pred_region
          %s313 = ssub.s32 32, 32
          %314 = vsyncadd [#allocation6], %s313
          %s316 = sshll.u32 [#allocation5], 4
          %s317 = int_to_ptr.vmem [resolvable:$true] %s316
          %319 = dma.hbm_to_vmem [thread:$0]  %s1, 32, %s317, [#allocation6]
        $region16: #{tpu_custom_call.1} parent=11 // pred_fallthru
          _
        // Predicated region
        $region17: #{tpu_custom_call.1} parent=11 // pred_check
          %p320 = pneg %p96
        $region18: #{tpu_custom_call.1} parent=11 // pred_check_branch
          %322 = sbr.rel (%p320) target = $region20
        $region19: #{tpu_custom_call.1} parent=11 // pred_region
          %s324 = ssub.s32 32, 32
          %325 = vsyncadd [#allocation6], %s324
          %s327 = sshll.u32 [#allocation7], 4
          %s328 = int_to_ptr.vmem [resolvable:$true] %s327
          %330 = dma.hbm_to_vmem [thread:$0]  %s2, 32, %s328, [#allocation6]
        $region20: #{tpu_custom_call.1} parent=11 // pred_fallthru
          _
        // Predicated region
        $region21: #{tpu_custom_call.1} parent=11 // pred_check
          %p331 = pneg %p117
        $region22: #{tpu_custom_call.1} parent=11 // pred_check_branch
          %333 = sbr.rel (%p331) target = $region24
        $region23: #{tpu_custom_call.1} parent=11 // pred_region
          %s335 = ssub.s32 12288, 12288
          %336 = vsyncadd [#allocation9], %s335
          %s337 = sshll.u32 [#allocation8], 4
          %s338 = int_to_ptr.vmem [resolvable:$true] %s337
          %343 = dma.hbm_to_vmem [thread:$0]  %s3, 12288, %s338, [#allocation9], 384, 384, 24
        $region24: #{tpu_custom_call.1} parent=11 // pred_fallthru
          _
        // Predicated region
        $region25: #{tpu_custom_call.1} parent=11 // pred_check
          %p344 = pneg %p138
        $region26: #{tpu_custom_call.1} parent=11 // pred_check_branch
          %346 = sbr.rel (%p344) target = $region28
        $region27: #{tpu_custom_call.1} parent=11 // pred_region
          _
        $region28: #{tpu_custom_call.1} parent=11 // pred_fallthru
          _
      $region12: #{tpu_custom_call.1} parent=5 // pred_fallthru
        _
      %p347 = scmp.lt.s32.totalorder %s28, 2
      // Predicated region
      $region29: #{tpu_custom_call.1} parent=5 // pred_check
        %p348 = pneg %p347
      $region30: #{tpu_custom_call.1} parent=5 // pred_check_branch
        %350 = sbr.rel (%p348) target = $region32
      $region31: #{tpu_custom_call.1} parent=5 // pred_region
        // Predicated region
        $region33: #{tpu_custom_call.1} parent=31 // pred_check
          %p351 = pneg %p48
        $region34: #{tpu_custom_call.1} parent=31 // pred_check_branch
          %353 = sbr.rel (%p351) target = $region36
        $region35: #{tpu_custom_call.1} parent=31 // pred_region
          %s354 = sand.u32 %s28, 1
          %s355 = scalar_lea.sflag [#allocation3], %s354
          %s356 = sand.u32 %s38, 1
          %s357 = smul.addr %s356, 512
          %s358 = scalar_lea.vmem [#allocation2], %s357
          %s359 = smul.u32 32, %s28
          %s361 = ssub.s32 8192, 8192
          %362 = vsyncadd %s355, %s361
          %s363 = smul.addr %s359, 2
          %s364 = smul.addr %s363, 128
          %s365 = scalar_lea.hbm %s0, %s364
          %s366 = sshll.u32 %s358, 4
          %s367 = int_to_ptr.vmem [resolvable:$true] %s366
          %372 = dma.hbm_to_vmem [thread:$0]  %s365, 8192, %s367, %s355, 256, 256, 16
        $region36: #{tpu_custom_call.1} parent=31 // pred_fallthru
          _
        // Predicated region
        $region37: #{tpu_custom_call.1} parent=31 // pred_check
          %p373 = pneg %p158
        $region38: #{tpu_custom_call.1} parent=31 // pred_check_branch
          %375 = sbr.rel (%p373) target = $region40
        $region39: #{tpu_custom_call.1} parent=31 // pred_region
          %s376 = sand.u32 %s28, 1
          %s377 = scalar_lea.sflag [#allocation3], %s376
          %s378 = sand.u32 %s148, 1
          %s379 = smul.addr %s378, 256
          %s380 = scalar_lea.vmem [#allocation10], %s379
          %s381 = smul.u32 32, %s28
          %s383 = ssub.s32 4096, 4096
          %384 = vsyncadd %s377, %s383
          %s385 = smul.addr %s381, 128
          %s386 = scalar_lea.hbm %s5, %s385
          %s387 = sshll.u32 %s380, 4
          %s388 = int_to_ptr.vmem [resolvable:$true] %s387
          %393 = dma.hbm_to_vmem [thread:$0]  %s386, 4096, %s388, %s377, 128, 128, 8
        $region40: #{tpu_custom_call.1} parent=31 // pred_fallthru
          _
        // Predicated region
        $region41: #{tpu_custom_call.1} parent=31 // pred_check
          %p394 = pneg %p184
        $region42: #{tpu_custom_call.1} parent=31 // pred_check_branch
          %396 = sbr.rel (%p394) target = $region44
        $region43: #{tpu_custom_call.1} parent=31 // pred_region
          %s397 = sand.u32 %s28, 1
          %s398 = scalar_lea.sflag [#allocation3], %s397
          %s399 = sand.u32 %s174, 1
          %s400 = smul.addr %s399, 256
          %s401 = scalar_lea.vmem [#allocation11], %s400
          %s402 = smul.u32 32, %s28
          %s404 = ssub.s32 4096, 4096
          %405 = vsyncadd %s398, %s404
          %s406 = smul.addr %s402, 128
          %s407 = scalar_lea.hbm %s6, %s406
          %s408 = sshll.u32 %s401, 4
          %s409 = int_to_ptr.vmem [resolvable:$true] %s408
          %414 = dma.hbm_to_vmem [thread:$0]  %s407, 4096, %s409, %s398, 128, 128, 8
        $region44: #{tpu_custom_call.1} parent=31 // pred_fallthru
          _
        // Predicated region
        $region45: #{tpu_custom_call.1} parent=31 // pred_check
          %p415 = pneg %p210
        $region46: #{tpu_custom_call.1} parent=31 // pred_check_branch
          %417 = sbr.rel (%p415) target = $region48
        $region47: #{tpu_custom_call.1} parent=31 // pred_region
          %s418 = sand.u32 %s28, 1
          %s419 = scalar_lea.sflag [#allocation3], %s418
          %s420 = sand.u32 %s200, 1
          %s421 = smul.addr %s420, 256
          %s422 = scalar_lea.vmem [#allocation12], %s421
          %s423 = smul.u32 32, %s28
          %s425 = ssub.s32 4096, 4096
          %426 = vsyncadd %s419, %s425
          %s427 = smul.addr %s423, 128
          %s428 = scalar_lea.hbm %s7, %s427
          %s429 = sshll.u32 %s422, 4
          %s430 = int_to_ptr.vmem [resolvable:$true] %s429
          %435 = dma.hbm_to_vmem [thread:$0]  %s428, 4096, %s430, %s419, 128, 128, 8
        $region48: #{tpu_custom_call.1} parent=31 // pred_fallthru
          _
      $region32: #{tpu_custom_call.1} parent=5 // pred_fallthru
        _
      %p436 = scmp.le.s32.totalorder 1, %s28
      %p437 = scmp.lt.s32.totalorder %s28, 3
      %p438 = pnand %p436, %p437
      %p439 = pneg %p438
      // Predicated region
      $region49: #{tpu_custom_call.1} parent=5 // pred_check
        _
      $region50: #{tpu_custom_call.1} parent=5 // pred_check_branch
        %441 = sbr.rel (%p438) target = $region52
      $region51: #{tpu_custom_call.1} parent=5 // pred_region
        %s442 = ssub.s32 %s28, 1
        %s443 = sand.u32 %s33, 1
        %s444 = scalar_lea.sflag [#allocation3], %s443
        %s445 = sand.u32 %s41, 1
        %s446 = smul.addr %s445, 512
        %s447 = scalar_lea.vmem [#allocation2], %s446
        // Predicated region
        $region53: #{tpu_custom_call.1} parent=51 // pred_check
          %p448 = pneg %p54
        $region54: #{tpu_custom_call.1} parent=51 // pred_check_branch
          %450 = sbr.rel (%p448) target = $region56
        $region55: #{tpu_custom_call.1} parent=51 // pred_region
          %451 = dma.done %s444, 8192
        $region56: #{tpu_custom_call.1} parent=51 // pred_fallthru
          _
        // Predicated region
        $region57: #{tpu_custom_call.1} parent=51 // pred_check
          %p452 = pneg %p75
        $region58: #{tpu_custom_call.1} parent=51 // pred_check_branch
          %454 = sbr.rel (%p452) target = $region60
        $region59: #{tpu_custom_call.1} parent=51 // pred_region
          %455 = dma.done [#allocation6], 32
        $region60: #{tpu_custom_call.1} parent=51 // pred_fallthru
          _
        // Predicated region
        $region61: #{tpu_custom_call.1} parent=51 // pred_check
          %p456 = pneg %p96
        $region62: #{tpu_custom_call.1} parent=51 // pred_check_branch
          %458 = sbr.rel (%p456) target = $region64
        $region63: #{tpu_custom_call.1} parent=51 // pred_region
          %459 = dma.done [#allocation6], 32
        $region64: #{tpu_custom_call.1} parent=51 // pred_fallthru
          _
        // Predicated region
        $region65: #{tpu_custom_call.1} parent=51 // pred_check
          %p460 = pneg %p117
        $region66: #{tpu_custom_call.1} parent=51 // pred_check_branch
          %462 = sbr.rel (%p460) target = $region68
        $region67: #{tpu_custom_call.1} parent=51 // pred_region
          %463 = dma.done [#allocation9], 12288
        $region68: #{tpu_custom_call.1} parent=51 // pred_fallthru
          _
        %s464 = sand.u32 %s33, 1
        %s465 = scalar_lea.sflag [#allocation3], %s464
        %s466 = sand.u32 %s151, 1
        %s467 = smul.addr %s466, 256
        %s468 = scalar_lea.vmem [#allocation10], %s467
        // Predicated region
        $region69: #{tpu_custom_call.1} parent=51 // pred_check
          %p469 = pneg %p164
        $region70: #{tpu_custom_call.1} parent=51 // pred_check_branch
          %471 = sbr.rel (%p469) target = $region72
        $region71: #{tpu_custom_call.1} parent=51 // pred_region
          %472 = dma.done %s465, 4096
        $region72: #{tpu_custom_call.1} parent=51 // pred_fallthru
          _
        %s473 = sand.u32 %s33, 1
        %s474 = scalar_lea.sflag [#allocation3], %s473
        %s475 = sand.u32 %s177, 1
        %s476 = smul.addr %s475, 256
        %s477 = scalar_lea.vmem [#allocation11], %s476
        // Predicated region
        $region73: #{tpu_custom_call.1} parent=51 // pred_check
          %p478 = pneg %p190
        $region74: #{tpu_custom_call.1} parent=51 // pred_check_branch
          %480 = sbr.rel (%p478) target = $region76
        $region75: #{tpu_custom_call.1} parent=51 // pred_region
          %481 = dma.done %s474, 4096
        $region76: #{tpu_custom_call.1} parent=51 // pred_fallthru
          _
        %s482 = sand.u32 %s33, 1
        %s483 = scalar_lea.sflag [#allocation3], %s482
        %s484 = sand.u32 %s203, 1
        %s485 = smul.addr %s484, 256
        %s486 = scalar_lea.vmem [#allocation12], %s485
        // Predicated region
        $region77: #{tpu_custom_call.1} parent=51 // pred_check
          %p487 = pneg %p216
        $region78: #{tpu_custom_call.1} parent=51 // pred_check_branch
          %489 = sbr.rel (%p487) target = $region80
        $region79: #{tpu_custom_call.1} parent=51 // pred_region
          %490 = dma.done %s483, 4096
        $region80: #{tpu_custom_call.1} parent=51 // pred_fallthru
          _
        %s491 = sand.u32 %s33, 1
        %s492 = scalar_lea.sflag [#allocation3], %s491
        %s493 = sand.u32 %s41, 1
        %s494 = smul.addr %s493, 512
        %s495 = scalar_lea.vmem [#allocation2], %s494
        %p496 = pneg %p54
        %p497 = pneg %p51
        %p498 = pneg %p75
        %p499 = pneg %p72
        %p500 = pneg %p96
        %p501 = pneg %p93
        %p502 = pneg %p117
        %p503 = pneg %p114
        %p504 = pneg %p138
        %p505 = pneg %p135
        %s506 = sand.u32 %s33, 1
        %s507 = scalar_lea.sflag [#allocation3], %s506
        %s508 = sand.u32 %s151, 1
        %s509 = smul.addr %s508, 256
        %s510 = scalar_lea.vmem [#allocation10], %s509
        %p511 = pneg %p164
        %p512 = pneg %p161
        %s513 = sand.u32 %s33, 1
        %s514 = scalar_lea.sflag [#allocation3], %s513
        %s515 = sand.u32 %s177, 1
        %s516 = smul.addr %s515, 256
        %s517 = scalar_lea.vmem [#allocation11], %s516
        %p518 = pneg %p190
        %p519 = pneg %p187
        %s520 = sand.u32 %s33, 1
        %s521 = scalar_lea.sflag [#allocation3], %s520
        %s522 = sand.u32 %s203, 1
        %s523 = smul.addr %s522, 256
        %s524 = scalar_lea.vmem [#allocation12], %s523
        %p525 = pneg %p216
        %p526 = pneg %p213
        %p527 = pneg %p242
        %p528 = pneg %p239
        %s529 = sand.u32 %s229, 1
        %s530 = scalar_lea.sflag [#allocation4], %s529
        %s531 = sand.u32 %s229, 1
        %s532 = smul.addr %s531, 256
        %s533 = scalar_lea.vmem [#allocation13], %s532
        %p534 = pneg %p268
        %p535 = pneg %p265
        %s536 = sand.u32 %s33, 1
        %s537 = scalar_lea.sflag [#allocation15], %s536
        %s538 = sand.u32 %s255, 1
        %s539 = smul.addr %s538, 256
        %s540 = scalar_lea.vmem [#allocation14], %s539
        %p541 = pneg %p294
        %p542 = pneg %p291
        %s543 = sand.u32 %s33, 1
        %s544 = scalar_lea.sflag [#allocation15], %s543
        %s545 = sand.u32 %s281, 1
        %s546 = smul.addr %s545, 256
        %s547 = scalar_lea.vmem [#allocation16], %s546
        %s548 = smul.u32 32, %s33
        %s549 = smul.u32 32, %s33
        %s550 = smul.u32 32, %s33
        %s551 = smul.u32 32, %s33
        %s552 = smul.u32 32, %s33
        %s553 = smul.u32 32, %s33
        %s554 = smul.u32 32, %s33
        %v555 = vld [vmem:[%s447] sm:$0xff]
        %v556 = vld [vmem:[%s447 + $0x8] sm:$0xff]
        %v557 = vld [vmem:[%s447 + $0x10] sm:$0xff]
        %v558 = vld [vmem:[%s447 + $0x18] sm:$0xff]
        %v559 = vld [vmem:[%s447 + $0x20] sm:$0xff]
        %v560 = vld [vmem:[%s447 + $0x28] sm:$0xff]
        %v561 = vld [vmem:[%s447 + $0x30] sm:$0xff]
        %v562 = vld [vmem:[%s447 + $0x38] sm:$0xff]
        %v563 = vld [vmem:[%s447 + $0x40] sm:$0xff]
        %v564 = vld [vmem:[%s447 + $0x48] sm:$0xff]
        %v565 = vld [vmem:[%s447 + $0x50] sm:$0xff]
        %v566 = vld [vmem:[%s447 + $0x58] sm:$0xff]
        %v567 = vld [vmem:[%s447 + $0x60] sm:$0xff]
        %v568 = vld [vmem:[%s447 + $0x68] sm:$0xff]
        %v569 = vld [vmem:[%s447 + $0x70] sm:$0xff]
        %v570 = vld [vmem:[%s447 + $0x78] sm:$0xff]
        %v571 = vld [vmem:[%s447 + $0x80] sm:$0xff]
        %v572 = vld [vmem:[%s447 + $0x88] sm:$0xff]
        %v573 = vld [vmem:[%s447 + $0x90] sm:$0xff]
        %v574 = vld [vmem:[%s447 + $0x98] sm:$0xff]
        %v575 = vld [vmem:[%s447 + $0xa0] sm:$0xff]
        %v576 = vld [vmem:[%s447 + $0xa8] sm:$0xff]
        %v577 = vld [vmem:[%s447 + $0xb0] sm:$0xff]
        %v578 = vld [vmem:[%s447 + $0xb8] sm:$0xff]
        %v579 = vld [vmem:[%s447 + $0xc0] sm:$0xff]
        %v580 = vld [vmem:[%s447 + $0xc8] sm:$0xff]
        %v581 = vld [vmem:[%s447 + $0xd0] sm:$0xff]
        %v582 = vld [vmem:[%s447 + $0xd8] sm:$0xff]
        %v583 = vld [vmem:[%s447 + $0xe0] sm:$0xff]
        %v584 = vld [vmem:[%s447 + $0xe8] sm:$0xff]
        %v585 = vld [vmem:[%s447 + $0xf0] sm:$0xff]
        %v586 = vld [vmem:[%s447 + $0xf8] sm:$0xff]
        %v587 = vld [vmem:[%s447 + $0x100] sm:$0xff]
        %v588 = vld [vmem:[%s447 + $0x108] sm:$0xff]
        %v589 = vld [vmem:[%s447 + $0x110] sm:$0xff]
        %v590 = vld [vmem:[%s447 + $0x118] sm:$0xff]
        %v591 = vld [vmem:[%s447 + $0x120] sm:$0xff]
        %v592 = vld [vmem:[%s447 + $0x128] sm:$0xff]
        %v593 = vld [vmem:[%s447 + $0x130] sm:$0xff]
        %v594 = vld [vmem:[%s447 + $0x138] sm:$0xff]
        %v595 = vld [vmem:[%s447 + $0x140] sm:$0xff]
        %v596 = vld [vmem:[%s447 + $0x148] sm:$0xff]
        %v597 = vld [vmem:[%s447 + $0x150] sm:$0xff]
        %v598 = vld [vmem:[%s447 + $0x158] sm:$0xff]
        %v599 = vld [vmem:[%s447 + $0x160] sm:$0xff]
        %v600 = vld [vmem:[%s447 + $0x168] sm:$0xff]
        %v601 = vld [vmem:[%s447 + $0x170] sm:$0xff]
        %v602 = vld [vmem:[%s447 + $0x178] sm:$0xff]
        %v603 = vld [vmem:[%s447 + $0x180] sm:$0xff]
        %v604 = vld [vmem:[%s447 + $0x188] sm:$0xff]
        %v605 = vld [vmem:[%s447 + $0x190] sm:$0xff]
        %v606 = vld [vmem:[%s447 + $0x198] sm:$0xff]
        %v607 = vld [vmem:[%s447 + $0x1a0] sm:$0xff]
        %v608 = vld [vmem:[%s447 + $0x1a8] sm:$0xff]
        %v609 = vld [vmem:[%s447 + $0x1b0] sm:$0xff]
        %v610 = vld [vmem:[%s447 + $0x1b8] sm:$0xff]
        %v611 = vld [vmem:[%s447 + $0x1c0] sm:$0xff]
        %v612 = vld [vmem:[%s447 + $0x1c8] sm:$0xff]
        %v613 = vld [vmem:[%s447 + $0x1d0] sm:$0xff]
        %v614 = vld [vmem:[%s447 + $0x1d8] sm:$0xff]
        %v615 = vld [vmem:[%s447 + $0x1e0] sm:$0xff]
        %v616 = vld [vmem:[%s447 + $0x1e8] sm:$0xff]
        %v617 = vld [vmem:[%s447 + $0x1f0] sm:$0xff]
        %v618 = vld [vmem:[%s447 + $0x1f8] sm:$0xff]
        %v619 = vld [vmem:[#allocation5] sm:$0x3]
        %v620 = vld [vmem:[#allocation7] sm:$0x3]
        %v621 = vadd.f32 %v555, %v556
        %622 = vadd.xlane.f32.xlu0 %v621
        %v623 = vpop.xlane.xlu0 %622
        %v624 = vadd.f32 %v557, %v558
        %625 = vadd.xlane.f32.xlu0 %v624
        %v626 = vpop.xlane.xlu0 %625
        %v627 = vadd.f32 %v559, %v560
        %628 = vadd.xlane.f32.xlu0 %v627
        %v629 = vpop.xlane.xlu0 %628
        %v630 = vadd.f32 %v561, %v562
        %631 = vadd.xlane.f32.xlu0 %v630
        %v632 = vpop.xlane.xlu0 %631
        %v633 = vadd.f32 %v563, %v564
        %634 = vadd.xlane.f32.xlu0 %v633
        %v635 = vpop.xlane.xlu0 %634
        %v636 = vadd.f32 %v565, %v566
        %637 = vadd.xlane.f32.xlu0 %v636
        %v638 = vpop.xlane.xlu0 %637
        %v639 = vadd.f32 %v567, %v568
        %640 = vadd.xlane.f32.xlu0 %v639
        %v641 = vpop.xlane.xlu0 %640
        %v642 = vadd.f32 %v569, %v570
        %643 = vadd.xlane.f32.xlu0 %v642
        %v644 = vpop.xlane.xlu0 %643
        %v645 = vadd.f32 %v571, %v572
        %646 = vadd.xlane.f32.xlu0 %v645
        %v647 = vpop.xlane.xlu0 %646
        %v648 = vadd.f32 %v573, %v574
        %649 = vadd.xlane.f32.xlu0 %v648
        %v650 = vpop.xlane.xlu0 %649
        %v651 = vadd.f32 %v575, %v576
        %652 = vadd.xlane.f32.xlu0 %v651
        %v653 = vpop.xlane.xlu0 %652
        %v654 = vadd.f32 %v577, %v578
        %655 = vadd.xlane.f32.xlu0 %v654
        %v656 = vpop.xlane.xlu0 %655
        %v657 = vadd.f32 %v579, %v580
        %658 = vadd.xlane.f32.xlu0 %v657
        %v659 = vpop.xlane.xlu0 %658
        %v660 = vadd.f32 %v581, %v582
        %661 = vadd.xlane.f32.xlu0 %v660
        %v662 = vpop.xlane.xlu0 %661
        %v663 = vadd.f32 %v583, %v584
        %664 = vadd.xlane.f32.xlu0 %v663
        %v665 = vpop.xlane.xlu0 %664
        %v666 = vadd.f32 %v585, %v586
        %667 = vadd.xlane.f32.xlu0 %v666
        %v668 = vpop.xlane.xlu0 %667
        %v669 = vadd.f32 %v587, %v588
        %670 = vadd.xlane.f32.xlu0 %v669
        %v671 = vpop.xlane.xlu0 %670
        %v672 = vadd.f32 %v589, %v590
        %673 = vadd.xlane.f32.xlu0 %v672
        %v674 = vpop.xlane.xlu0 %673
        %v675 = vadd.f32 %v591, %v592
        %676 = vadd.xlane.f32.xlu0 %v675
        %v677 = vpop.xlane.xlu0 %676
        %v678 = vadd.f32 %v593, %v594
        %679 = vadd.xlane.f32.xlu0 %v678
        %v680 = vpop.xlane.xlu0 %679
        %v681 = vadd.f32 %v595, %v596
        %682 = vadd.xlane.f32.xlu0 %v681
        %v683 = vpop.xlane.xlu0 %682
        %v684 = vadd.f32 %v597, %v598
        %685 = vadd.xlane.f32.xlu0 %v684
        %v686 = vpop.xlane.xlu0 %685
        %v687 = vadd.f32 %v599, %v600
        %688 = vadd.xlane.f32.xlu0 %v687
        %v689 = vpop.xlane.xlu0 %688
        %v690 = vadd.f32 %v601, %v602
        %691 = vadd.xlane.f32.xlu0 %v690
        %v692 = vpop.xlane.xlu0 %691
        %v693 = vadd.f32 %v603, %v604
        %694 = vadd.xlane.f32.xlu0 %v693
        %v695 = vpop.xlane.xlu0 %694
        %v696 = vadd.f32 %v605, %v606
        %697 = vadd.xlane.f32.xlu0 %v696
        %v698 = vpop.xlane.xlu0 %697
        %v699 = vadd.f32 %v607, %v608
        %700 = vadd.xlane.f32.xlu0 %v699
        %v701 = vpop.xlane.xlu0 %700
        %v702 = vadd.f32 %v609, %v610
        %703 = vadd.xlane.f32.xlu0 %v702
        %v704 = vpop.xlane.xlu0 %703
        %v705 = vadd.f32 %v611, %v612
        %706 = vadd.xlane.f32.xlu0 %v705
        %v707 = vpop.xlane.xlu0 %706
        %v708 = vadd.f32 %v613, %v614
        %709 = vadd.xlane.f32.xlu0 %v708
        %v710 = vpop.xlane.xlu0 %709
        %v711 = vadd.f32 %v615, %v616
        %712 = vadd.xlane.f32.xlu0 %v711
        %v713 = vpop.xlane.xlu0 %712
        %v714 = vadd.f32 %v617, %v618
        %715 = vadd.xlane.f32.xlu0 %v714
        %v716 = vpop.xlane.xlu0 %715
        %v717 = vrcp.pop 256.0
        %v718 = vmul.f32 %v623, %v717
        %v719 = vmul.f32 %v626, %v717
        %v720 = vmul.f32 %v629, %v717
        %v721 = vmul.f32 %v632, %v717
        %v722 = vmul.f32 %v635, %v717
        %v723 = vmul.f32 %v638, %v717
        %v724 = vmul.f32 %v641, %v717
        %v725 = vmul.f32 %v644, %v717
        %v726 = vmul.f32 %v647, %v717
        %v727 = vmul.f32 %v650, %v717
        %v728 = vmul.f32 %v653, %v717
        %v729 = vmul.f32 %v656, %v717
        %v730 = vmul.f32 %v659, %v717
        %v731 = vmul.f32 %v662, %v717
        %v732 = vmul.f32 %v665, %v717
        %v733 = vmul.f32 %v668, %v717
        %v734 = vmul.f32 %v671, %v717
        %v735 = vmul.f32 %v674, %v717
        %v736 = vmul.f32 %v677, %v717
        %v737 = vmul.f32 %v680, %v717
        %v738 = vmul.f32 %v683, %v717
        %v739 = vmul.f32 %v686, %v717
        %v740 = vmul.f32 %v689, %v717
        %v741 = vmul.f32 %v692, %v717
        %v742 = vmul.f32 %v695, %v717
        %v743 = vmul.f32 %v698, %v717
        %v744 = vmul.f32 %v701, %v717
        %v745 = vmul.f32 %v704, %v717
        %v746 = vmul.f32 %v707, %v717
        %v747 = vmul.f32 %v710, %v717
        %v748 = vmul.f32 %v713, %v717
        %v749 = vmul.f32 %v716, %v717
        %v750 = vsub.f32 %v555, %v718
        %v751 = vsub.f32 %v556, %v718
        %v752 = vsub.f32 %v557, %v719
        %v753 = vsub.f32 %v558, %v719
        %v754 = vsub.f32 %v559, %v720
        %v755 = vsub.f32 %v560, %v720
        %v756 = vsub.f32 %v561, %v721
        %v757 = vsub.f32 %v562, %v721
        %v758 = vsub.f32 %v563, %v722
        %v759 = vsub.f32 %v564, %v722
        %v760 = vsub.f32 %v565, %v723
        %v761 = vsub.f32 %v566, %v723
        %v762 = vsub.f32 %v567, %v724
        %v763 = vsub.f32 %v568, %v724
        %v764 = vsub.f32 %v569, %v725
        %v765 = vsub.f32 %v570, %v725
        %v766 = vsub.f32 %v571, %v726
        %v767 = vsub.f32 %v572, %v726
        %v768 = vsub.f32 %v573, %v727
        %v769 = vsub.f32 %v574, %v727
        %v770 = vsub.f32 %v575, %v728
        %v771 = vsub.f32 %v576, %v728
        %v772 = vsub.f32 %v577, %v729
        %v773 = vsub.f32 %v578, %v729
        %v774 = vsub.f32 %v579, %v730
        %v775 = vsub.f32 %v580, %v730
        %v776 = vsub.f32 %v581, %v731
        %v777 = vsub.f32 %v582, %v731
        %v778 = vsub.f32 %v583, %v732
        %v779 = vsub.f32 %v584, %v732
        %v780 = vsub.f32 %v585, %v733
        %v781 = vsub.f32 %v586, %v733
        %v782 = vsub.f32 %v587, %v734
        %v783 = vsub.f32 %v588, %v734
        %v784 = vsub.f32 %v589, %v735
        %v785 = vsub.f32 %v590, %v735
        %v786 = vsub.f32 %v591, %v736
        %v787 = vsub.f32 %v592, %v736
        %v788 = vsub.f32 %v593, %v737
        %v789 = vsub.f32 %v594, %v737
        %v790 = vsub.f32 %v595, %v738
        %v791 = vsub.f32 %v596, %v738
        %v792 = vsub.f32 %v597, %v739
        %v793 = vsub.f32 %v598, %v739
        %v794 = vsub.f32 %v599, %v740
        %v795 = vsub.f32 %v600, %v740
        %v796 = vsub.f32 %v601, %v741
        %v797 = vsub.f32 %v602, %v741
        %v798 = vsub.f32 %v603, %v742
        %v799 = vsub.f32 %v604, %v742
        %v800 = vsub.f32 %v605, %v743
        %v801 = vsub.f32 %v606, %v743
        %v802 = vsub.f32 %v607, %v744
        %v803 = vsub.f32 %v608, %v744
        %v804 = vsub.f32 %v609, %v745
        %v805 = vsub.f32 %v610, %v745
        %v806 = vsub.f32 %v611, %v746
        %v807 = vsub.f32 %v612, %v746
        %v808 = vsub.f32 %v613, %v747
        %v809 = vsub.f32 %v614, %v747
        %v810 = vsub.f32 %v615, %v748
        %v811 = vsub.f32 %v616, %v748
        %v812 = vsub.f32 %v617, %v749
        %v813 = vsub.f32 %v618, %v749
        %v814 = vmul.f32 %v750, %v750
        %v815 = vmul.f32 %v751, %v751
        %v816 = vmul.f32 %v752, %v752
        %v817 = vmul.f32 %v753, %v753
        %v818 = vmul.f32 %v754, %v754
        %v819 = vmul.f32 %v755, %v755
        %v820 = vmul.f32 %v756, %v756
        %v821 = vmul.f32 %v757, %v757
        %v822 = vmul.f32 %v758, %v758
        %v823 = vmul.f32 %v759, %v759
        %v824 = vmul.f32 %v760, %v760
        %v825 = vmul.f32 %v761, %v761
        %v826 = vmul.f32 %v762, %v762
        %v827 = vmul.f32 %v763, %v763
        %v828 = vmul.f32 %v764, %v764
        %v829 = vmul.f32 %v765, %v765
        %v830 = vmul.f32 %v766, %v766
        %v831 = vmul.f32 %v767, %v767
        %v832 = vmul.f32 %v768, %v768
        %v833 = vmul.f32 %v769, %v769
        %v834 = vmul.f32 %v770, %v770
        %v835 = vmul.f32 %v771, %v771
        %v836 = vmul.f32 %v772, %v772
        %v837 = vmul.f32 %v773, %v773
        %v838 = vmul.f32 %v774, %v774
        %v839 = vmul.f32 %v775, %v775
        %v840 = vmul.f32 %v776, %v776
        %v841 = vmul.f32 %v777, %v777
        %v842 = vmul.f32 %v778, %v778
        %v843 = vmul.f32 %v779, %v779
        %v844 = vmul.f32 %v780, %v780
        %v845 = vmul.f32 %v781, %v781
        %v846 = vmul.f32 %v782, %v782
        %v847 = vmul.f32 %v783, %v783
        %v848 = vmul.f32 %v784, %v784
        %v849 = vmul.f32 %v785, %v785
        %v850 = vmul.f32 %v786, %v786
        %v851 = vmul.f32 %v787, %v787
        %v852 = vmul.f32 %v788, %v788
        %v853 = vmul.f32 %v789, %v789
        %v854 = vmul.f32 %v790, %v790
        %v855 = vmul.f32 %v791, %v791
        %v856 = vmul.f32 %v792, %v792
        %v857 = vmul.f32 %v793, %v793
        %v858 = vmul.f32 %v794, %v794
        %v859 = vmul.f32 %v795, %v795
        %v860 = vmul.f32 %v796, %v796
        %v861 = vmul.f32 %v797, %v797
        %v862 = vmul.f32 %v798, %v798
        %v863 = vmul.f32 %v799, %v799
        %v864 = vmul.f32 %v800, %v800
        %v865 = vmul.f32 %v801, %v801
        %v866 = vmul.f32 %v802, %v802
        %v867 = vmul.f32 %v803, %v803
        %v868 = vmul.f32 %v804, %v804
        %v869 = vmul.f32 %v805, %v805
        %v870 = vmul.f32 %v806, %v806
        %v871 = vmul.f32 %v807, %v807
        %v872 = vmul.f32 %v808, %v808
        %v873 = vmul.f32 %v809, %v809
        %v874 = vmul.f32 %v810, %v810
        %v875 = vmul.f32 %v811, %v811
        %v876 = vmul.f32 %v812, %v812
        %v877 = vmul.f32 %v813, %v813
        %v878 = vadd.f32 %v814, %v815
        %879 = vadd.xlane.f32.xlu0 %v878
        %v880 = vpop.xlane.xlu0 %879
        %v881 = vadd.f32 %v816, %v817
        %882 = vadd.xlane.f32.xlu0 %v881
        %v883 = vpop.xlane.xlu0 %882
        %v884 = vadd.f32 %v818, %v819
        %885 = vadd.xlane.f32.xlu0 %v884
        %v886 = vpop.xlane.xlu0 %885
        %v887 = vadd.f32 %v820, %v821
        %888 = vadd.xlane.f32.xlu0 %v887
        %v889 = vpop.xlane.xlu0 %888
        %v890 = vadd.f32 %v822, %v823
        %891 = vadd.xlane.f32.xlu0 %v890
        %v892 = vpop.xlane.xlu0 %891
        %v893 = vadd.f32 %v824, %v825
        %894 = vadd.xlane.f32.xlu0 %v893
        %v895 = vpop.xlane.xlu0 %894
        %v896 = vadd.f32 %v826, %v827
        %897 = vadd.xlane.f32.xlu0 %v896
        %v898 = vpop.xlane.xlu0 %897
        %v899 = vadd.f32 %v828, %v829
        %900 = vadd.xlane.f32.xlu0 %v899
        %v901 = vpop.xlane.xlu0 %900
        %v902 = vadd.f32 %v830, %v831
        %903 = vadd.xlane.f32.xlu0 %v902
        %v904 = vpop.xlane.xlu0 %903
        %v905 = vadd.f32 %v832, %v833
        %906 = vadd.xlane.f32.xlu0 %v905
        %v907 = vpop.xlane.xlu0 %906
        %v908 = vadd.f32 %v834, %v835
        %909 = vadd.xlane.f32.xlu0 %v908
        %v910 = vpop.xlane.xlu0 %909
        %v911 = vadd.f32 %v836, %v837
        %912 = vadd.xlane.f32.xlu0 %v911
        %v913 = vpop.xlane.xlu0 %912
        %v914 = vadd.f32 %v838, %v839
        %915 = vadd.xlane.f32.xlu0 %v914
        %v916 = vpop.xlane.xlu0 %915
        %v917 = vadd.f32 %v840, %v841
        %918 = vadd.xlane.f32.xlu0 %v917
        %v919 = vpop.xlane.xlu0 %918
        %v920 = vadd.f32 %v842, %v843
        %921 = vadd.xlane.f32.xlu0 %v920
        %v922 = vpop.xlane.xlu0 %921
        %v923 = vadd.f32 %v844, %v845
        %924 = vadd.xlane.f32.xlu0 %v923
        %v925 = vpop.xlane.xlu0 %924
        %v926 = vadd.f32 %v846, %v847
        %927 = vadd.xlane.f32.xlu0 %v926
        %v928 = vpop.xlane.xlu0 %927
        %v929 = vadd.f32 %v848, %v849
        %930 = vadd.xlane.f32.xlu0 %v929
        %v931 = vpop.xlane.xlu0 %930
        %v932 = vadd.f32 %v850, %v851
        %933 = vadd.xlane.f32.xlu0 %v932
        %v934 = vpop.xlane.xlu0 %933
        %v935 = vadd.f32 %v852, %v853
        %936 = vadd.xlane.f32.xlu0 %v935
        %v937 = vpop.xlane.xlu0 %936
        %v938 = vadd.f32 %v854, %v855
        %939 = vadd.xlane.f32.xlu0 %v938
        %v940 = vpop.xlane.xlu0 %939
        %v941 = vadd.f32 %v856, %v857
        %942 = vadd.xlane.f32.xlu0 %v941
        %v943 = vpop.xlane.xlu0 %942
        %v944 = vadd.f32 %v858, %v859
        %945 = vadd.xlane.f32.xlu0 %v944
        %v946 = vpop.xlane.xlu0 %945
        %v947 = vadd.f32 %v860, %v861
        %948 = vadd.xlane.f32.xlu0 %v947
        %v949 = vpop.xlane.xlu0 %948
        %v950 = vadd.f32 %v862, %v863
        %951 = vadd.xlane.f32.xlu0 %v950
        %v952 = vpop.xlane.xlu0 %951
        %v953 = vadd.f32 %v864, %v865
        %954 = vadd.xlane.f32.xlu0 %v953
        %v955 = vpop.xlane.xlu0 %954
        %v956 = vadd.f32 %v866, %v867
        %957 = vadd.xlane.f32.xlu0 %v956
        %v958 = vpop.xlane.xlu0 %957
        %v959 = vadd.f32 %v868, %v869
        %960 = vadd.xlane.f32.xlu0 %v959
        %v961 = vpop.xlane.xlu0 %960
        %v962 = vadd.f32 %v870, %v871
        %963 = vadd.xlane.f32.xlu0 %v962
        %v964 = vpop.xlane.xlu0 %963
        %v965 = vadd.f32 %v872, %v873
        %966 = vadd.xlane.f32.xlu0 %v965
        %v967 = vpop.xlane.xlu0 %966
        %v968 = vadd.f32 %v874, %v875
        %969 = vadd.xlane.f32.xlu0 %v968
        %v970 = vpop.xlane.xlu0 %969
        %v971 = vadd.f32 %v876, %v877
        %972 = vadd.xlane.f32.xlu0 %v971
        %v973 = vpop.xlane.xlu0 %972
        %v974 = vmul.f32 %v880, %v717
        %v975 = vmul.f32 %v883, %v717
        %v976 = vmul.f32 %v886, %v717
        %v977 = vmul.f32 %v889, %v717
        %v978 = vmul.f32 %v892, %v717
        %v979 = vmul.f32 %v895, %v717
        %v980 = vmul.f32 %v898, %v717
        %v981 = vmul.f32 %v901, %v717
        %v982 = vmul.f32 %v904, %v717
        %v983 = vmul.f32 %v907, %v717
        %v984 = vmul.f32 %v910, %v717
        %v985 = vmul.f32 %v913, %v717
        %v986 = vmul.f32 %v916, %v717
        %v987 = vmul.f32 %v919, %v717
        %v988 = vmul.f32 %v922, %v717
        %v989 = vmul.f32 %v925, %v717
        %v990 = vmul.f32 %v928, %v717
        %v991 = vmul.f32 %v931, %v717
        %v992 = vmul.f32 %v934, %v717
        %v993 = vmul.f32 %v937, %v717
        %v994 = vmul.f32 %v940, %v717
        %v995 = vmul.f32 %v943, %v717
        %v996 = vmul.f32 %v946, %v717
        %v997 = vmul.f32 %v949, %v717
        %v998 = vmul.f32 %v952, %v717
        %v999 = vmul.f32 %v955, %v717
        %v1000 = vmul.f32 %v958, %v717
        %v1001 = vmul.f32 %v961, %v717
        %v1002 = vmul.f32 %v964, %v717
        %v1003 = vmul.f32 %v967, %v717
        %v1004 = vmul.f32 %v970, %v717
        %v1005 = vmul.f32 %v973, %v717
        %v1006 = vadd.f32 %v974, 1e-05
        %v1007 = vadd.f32 %v975, 1e-05
        %v1008 = vadd.f32 %v976, 1e-05
        %v1009 = vadd.f32 %v977, 1e-05
        %v1010 = vadd.f32 %v978, 1e-05
        %v1011 = vadd.f32 %v979, 1e-05
        %v1012 = vadd.f32 %v980, 1e-05
        %v1013 = vadd.f32 %v981, 1e-05
        %v1014 = vadd.f32 %v982, 1e-05
        %v1015 = vadd.f32 %v983, 1e-05
        %v1016 = vadd.f32 %v984, 1e-05
        %v1017 = vadd.f32 %v985, 1e-05
        %v1018 = vadd.f32 %v986, 1e-05
        %v1019 = vadd.f32 %v987, 1e-05
        %v1020 = vadd.f32 %v988, 1e-05
        %v1021 = vadd.f32 %v989, 1e-05
        %v1022 = vadd.f32 %v990, 1e-05
        %v1023 = vadd.f32 %v991, 1e-05
        %v1024 = vadd.f32 %v992, 1e-05
        %v1025 = vadd.f32 %v993, 1e-05
        %v1026 = vadd.f32 %v994, 1e-05
        %v1027 = vadd.f32 %v995, 1e-05
        %v1028 = vadd.f32 %v996, 1e-05
        %v1029 = vadd.f32 %v997, 1e-05
        %v1030 = vadd.f32 %v998, 1e-05
        %v1031 = vadd.f32 %v999, 1e-05
        %v1032 = vadd.f32 %v1000, 1e-05
        %v1033 = vadd.f32 %v1001, 1e-05
        %v1034 = vadd.f32 %v1002, 1e-05
        %v1035 = vadd.f32 %v1003, 1e-05
        %v1036 = vadd.f32 %v1004, 1e-05
        %v1037 = vadd.f32 %v1005, 1e-05
        %v1038 = vrsqrt.pop %v1006
        %v1039 = vrsqrt.pop %v1007
        %v1040 = vrsqrt.pop %v1008
        %v1041 = vrsqrt.pop %v1009
        %v1042 = vrsqrt.pop %v1010
        %v1043 = vrsqrt.pop %v1011
        %v1044 = vrsqrt.pop %v1012
        %v1045 = vrsqrt.pop %v1013
        %v1046 = vrsqrt.pop %v1014
        %v1047 = vrsqrt.pop %v1015
        %v1048 = vrsqrt.pop %v1016
        %v1049 = vrsqrt.pop %v1017
        %v1050 = vrsqrt.pop %v1018
        %v1051 = vrsqrt.pop %v1019
        %v1052 = vrsqrt.pop %v1020
        %v1053 = vrsqrt.pop %v1021
        %v1054 = vrsqrt.pop %v1022
        %v1055 = vrsqrt.pop %v1023
        %v1056 = vrsqrt.pop %v1024
        %v1057 = vrsqrt.pop %v1025
        %v1058 = vrsqrt.pop %v1026
        %v1059 = vrsqrt.pop %v1027
        %v1060 = vrsqrt.pop %v1028
        %v1061 = vrsqrt.pop %v1029
        %v1062 = vrsqrt.pop %v1030
        %v1063 = vrsqrt.pop %v1031
        %v1064 = vrsqrt.pop %v1032
        %v1065 = vrsqrt.pop %v1033
        %v1066 = vrsqrt.pop %v1034
        %v1067 = vrsqrt.pop %v1035
        %v1068 = vrsqrt.pop %v1036
        %v1069 = vrsqrt.pop %v1037
        %v1070 = vmul.f32 %v750, %v1038
        %v1071 = vmul.f32 %v751, %v1038
        %v1072 = vmul.f32 %v752, %v1039
        %v1073 = vmul.f32 %v753, %v1039
        %v1074 = vmul.f32 %v754, %v1040
        %v1075 = vmul.f32 %v755, %v1040
        %v1076 = vmul.f32 %v756, %v1041
        %v1077 = vmul.f32 %v757, %v1041
        %v1078 = vmul.f32 %v758, %v1042
        %v1079 = vmul.f32 %v759, %v1042
        %v1080 = vmul.f32 %v760, %v1043
        %v1081 = vmul.f32 %v761, %v1043
        %v1082 = vmul.f32 %v762, %v1044
        %v1083 = vmul.f32 %v763, %v1044
        %v1084 = vmul.f32 %v764, %v1045
        %v1085 = vmul.f32 %v765, %v1045
        %v1086 = vmul.f32 %v766, %v1046
        %v1087 = vmul.f32 %v767, %v1046
        %v1088 = vmul.f32 %v768, %v1047
        %v1089 = vmul.f32 %v769, %v1047
        %v1090 = vmul.f32 %v770, %v1048
        %v1091 = vmul.f32 %v771, %v1048
        %v1092 = vmul.f32 %v772, %v1049
        %v1093 = vmul.f32 %v773, %v1049
        %v1094 = vmul.f32 %v774, %v1050
        %v1095 = vmul.f32 %v775, %v1050
        %v1096 = vmul.f32 %v776, %v1051
        %v1097 = vmul.f32 %v777, %v1051
        %v1098 = vmul.f32 %v778, %v1052
        %v1099 = vmul.f32 %v779, %v1052
        %v1100 = vmul.f32 %v780, %v1053
        %v1101 = vmul.f32 %v781, %v1053
        %v1102 = vmul.f32 %v782, %v1054
        %v1103 = vmul.f32 %v783, %v1054
        %v1104 = vmul.f32 %v784, %v1055
        %v1105 = vmul.f32 %v785, %v1055
        %v1106 = vmul.f32 %v786, %v1056
        %v1107 = vmul.f32 %v787, %v1056
        %v1108 = vmul.f32 %v788, %v1057
        %v1109 = vmul.f32 %v789, %v1057
        %v1110 = vmul.f32 %v790, %v1058
        %v1111 = vmul.f32 %v791, %v1058
        %v1112 = vmul.f32 %v792, %v1059
        %v1113 = vmul.f32 %v793, %v1059
        %v1114 = vmul.f32 %v794, %v1060
        %v1115 = vmul.f32 %v795, %v1060
        %v1116 = vmul.f32 %v796, %v1061
        %v1117 = vmul.f32 %v797, %v1061
        %v1118 = vmul.f32 %v798, %v1062
        %v1119 = vmul.f32 %v799, %v1062
        %v1120 = vmul.f32 %v800, %v1063
        %v1121 = vmul.f32 %v801, %v1063
        %v1122 = vmul.f32 %v802, %v1064
        %v1123 = vmul.f32 %v803, %v1064
        %v1124 = vmul.f32 %v804, %v1065
        %v1125 = vmul.f32 %v805, %v1065
        %v1126 = vmul.f32 %v806, %v1066
        %v1127 = vmul.f32 %v807, %v1066
        %v1128 = vmul.f32 %v808, %v1067
        %v1129 = vmul.f32 %v809, %v1067
        %v1130 = vmul.f32 %v810, %v1068
        %v1131 = vmul.f32 %v811, %v1068
        %v1132 = vmul.f32 %v812, %v1069
        %v1133 = vmul.f32 %v813, %v1069
        %v1135 = vlaneseq
        %v1136 = vshrl.u32 %v1135, 7
        %v1137 = vsub.s32 0, %v1136
        %v1138 = vrot.slane %v619, %v1137
        %v1139 = vlaneseq
        %v1140 = vshrl.u32 %v1139, 7
        %v1141 = vsub.s32 1, %v1140
        %v1142 = vrot.slane %v619, %v1141
        %v1145 = vmul.f32 %v1070, %v1138
        %v1146 = vmul.f32 %v1071, %v1142
        %v1147 = vmul.f32 %v1072, %v1138
        %v1148 = vmul.f32 %v1073, %v1142
        %v1149 = vmul.f32 %v1074, %v1138
        %v1150 = vmul.f32 %v1075, %v1142
        %v1151 = vmul.f32 %v1076, %v1138
        %v1152 = vmul.f32 %v1077, %v1142
        %v1153 = vmul.f32 %v1078, %v1138
        %v1154 = vmul.f32 %v1079, %v1142
        %v1155 = vmul.f32 %v1080, %v1138
        %v1156 = vmul.f32 %v1081, %v1142
        %v1157 = vmul.f32 %v1082, %v1138
        %v1158 = vmul.f32 %v1083, %v1142
        %v1159 = vmul.f32 %v1084, %v1138
        %v1160 = vmul.f32 %v1085, %v1142
        %v1161 = vmul.f32 %v1086, %v1138
        %v1162 = vmul.f32 %v1087, %v1142
        %v1163 = vmul.f32 %v1088, %v1138
        %v1164 = vmul.f32 %v1089, %v1142
        %v1165 = vmul.f32 %v1090, %v1138
        %v1166 = vmul.f32 %v1091, %v1142
        %v1167 = vmul.f32 %v1092, %v1138
        %v1168 = vmul.f32 %v1093, %v1142
        %v1169 = vmul.f32 %v1094, %v1138
        %v1170 = vmul.f32 %v1095, %v1142
        %v1171 = vmul.f32 %v1096, %v1138
        %v1172 = vmul.f32 %v1097, %v1142
        %v1173 = vmul.f32 %v1098, %v1138
        %v1174 = vmul.f32 %v1099, %v1142
        %v1175 = vmul.f32 %v1100, %v1138
        %v1176 = vmul.f32 %v1101, %v1142
        %v1177 = vmul.f32 %v1102, %v1138
        %v1178 = vmul.f32 %v1103, %v1142
        %v1179 = vmul.f32 %v1104, %v1138
        %v1180 = vmul.f32 %v1105, %v1142
        %v1181 = vmul.f32 %v1106, %v1138
        %v1182 = vmul.f32 %v1107, %v1142
        %v1183 = vmul.f32 %v1108, %v1138
        %v1184 = vmul.f32 %v1109, %v1142
        %v1185 = vmul.f32 %v1110, %v1138
        %v1186 = vmul.f32 %v1111, %v1142
        %v1187 = vmul.f32 %v1112, %v1138
        %v1188 = vmul.f32 %v1113, %v1142
        %v1189 = vmul.f32 %v1114, %v1138
        %v1190 = vmul.f32 %v1115, %v1142
        %v1191 = vmul.f32 %v1116, %v1138
        %v1192 = vmul.f32 %v1117, %v1142
        %v1193 = vmul.f32 %v1118, %v1138
        %v1194 = vmul.f32 %v1119, %v1142
        %v1195 = vmul.f32 %v1120, %v1138
        %v1196 = vmul.f32 %v1121, %v1142
        %v1197 = vmul.f32 %v1122, %v1138
        %v1198 = vmul.f32 %v1123, %v1142
        %v1199 = vmul.f32 %v1124, %v1138
        %v1200 = vmul.f32 %v1125, %v1142
        %v1201 = vmul.f32 %v1126, %v1138
        %v1202 = vmul.f32 %v1127, %v1142
        %v1203 = vmul.f32 %v1128, %v1138
        %v1204 = vmul.f32 %v1129, %v1142
        %v1205 = vmul.f32 %v1130, %v1138
        %v1206 = vmul.f32 %v1131, %v1142
        %v1207 = vmul.f32 %v1132, %v1138
        %v1208 = vmul.f32 %v1133, %v1142
        %v1210 = vlaneseq
        %v1211 = vshrl.u32 %v1210, 7
        %v1212 = vsub.s32 0, %v1211
        %v1213 = vrot.slane %v620, %v1212
        %v1214 = vlaneseq
        %v1215 = vshrl.u32 %v1214, 7
        %v1216 = vsub.s32 1, %v1215
        %v1217 = vrot.slane %v620, %v1216
        %v1220 = vadd.f32 %v1145, %v1213
        %v1221 = vadd.f32 %v1146, %v1217
        %v1222 = vadd.f32 %v1147, %v1213
        %v1223 = vadd.f32 %v1148, %v1217
        %v1224 = vadd.f32 %v1149, %v1213
        %v1225 = vadd.f32 %v1150, %v1217
        %v1226 = vadd.f32 %v1151, %v1213
        %v1227 = vadd.f32 %v1152, %v1217
        %v1228 = vadd.f32 %v1153, %v1213
        %v1229 = vadd.f32 %v1154, %v1217
        %v1230 = vadd.f32 %v1155, %v1213
        %v1231 = vadd.f32 %v1156, %v1217
        %v1232 = vadd.f32 %v1157, %v1213
        %v1233 = vadd.f32 %v1158, %v1217
        %v1234 = vadd.f32 %v1159, %v1213
        %v1235 = vadd.f32 %v1160, %v1217
        %v1236 = vadd.f32 %v1161, %v1213
        %v1237 = vadd.f32 %v1162, %v1217
        %v1238 = vadd.f32 %v1163, %v1213
        %v1239 = vadd.f32 %v1164, %v1217
        %v1240 = vadd.f32 %v1165, %v1213
        %v1241 = vadd.f32 %v1166, %v1217
        %v1242 = vadd.f32 %v1167, %v1213
        %v1243 = vadd.f32 %v1168, %v1217
        %v1244 = vadd.f32 %v1169, %v1213
        %v1245 = vadd.f32 %v1170, %v1217
        %v1246 = vadd.f32 %v1171, %v1213
        %v1247 = vadd.f32 %v1172, %v1217
        %v1248 = vadd.f32 %v1173, %v1213
        %v1249 = vadd.f32 %v1174, %v1217
        %v1250 = vadd.f32 %v1175, %v1213
        %v1251 = vadd.f32 %v1176, %v1217
        %v1252 = vadd.f32 %v1177, %v1213
        %v1253 = vadd.f32 %v1178, %v1217
        %v1254 = vadd.f32 %v1179, %v1213
        %v1255 = vadd.f32 %v1180, %v1217
        %v1256 = vadd.f32 %v1181, %v1213
        %v1257 = vadd.f32 %v1182, %v1217
        %v1258 = vadd.f32 %v1183, %v1213
        %v1259 = vadd.f32 %v1184, %v1217
        %v1260 = vadd.f32 %v1185, %v1213
        %v1261 = vadd.f32 %v1186, %v1217
        %v1262 = vadd.f32 %v1187, %v1213
        %v1263 = vadd.f32 %v1188, %v1217
        %v1264 = vadd.f32 %v1189, %v1213
        %v1265 = vadd.f32 %v1190, %v1217
        %v1266 = vadd.f32 %v1191, %v1213
        %v1267 = vadd.f32 %v1192, %v1217
        %v1268 = vadd.f32 %v1193, %v1213
        %v1269 = vadd.f32 %v1194, %v1217
        %v1270 = vadd.f32 %v1195, %v1213
        %v1271 = vadd.f32 %v1196, %v1217
        %v1272 = vadd.f32 %v1197, %v1213
        %v1273 = vadd.f32 %v1198, %v1217
        %v1274 = vadd.f32 %v1199, %v1213
        %v1275 = vadd.f32 %v1200, %v1217
        %v1276 = vadd.f32 %v1201, %v1213
        %v1277 = vadd.f32 %v1202, %v1217
        %v1278 = vadd.f32 %v1203, %v1213
        %v1279 = vadd.f32 %v1204, %v1217
        %v1280 = vadd.f32 %v1205, %v1213
        %v1281 = vadd.f32 %v1206, %v1217
        %v1282 = vadd.f32 %v1207, %v1213
        %v1283 = vadd.f32 %v1208, %v1217
        %v1284 = vpack.c.bf16 %v1222, %v1220
        %v1285 = vpack.c.bf16 %v1223, %v1221
        %v1286 = vpack.c.bf16 %v1226, %v1224
        %v1287 = vpack.c.bf16 %v1227, %v1225
        %v1288 = vpack.c.bf16 %v1230, %v1228
        %v1289 = vpack.c.bf16 %v1231, %v1229
        %v1290 = vpack.c.bf16 %v1234, %v1232
        %v1291 = vpack.c.bf16 %v1235, %v1233
        %v1292 = vpack.c.bf16 %v1238, %v1236
        %v1293 = vpack.c.bf16 %v1239, %v1237
        %v1294 = vpack.c.bf16 %v1242, %v1240
        %v1295 = vpack.c.bf16 %v1243, %v1241
        %v1296 = vpack.c.bf16 %v1246, %v1244
        %v1297 = vpack.c.bf16 %v1247, %v1245
        %v1298 = vpack.c.bf16 %v1250, %v1248
        %v1299 = vpack.c.bf16 %v1251, %v1249
        %v1300 = vpack.c.bf16 %v1254, %v1252
        %v1301 = vpack.c.bf16 %v1255, %v1253
        %v1302 = vpack.c.bf16 %v1258, %v1256
        %v1303 = vpack.c.bf16 %v1259, %v1257
        %v1304 = vpack.c.bf16 %v1262, %v1260
        %v1305 = vpack.c.bf16 %v1263, %v1261
        %v1306 = vpack.c.bf16 %v1266, %v1264
        %v1307 = vpack.c.bf16 %v1267, %v1265
        %v1308 = vpack.c.bf16 %v1270, %v1268
        %v1309 = vpack.c.bf16 %v1271, %v1269
        %v1310 = vpack.c.bf16 %v1274, %v1272
        %v1311 = vpack.c.bf16 %v1275, %v1273
        %v1312 = vpack.c.bf16 %v1278, %v1276
        %v1313 = vpack.c.bf16 %v1279, %v1277
        %v1314 = vpack.c.bf16 %v1282, %v1280
        %v1315 = vpack.c.bf16 %v1283, %v1281
        %v1316 = vld [vmem:[#allocation8] sm:$0xff]
        %v1317 = vld [vmem:[#allocation8 + $0x8] sm:$0xff]
        %v1318 = vld [vmem:[#allocation8 + $0x10] sm:$0xff]
        %v1319 = vld [vmem:[#allocation8 + $0x18] sm:$0xff]
        %v1320 = vld [vmem:[#allocation8 + $0x20] sm:$0xff]
        %v1321 = vld [vmem:[#allocation8 + $0x28] sm:$0xff]
        %v1322 = vld [vmem:[#allocation8 + $0x30] sm:$0xff]
        %v1323 = vld [vmem:[#allocation8 + $0x38] sm:$0xff]
        %v1324 = vld [vmem:[#allocation8 + $0x40] sm:$0xff]
        %v1325 = vld [vmem:[#allocation8 + $0x48] sm:$0xff]
        %v1326 = vld [vmem:[#allocation8 + $0x50] sm:$0xff]
        %v1327 = vld [vmem:[#allocation8 + $0x58] sm:$0xff]
        %v1328 = vld [vmem:[#allocation8 + $0x60] sm:$0xff]
        %v1329 = vld [vmem:[#allocation8 + $0x68] sm:$0xff]
        %v1330 = vld [vmem:[#allocation8 + $0x70] sm:$0xff]
        %v1331 = vld [vmem:[#allocation8 + $0x78] sm:$0xff]
        %v1332 = vld [vmem:[#allocation8 + $0x80] sm:$0xff]
        %v1333 = vld [vmem:[#allocation8 + $0x88] sm:$0xff]
        %v1334 = vld [vmem:[#allocation8 + $0x90] sm:$0xff]
        %v1335 = vld [vmem:[#allocation8 + $0x98] sm:$0xff]
        %v1336 = vld [vmem:[#allocation8 + $0xa0] sm:$0xff]
        %v1337 = vld [vmem:[#allocation8 + $0xa8] sm:$0xff]
        %v1338 = vld [vmem:[#allocation8 + $0xb0] sm:$0xff]
        %v1339 = vld [vmem:[#allocation8 + $0xb8] sm:$0xff]
        %v1340 = vld [vmem:[#allocation8 + $0xc0] sm:$0xff]
        %v1341 = vld [vmem:[#allocation8 + $0xc8] sm:$0xff]
        %v1342 = vld [vmem:[#allocation8 + $0xd0] sm:$0xff]
        %v1343 = vld [vmem:[#allocation8 + $0xd8] sm:$0xff]
        %v1344 = vld [vmem:[#allocation8 + $0xe0] sm:$0xff]
        %v1345 = vld [vmem:[#allocation8 + $0xe8] sm:$0xff]
        %v1346 = vld [vmem:[#allocation8 + $0xf0] sm:$0xff]
        %v1347 = vld [vmem:[#allocation8 + $0xf8] sm:$0xff]
        %v1348 = vld [vmem:[#allocation8 + $0x100] sm:$0xff]
        %v1349 = vld [vmem:[#allocation8 + $0x108] sm:$0xff]
        %v1350 = vld [vmem:[#allocation8 + $0x110] sm:$0xff]
        %v1351 = vld [vmem:[#allocation8 + $0x118] sm:$0xff]
        %v1352 = vld [vmem:[#allocation8 + $0x120] sm:$0xff]
        %v1353 = vld [vmem:[#allocation8 + $0x128] sm:$0xff]
        %v1354 = vld [vmem:[#allocation8 + $0x130] sm:$0xff]
        %v1355 = vld [vmem:[#allocation8 + $0x138] sm:$0xff]
        %v1356 = vld [vmem:[#allocation8 + $0x140] sm:$0xff]
        %v1357 = vld [vmem:[#allocation8 + $0x148] sm:$0xff]
        %v1358 = vld [vmem:[#allocation8 + $0x150] sm:$0xff]
        %v1359 = vld [vmem:[#allocation8 + $0x158] sm:$0xff]
        %v1360 = vld [vmem:[#allocation8 + $0x160] sm:$0xff]
        %v1361 = vld [vmem:[#allocation8 + $0x168] sm:$0xff]
        %v1362 = vld [vmem:[#allocation8 + $0x170] sm:$0xff]
        %v1363 = vld [vmem:[#allocation8 + $0x178] sm:$0xff]
        %v1364 = vld [vmem:[#allocation8 + $0x180] sm:$0xff]
        %v1365 = vld [vmem:[#allocation8 + $0x188] sm:$0xff]
        %v1366 = vld [vmem:[#allocation8 + $0x190] sm:$0xff]
        %v1367 = vld [vmem:[#allocation8 + $0x198] sm:$0xff]
        %v1368 = vld [vmem:[#allocation8 + $0x1a0] sm:$0xff]
        %v1369 = vld [vmem:[#allocation8 + $0x1a8] sm:$0xff]
        %v1370 = vld [vmem:[#allocation8 + $0x1b0] sm:$0xff]
        %v1371 = vld [vmem:[#allocation8 + $0x1b8] sm:$0xff]
        %v1372 = vld [vmem:[#allocation8 + $0x1c0] sm:$0xff]
        %v1373 = vld [vmem:[#allocation8 + $0x1c8] sm:$0xff]
        %v1374 = vld [vmem:[#allocation8 + $0x1d0] sm:$0xff]
        %v1375 = vld [vmem:[#allocation8 + $0x1d8] sm:$0xff]
        %v1376 = vld [vmem:[#allocation8 + $0x1e0] sm:$0xff]
        %v1377 = vld [vmem:[#allocation8 + $0x1e8] sm:$0xff]
        %v1378 = vld [vmem:[#allocation8 + $0x1f0] sm:$0xff]
        %v1379 = vld [vmem:[#allocation8 + $0x1f8] sm:$0xff]
        %v1380 = vld [vmem:[#allocation8 + $0x200] sm:$0xff]
        %v1381 = vld [vmem:[#allocation8 + $0x208] sm:$0xff]
        %v1382 = vld [vmem:[#allocation8 + $0x210] sm:$0xff]
        %v1383 = vld [vmem:[#allocation8 + $0x218] sm:$0xff]
        %v1384 = vld [vmem:[#allocation8 + $0x220] sm:$0xff]
        %v1385 = vld [vmem:[#allocation8 + $0x228] sm:$0xff]
        %v1386 = vld [vmem:[#allocation8 + $0x230] sm:$0xff]
        %v1387 = vld [vmem:[#allocation8 + $0x238] sm:$0xff]
        %v1388 = vld [vmem:[#allocation8 + $0x240] sm:$0xff]
        %v1389 = vld [vmem:[#allocation8 + $0x248] sm:$0xff]
        %v1390 = vld [vmem:[#allocation8 + $0x250] sm:$0xff]
        %v1391 = vld [vmem:[#allocation8 + $0x258] sm:$0xff]
        %v1392 = vld [vmem:[#allocation8 + $0x260] sm:$0xff]
        %v1393 = vld [vmem:[#allocation8 + $0x268] sm:$0xff]
        %v1394 = vld [vmem:[#allocation8 + $0x270] sm:$0xff]
        %v1395 = vld [vmem:[#allocation8 + $0x278] sm:$0xff]
        %v1396 = vld [vmem:[#allocation8 + $0x280] sm:$0xff]
        %v1397 = vld [vmem:[#allocation8 + $0x288] sm:$0xff]
        %v1398 = vld [vmem:[#allocation8 + $0x290] sm:$0xff]
        %v1399 = vld [vmem:[#allocation8 + $0x298] sm:$0xff]
        %v1400 = vld [vmem:[#allocation8 + $0x2a0] sm:$0xff]
        %v1401 = vld [vmem:[#allocation8 + $0x2a8] sm:$0xff]
        %v1402 = vld [vmem:[#allocation8 + $0x2b0] sm:$0xff]
        %v1403 = vld [vmem:[#allocation8 + $0x2b8] sm:$0xff]
        %v1404 = vld [vmem:[#allocation8 + $0x2c0] sm:$0xff]
        %v1405 = vld [vmem:[#allocation8 + $0x2c8] sm:$0xff]
        %v1406 = vld [vmem:[#allocation8 + $0x2d0] sm:$0xff]
        %v1407 = vld [vmem:[#allocation8 + $0x2d8] sm:$0xff]
        %v1408 = vld [vmem:[#allocation8 + $0x2e0] sm:$0xff]
        %v1409 = vld [vmem:[#allocation8 + $0x2e8] sm:$0xff]
        %v1410 = vld [vmem:[#allocation8 + $0x2f0] sm:$0xff]
        %v1411 = vld [vmem:[#allocation8 + $0x2f8] sm:$0xff]
        %v1412 = vld [vmem:[%s4] sm:$0x3f]
        %v1414 = vlaneseq
        %v1415 = vshrl.u32 %v1414, 7
        %v1416 = vsub.s32 0, %v1415
        %v1417 = vrot.slane %v1412, %v1416
        %v1418 = vlaneseq
        %v1419 = vshrl.u32 %v1418, 7
        %v1420 = vsub.s32 1, %v1419
        %v1421 = vrot.slane %v1412, %v1420
        %v1422 = vlaneseq
        %v1423 = vshrl.u32 %v1422, 7
        %v1424 = vsub.s32 2, %v1423
        %v1425 = vrot.slane %v1412, %v1424
        %v1426 = vlaneseq
        %v1427 = vshrl.u32 %v1426, 7
        %v1428 = vsub.s32 3, %v1427
        %v1429 = vrot.slane %v1412, %v1428
        %v1430 = vlaneseq
        %v1431 = vshrl.u32 %v1430, 7
        %v1432 = vsub.s32 4, %v1431
        %v1433 = vrot.slane %v1412, %v1432
        %v1434 = vlaneseq
        %v1435 = vshrl.u32 %v1434, 7
        %v1436 = vsub.s32 5, %v1435
        %v1437 = vrot.slane %v1412, %v1436
        %v1540 = vunpack.c.l.b16 %v1316
        %v1541 = vunpack.c.h.b16 %v1316
        %v1542 = vunpack.c.l.b16 %v1317
        %v1543 = vunpack.c.h.b16 %v1317
        %v1544 = vunpack.c.l.b16 %v1318
        %v1545 = vunpack.c.h.b16 %v1318
        %v1546 = vunpack.c.l.b16 %v1319
        %v1547 = vunpack.c.h.b16 %v1319
        %v1548 = vunpack.c.l.b16 %v1320
        %v1549 = vunpack.c.h.b16 %v1320
        %v1550 = vunpack.c.l.b16 %v1321
        %v1551 = vunpack.c.h.b16 %v1321
        %v1552 = vunpack.c.l.b16 %v1322
        %v1553 = vunpack.c.h.b16 %v1322
        %v1554 = vunpack.c.l.b16 %v1323
        %v1555 = vunpack.c.h.b16 %v1323
        %v1556 = vunpack.c.l.b16 %v1324
        %v1557 = vunpack.c.h.b16 %v1324
        %v1558 = vunpack.c.l.b16 %v1325
        %v1559 = vunpack.c.h.b16 %v1325
        %v1560 = vunpack.c.l.b16 %v1326
        %v1561 = vunpack.c.h.b16 %v1326
        %v1562 = vunpack.c.l.b16 %v1327
        %v1563 = vunpack.c.h.b16 %v1327
        %v1564 = vunpack.c.l.b16 %v1328
        %v1565 = vunpack.c.h.b16 %v1328
        %v1566 = vunpack.c.l.b16 %v1329
        %v1567 = vunpack.c.h.b16 %v1329
        %v1568 = vunpack.c.l.b16 %v1330
        %v1569 = vunpack.c.h.b16 %v1330
        %v1570 = vunpack.c.l.b16 %v1331
        %v1571 = vunpack.c.h.b16 %v1331
        %v1572 = vunpack.c.l.b16 %v1332
        %v1573 = vunpack.c.h.b16 %v1332
        %v1574 = vunpack.c.l.b16 %v1333
        %v1575 = vunpack.c.h.b16 %v1333
        %v1576 = vunpack.c.l.b16 %v1334
        %v1577 = vunpack.c.h.b16 %v1334
        %v1578 = vunpack.c.l.b16 %v1335
        %v1579 = vunpack.c.h.b16 %v1335
        %v1580 = vunpack.c.l.b16 %v1336
        %v1581 = vunpack.c.h.b16 %v1336
        %v1582 = vunpack.c.l.b16 %v1337
        %v1583 = vunpack.c.h.b16 %v1337
        %v1584 = vunpack.c.l.b16 %v1338
        %v1585 = vunpack.c.h.b16 %v1338
        %v1586 = vunpack.c.l.b16 %v1339
        %v1587 = vunpack.c.h.b16 %v1339
        %v1588 = vunpack.c.l.b16 %v1340
        %v1589 = vunpack.c.h.b16 %v1340
        %v1590 = vunpack.c.l.b16 %v1341
        %v1591 = vunpack.c.h.b16 %v1341
        %v1592 = vunpack.c.l.b16 %v1342
        %v1593 = vunpack.c.h.b16 %v1342
        %v1594 = vunpack.c.l.b16 %v1343
        %v1595 = vunpack.c.h.b16 %v1343
        %v1596 = vunpack.c.l.b16 %v1344
        %v1597 = vunpack.c.h.b16 %v1344
        %v1598 = vunpack.c.l.b16 %v1345
        %v1599 = vunpack.c.h.b16 %v1345
        %v1600 = vunpack.c.l.b16 %v1346
        %v1601 = vunpack.c.h.b16 %v1346
        %v1602 = vunpack.c.l.b16 %v1347
        %v1603 = vunpack.c.h.b16 %v1347
        %v1604 = vunpack.c.l.b16 %v1348
        %v1605 = vunpack.c.h.b16 %v1348
        %v1606 = vunpack.c.l.b16 %v1349
        %v1607 = vunpack.c.h.b16 %v1349
        %v1608 = vunpack.c.l.b16 %v1350
        %v1609 = vunpack.c.h.b16 %v1350
        %v1610 = vunpack.c.l.b16 %v1351
        %v1611 = vunpack.c.h.b16 %v1351
        %v1612 = vunpack.c.l.b16 %v1352
        %v1613 = vunpack.c.h.b16 %v1352
        %v1614 = vunpack.c.l.b16 %v1353
        %v1615 = vunpack.c.h.b16 %v1353
        %v1616 = vunpack.c.l.b16 %v1354
        %v1617 = vunpack.c.h.b16 %v1354
        %v1618 = vunpack.c.l.b16 %v1355
        %v1619 = vunpack.c.h.b16 %v1355
        %v1620 = vunpack.c.l.b16 %v1356
        %v1621 = vunpack.c.h.b16 %v1356
        %v1622 = vunpack.c.l.b16 %v1357
        %v1623 = vunpack.c.h.b16 %v1357
        %v1624 = vunpack.c.l.b16 %v1358
        %v1625 = vunpack.c.h.b16 %v1358
        %v1626 = vunpack.c.l.b16 %v1359
        %v1627 = vunpack.c.h.b16 %v1359
        %v1628 = vunpack.c.l.b16 %v1360
        %v1629 = vunpack.c.h.b16 %v1360
        %v1630 = vunpack.c.l.b16 %v1361
        %v1631 = vunpack.c.h.b16 %v1361
        %v1632 = vunpack.c.l.b16 %v1362
        %v1633 = vunpack.c.h.b16 %v1362
        %v1634 = vunpack.c.l.b16 %v1363
        %v1635 = vunpack.c.h.b16 %v1363
        %v1636 = vunpack.c.l.b16 %v1364
        %v1637 = vunpack.c.h.b16 %v1364
        %v1638 = vunpack.c.l.b16 %v1365
        %v1639 = vunpack.c.h.b16 %v1365
        %v1640 = vunpack.c.l.b16 %v1366
        %v1641 = vunpack.c.h.b16 %v1366
        %v1642 = vunpack.c.l.b16 %v1367
        %v1643 = vunpack.c.h.b16 %v1367
        %v1644 = vunpack.c.l.b16 %v1368
        %v1645 = vunpack.c.h.b16 %v1368
        %v1646 = vunpack.c.l.b16 %v1369
        %v1647 = vunpack.c.h.b16 %v1369
        %v1648 = vunpack.c.l.b16 %v1370
        %v1649 = vunpack.c.h.b16 %v1370
        %v1650 = vunpack.c.l.b16 %v1371
        %v1651 = vunpack.c.h.b16 %v1371
        %v1652 = vunpack.c.l.b16 %v1372
        %v1653 = vunpack.c.h.b16 %v1372
        %v1654 = vunpack.c.l.b16 %v1373
        %v1655 = vunpack.c.h.b16 %v1373
        %v1656 = vunpack.c.l.b16 %v1374
        %v1657 = vunpack.c.h.b16 %v1374
        %v1658 = vunpack.c.l.b16 %v1375
        %v1659 = vunpack.c.h.b16 %v1375
        %v1660 = vunpack.c.l.b16 %v1376
        %v1661 = vunpack.c.h.b16 %v1376
        %v1662 = vunpack.c.l.b16 %v1377
        %v1663 = vunpack.c.h.b16 %v1377
        %v1664 = vunpack.c.l.b16 %v1378
        %v1665 = vunpack.c.h.b16 %v1378
        %v1666 = vunpack.c.l.b16 %v1379
        %v1667 = vunpack.c.h.b16 %v1379
        %v1668 = vunpack.c.l.b16 %v1380
        %v1669 = vunpack.c.h.b16 %v1380
        %v1670 = vunpack.c.l.b16 %v1381
        %v1671 = vunpack.c.h.b16 %v1381
        %v1672 = vunpack.c.l.b16 %v1382
        %v1673 = vunpack.c.h.b16 %v1382
        %v1674 = vunpack.c.l.b16 %v1383
        %v1675 = vunpack.c.h.b16 %v1383
        %v1676 = vunpack.c.l.b16 %v1384
        %v1677 = vunpack.c.h.b16 %v1384
        %v1678 = vunpack.c.l.b16 %v1385
        %v1679 = vunpack.c.h.b16 %v1385
        %v1680 = vunpack.c.l.b16 %v1386
        %v1681 = vunpack.c.h.b16 %v1386
        %v1682 = vunpack.c.l.b16 %v1387
        %v1683 = vunpack.c.h.b16 %v1387
        %v1684 = vunpack.c.l.b16 %v1388
        %v1685 = vunpack.c.h.b16 %v1388
        %v1686 = vunpack.c.l.b16 %v1389
        %v1687 = vunpack.c.h.b16 %v1389
        %v1688 = vunpack.c.l.b16 %v1390
        %v1689 = vunpack.c.h.b16 %v1390
        %v1690 = vunpack.c.l.b16 %v1391
        %v1691 = vunpack.c.h.b16 %v1391
        %v1692 = vunpack.c.l.b16 %v1392
        %v1693 = vunpack.c.h.b16 %v1392
        %v1694 = vunpack.c.l.b16 %v1393
        %v1695 = vunpack.c.h.b16 %v1393
        %v1696 = vunpack.c.l.b16 %v1394
        %v1697 = vunpack.c.h.b16 %v1394
        %v1698 = vunpack.c.l.b16 %v1395
        %v1699 = vunpack.c.h.b16 %v1395
        %v1700 = vunpack.c.l.b16 %v1396
        %v1701 = vunpack.c.h.b16 %v1396
        %v1702 = vunpack.c.l.b16 %v1397
        %v1703 = vunpack.c.h.b16 %v1397
        %v1704 = vunpack.c.l.b16 %v1398
        %v1705 = vunpack.c.h.b16 %v1398
        %v1706 = vunpack.c.l.b16 %v1399
        %v1707 = vunpack.c.h.b16 %v1399
        %v1708 = vunpack.c.l.b16 %v1400
        %v1709 = vunpack.c.h.b16 %v1400
        %v1710 = vunpack.c.l.b16 %v1401
        %v1711 = vunpack.c.h.b16 %v1401
        %v1712 = vunpack.c.l.b16 %v1402
        %v1713 = vunpack.c.h.b16 %v1402
        %v1714 = vunpack.c.l.b16 %v1403
        %v1715 = vunpack.c.h.b16 %v1403
        %v1716 = vunpack.c.l.b16 %v1404
        %v1717 = vunpack.c.h.b16 %v1404
        %v1718 = vunpack.c.l.b16 %v1405
        %v1719 = vunpack.c.h.b16 %v1405
        %v1720 = vunpack.c.l.b16 %v1406
        %v1721 = vunpack.c.h.b16 %v1406
        %v1722 = vunpack.c.l.b16 %v1407
        %v1723 = vunpack.c.h.b16 %v1407
        %v1724 = vunpack.c.l.b16 %v1408
        %v1725 = vunpack.c.h.b16 %v1408
        %v1726 = vunpack.c.l.b16 %v1409
        %v1727 = vunpack.c.h.b16 %v1409
        %v1728 = vunpack.c.l.b16 %v1410
        %v1729 = vunpack.c.h.b16 %v1410
        %v1730 = vunpack.c.l.b16 %v1411
        %v1731 = vunpack.c.h.b16 %v1411
        %v1732 = vpack.c.b16 %v1546, %v1540
        %v1733 = vpack.c.b16 %v1547, %v1541
        %v1734 = vpack.c.b16 %v1548, %v1542
        %v1735 = vpack.c.b16 %v1549, %v1543
        %v1736 = vpack.c.b16 %v1550, %v1544
        %v1737 = vpack.c.b16 %v1551, %v1545
        %v1738 = vpack.c.b16 %v1558, %v1552
        %v1739 = vpack.c.b16 %v1559, %v1553
        %v1740 = vpack.c.b16 %v1560, %v1554
        %v1741 = vpack.c.b16 %v1561, %v1555
        %v1742 = vpack.c.b16 %v1562, %v1556
        %v1743 = vpack.c.b16 %v1563, %v1557
        %v1744 = vpack.c.b16 %v1570, %v1564
        %v1745 = vpack.c.b16 %v1571, %v1565
        %v1746 = vpack.c.b16 %v1572, %v1566
        %v1747 = vpack.c.b16 %v1573, %v1567
        %v1748 = vpack.c.b16 %v1574, %v1568
        %v1749 = vpack.c.b16 %v1575, %v1569
        %v1750 = vpack.c.b16 %v1582, %v1576
        %v1751 = vpack.c.b16 %v1583, %v1577
        %v1752 = vpack.c.b16 %v1584, %v1578
        %v1753 = vpack.c.b16 %v1585, %v1579
        %v1754 = vpack.c.b16 %v1586, %v1580
        %v1755 = vpack.c.b16 %v1587, %v1581
        %v1756 = vpack.c.b16 %v1594, %v1588
        %v1757 = vpack.c.b16 %v1595, %v1589
        %v1758 = vpack.c.b16 %v1596, %v1590
        %v1759 = vpack.c.b16 %v1597, %v1591
        %v1760 = vpack.c.b16 %v1598, %v1592
        %v1761 = vpack.c.b16 %v1599, %v1593
        %v1762 = vpack.c.b16 %v1606, %v1600
        %v1763 = vpack.c.b16 %v1607, %v1601
        %v1764 = vpack.c.b16 %v1608, %v1602
        %v1765 = vpack.c.b16 %v1609, %v1603
        %v1766 = vpack.c.b16 %v1610, %v1604
        %v1767 = vpack.c.b16 %v1611, %v1605
        %v1768 = vpack.c.b16 %v1618, %v1612
        %v1769 = vpack.c.b16 %v1619, %v1613
        %v1770 = vpack.c.b16 %v1620, %v1614
        %v1771 = vpack.c.b16 %v1621, %v1615
        %v1772 = vpack.c.b16 %v1622, %v1616
        %v1773 = vpack.c.b16 %v1623, %v1617
        %v1774 = vpack.c.b16 %v1630, %v1624
        %v1775 = vpack.c.b16 %v1631, %v1625
        %v1776 = vpack.c.b16 %v1632, %v1626
        %v1777 = vpack.c.b16 %v1633, %v1627
        %v1778 = vpack.c.b16 %v1634, %v1628
        %v1779 = vpack.c.b16 %v1635, %v1629
        %v1780 = vpack.c.b16 %v1642, %v1636
        %v1781 = vpack.c.b16 %v1643, %v1637
        %v1782 = vpack.c.b16 %v1644, %v1638
        %v1783 = vpack.c.b16 %v1645, %v1639
        %v1784 = vpack.c.b16 %v1646, %v1640
        %v1785 = vpack.c.b16 %v1647, %v1641
        %v1786 = vpack.c.b16 %v1654, %v1648
        %v1787 = vpack.c.b16 %v1655, %v1649
        %v1788 = vpack.c.b16 %v1656, %v1650
        %v1789 = vpack.c.b16 %v1657, %v1651
        %v1790 = vpack.c.b16 %v1658, %v1652
        %v1791 = vpack.c.b16 %v1659, %v1653
        %v1792 = vpack.c.b16 %v1666, %v1660
        %v1793 = vpack.c.b16 %v1667, %v1661
        %v1794 = vpack.c.b16 %v1668, %v1662
        %v1795 = vpack.c.b16 %v1669, %v1663
        %v1796 = vpack.c.b16 %v1670, %v1664
        %v1797 = vpack.c.b16 %v1671, %v1665
        %v1798 = vpack.c.b16 %v1678, %v1672
        %v1799 = vpack.c.b16 %v1679, %v1673
        %v1800 = vpack.c.b16 %v1680, %v1674
        %v1801 = vpack.c.b16 %v1681, %v1675
        %v1802 = vpack.c.b16 %v1682, %v1676
        %v1803 = vpack.c.b16 %v1683, %v1677
        %v1804 = vpack.c.b16 %v1690, %v1684
        %v1805 = vpack.c.b16 %v1691, %v1685
        %v1806 = vpack.c.b16 %v1692, %v1686
        %v1807 = vpack.c.b16 %v1693, %v1687
        %v1808 = vpack.c.b16 %v1694, %v1688
        %v1809 = vpack.c.b16 %v1695, %v1689
        %v1810 = vpack.c.b16 %v1702, %v1696
        %v1811 = vpack.c.b16 %v1703, %v1697
        %v1812 = vpack.c.b16 %v1704, %v1698
        %v1813 = vpack.c.b16 %v1705, %v1699
        %v1814 = vpack.c.b16 %v1706, %v1700
        %v1815 = vpack.c.b16 %v1707, %v1701
        %v1816 = vpack.c.b16 %v1714, %v1708
        %v1817 = vpack.c.b16 %v1715, %v1709
        %v1818 = vpack.c.b16 %v1716, %v1710
        %v1819 = vpack.c.b16 %v1717, %v1711
        %v1820 = vpack.c.b16 %v1718, %v1712
        %v1821 = vpack.c.b16 %v1719, %v1713
        %v1822 = vpack.c.b16 %v1726, %v1720
        %v1823 = vpack.c.b16 %v1727, %v1721
        %v1824 = vpack.c.b16 %v1728, %v1722
        %v1825 = vpack.c.b16 %v1729, %v1723
        %v1826 = vpack.c.b16 %v1730, %v1724
        %v1827 = vpack.c.b16 %v1731, %v1725
        %1924 = vmatprep.subr.bf16.mxu0 %v1775
        %1925 = vmatpush1.bf16.msra.mxu0 %v1774
        %1926 = vmatprep.subr.bf16.mxu0 %v1769
        %1927 = vmatpush1.bf16.msra.mxu0 %v1768
        %1928 = vmatprep.subr.bf16.mxu0 %v1763
        %1929 = vmatpush1.bf16.msra.mxu0 %v1762
        %1930 = vmatprep.subr.bf16.mxu0 %v1757
        %1931 = vmatpush1.bf16.msra.mxu0 %v1756
        %1932 = vmatprep.subr.bf16.mxu0 %v1751
        %1933 = vmatpush1.bf16.msra.mxu0 %v1750
        %1934 = vmatprep.subr.bf16.mxu0 %v1745
        %1935 = vmatpush1.bf16.msra.mxu0 %v1744
        %1936 = vmatprep.subr.bf16.mxu0 %v1739
        %1937 = vmatpush1.bf16.msra.mxu0 %v1738
        %1938 = vmatprep.subr.bf16.mxu0 %v1733
        %1939 = vmatpush1.bf16.msra.mxu0 %v1732
        %1940 = vmatprep.subr.bf16.mxu0 %v1823
        %1941 = vmatpush2.bf16.msra.mxu0 %v1822
        %1942 = vmatprep.subr.bf16.mxu0 %v1817
        %1943 = vmatpush2.bf16.msra.mxu0 %v1816
        %1944 = vmatprep.subr.bf16.mxu0 %v1811
        %1945 = vmatpush2.bf16.msra.mxu0 %v1810
        %1946 = vmatprep.subr.bf16.mxu0 %v1805
        %1947 = vmatpush2.bf16.msra.mxu0 %v1804
        %1948 = vmatprep.subr.bf16.mxu0 %v1799
        %1949 = vmatpush2.bf16.msra.mxu0 %v1798
        %1950 = vmatprep.subr.bf16.mxu0 %v1793
        %1951 = vmatpush2.bf16.msra.mxu0 %v1792
        %1952 = vmatprep.subr.bf16.mxu0 %v1787
        %1953 = vmatpush2.bf16.msra.mxu0 %v1786
        %1954 = vmatprep.subr.bf16.mxu0 %v1781
        %1955 = vmatpush2.bf16.msra.mxu0 %v1780
        %1956 = vmatprep.mubr.bf16.mxu0 %v1285
        %1957 = vmatmul.mubr.bf16.gmra.mxu0 %v1284
        %v1958 = vpop.f32.mrf.mxu0
        %v1959 = vadd.f32 %v1417, %v1958
        %v1960 = vpop.f32.mrf.mxu0
        %v1961 = vadd.f32 %v1421, %v1960
        %v1962 = vpop.f32.mrf.mxu0
        %v1963 = vadd.f32 %v1417, %v1962
        %v1964 = vpop.f32.mrf.mxu0
        %v1965 = vadd.f32 %v1421, %v1964
        %1966 = vmatprep.mubr.bf16.mxu0 %v1287
        %1967 = vmatmul.mubr.bf16.gmra.mxu0 %v1286
        %v1968 = vpop.f32.mrf.mxu0
        %v1969 = vadd.f32 %v1417, %v1968
        %v1970 = vpop.f32.mrf.mxu0
        %v1971 = vadd.f32 %v1421, %v1970
        %v1972 = vpop.f32.mrf.mxu0
        %v1973 = vadd.f32 %v1417, %v1972
        %v1974 = vpop.f32.mrf.mxu0
        %v1975 = vadd.f32 %v1421, %v1974
        %1976 = vmatprep.mubr.bf16.mxu0 %v1289
        %1977 = vmatmul.mubr.bf16.gmra.mxu0 %v1288
        %v1978 = vpop.f32.mrf.mxu0
        %v1979 = vadd.f32 %v1417, %v1978
        %v1980 = vpop.f32.mrf.mxu0
        %v1981 = vadd.f32 %v1421, %v1980
        %v1982 = vpop.f32.mrf.mxu0
        %v1983 = vadd.f32 %v1417, %v1982
        %v1984 = vpop.f32.mrf.mxu0
        %v1985 = vadd.f32 %v1421, %v1984
        %1986 = vmatprep.mubr.bf16.mxu0 %v1291
        %1987 = vmatmul.mubr.bf16.gmra.mxu0 %v1290
        %v1988 = vpop.f32.mrf.mxu0
        %v1989 = vadd.f32 %v1417, %v1988
        %v1990 = vpop.f32.mrf.mxu0
        %v1991 = vadd.f32 %v1421, %v1990
        %v1992 = vpop.f32.mrf.mxu0
        %v1993 = vadd.f32 %v1417, %v1992
        %v1994 = vpop.f32.mrf.mxu0
        %v1995 = vadd.f32 %v1421, %v1994
        %1996 = vmatprep.mubr.bf16.mxu0 %v1293
        %1997 = vmatmul.mubr.bf16.gmra.mxu0 %v1292
        %v1998 = vpop.f32.mrf.mxu0
        %v1999 = vadd.f32 %v1417, %v1998
        %v2000 = vpop.f32.mrf.mxu0
        %v2001 = vadd.f32 %v1421, %v2000
        %v2002 = vpop.f32.mrf.mxu0
        %v2003 = vadd.f32 %v1417, %v2002
        %v2004 = vpop.f32.mrf.mxu0
        %v2005 = vadd.f32 %v1421, %v2004
        %2006 = vmatprep.mubr.bf16.mxu0 %v1295
        %2007 = vmatmul.mubr.bf16.gmra.mxu0 %v1294
        %v2008 = vpop.f32.mrf.mxu0
        %v2009 = vadd.f32 %v1417, %v2008
        %v2010 = vpop.f32.mrf.mxu0
        %v2011 = vadd.f32 %v1421, %v2010
        %v2012 = vpop.f32.mrf.mxu0
        %v2013 = vadd.f32 %v1417, %v2012
        %v2014 = vpop.f32.mrf.mxu0
        %v2015 = vadd.f32 %v1421, %v2014
        %2016 = vmatprep.mubr.bf16.mxu0 %v1297
        %2017 = vmatmul.mubr.bf16.gmra.mxu0 %v1296
        %v2018 = vpop.f32.mrf.mxu0
        %v2019 = vadd.f32 %v1417, %v2018
        %v2020 = vpop.f32.mrf.mxu0
        %v2021 = vadd.f32 %v1421, %v2020
        %v2022 = vpop.f32.mrf.mxu0
        %v2023 = vadd.f32 %v1417, %v2022
        %v2024 = vpop.f32.mrf.mxu0
        %v2025 = vadd.f32 %v1421, %v2024
        %2026 = vmatprep.mubr.bf16.mxu0 %v1299
        %2027 = vmatmul.mubr.bf16.gmra.mxu0 %v1298
        %v2028 = vpop.f32.mrf.mxu0
        %v2029 = vadd.f32 %v1417, %v2028
        %v2030 = vpop.f32.mrf.mxu0
        %v2031 = vadd.f32 %v1421, %v2030
        %v2032 = vpop.f32.mrf.mxu0
        %v2033 = vadd.f32 %v1417, %v2032
        %v2034 = vpop.f32.mrf.mxu0
        %v2035 = vadd.f32 %v1421, %v2034
        %2036 = vmatprep.mubr.bf16.mxu0 %v1301
        %2037 = vmatmul.mubr.bf16.gmra.mxu0 %v1300
        %v2038 = vpop.f32.mrf.mxu0
        %v2039 = vadd.f32 %v1417, %v2038
        %v2040 = vpop.f32.mrf.mxu0
        %v2041 = vadd.f32 %v1421, %v2040
        %v2042 = vpop.f32.mrf.mxu0
        %v2043 = vadd.f32 %v1417, %v2042
        %v2044 = vpop.f32.mrf.mxu0
        %v2045 = vadd.f32 %v1421, %v2044
        %2046 = vmatprep.mubr.bf16.mxu0 %v1303
        %2047 = vmatmul.mubr.bf16.gmra.mxu0 %v1302
        %v2048 = vpop.f32.mrf.mxu0
        %v2049 = vadd.f32 %v1417, %v2048
        %v2050 = vpop.f32.mrf.mxu0
        %v2051 = vadd.f32 %v1421, %v2050
        %v2052 = vpop.f32.mrf.mxu0
        %v2053 = vadd.f32 %v1417, %v2052
        %v2054 = vpop.f32.mrf.mxu0
        %v2055 = vadd.f32 %v1421, %v2054
        %2056 = vmatprep.mubr.bf16.mxu0 %v1305
        %2057 = vmatmul.mubr.bf16.gmra.mxu0 %v1304
        %v2058 = vpop.f32.mrf.mxu0
        %v2059 = vadd.f32 %v1417, %v2058
        %v2060 = vpop.f32.mrf.mxu0
        %v2061 = vadd.f32 %v1421, %v2060
        %v2062 = vpop.f32.mrf.mxu0
        %v2063 = vadd.f32 %v1417, %v2062
        %v2064 = vpop.f32.mrf.mxu0
        %v2065 = vadd.f32 %v1421, %v2064
        %2066 = vmatprep.mubr.bf16.mxu0 %v1307
        %2067 = vmatmul.mubr.bf16.gmra.mxu0 %v1306
        %v2068 = vpop.f32.mrf.mxu0
        %v2069 = vadd.f32 %v1417, %v2068
        %v2070 = vpop.f32.mrf.mxu0
        %v2071 = vadd.f32 %v1421, %v2070
        %v2072 = vpop.f32.mrf.mxu0
        %v2073 = vadd.f32 %v1417, %v2072
        %v2074 = vpop.f32.mrf.mxu0
        %v2075 = vadd.f32 %v1421, %v2074
        %2076 = vmatprep.mubr.bf16.mxu0 %v1309
        %2077 = vmatmul.mubr.bf16.gmra.mxu0 %v1308
        %v2078 = vpop.f32.mrf.mxu0
        %v2079 = vadd.f32 %v1417, %v2078
        %v2080 = vpop.f32.mrf.mxu0
        %v2081 = vadd.f32 %v1421, %v2080
        %v2082 = vpop.f32.mrf.mxu0
        %v2083 = vadd.f32 %v1417, %v2082
        %v2084 = vpop.f32.mrf.mxu0
        %v2085 = vadd.f32 %v1421, %v2084
        %2086 = vmatprep.mubr.bf16.mxu0 %v1311
        %2087 = vmatmul.mubr.bf16.gmra.mxu0 %v1310
        %v2088 = vpop.f32.mrf.mxu0
        %v2089 = vadd.f32 %v1417, %v2088
        %v2090 = vpop.f32.mrf.mxu0
        %v2091 = vadd.f32 %v1421, %v2090
        %v2092 = vpop.f32.mrf.mxu0
        %v2093 = vadd.f32 %v1417, %v2092
        %v2094 = vpop.f32.mrf.mxu0
        %v2095 = vadd.f32 %v1421, %v2094
        %2096 = vmatprep.mubr.bf16.mxu0 %v1313
        %2097 = vmatmul.mubr.bf16.gmra.mxu0 %v1312
        %v2098 = vpop.f32.mrf.mxu0
        %v2099 = vadd.f32 %v1417, %v2098
        %v2100 = vpop.f32.mrf.mxu0
        %v2101 = vadd.f32 %v1421, %v2100
        %v2102 = vpop.f32.mrf.mxu0
        %v2103 = vadd.f32 %v1417, %v2102
        %v2104 = vpop.f32.mrf.mxu0
        %v2105 = vadd.f32 %v1421, %v2104
        %2106 = vmatprep.mubr.bf16.mxu0 %v1315
        %2107 = vmatmul.mubr.bf16.gmra.mxu0 %v1314
        %v2108 = vpop.f32.mrf.mxu0
        %v2109 = vadd.f32 %v1417, %v2108
        %v2110 = vpop.f32.mrf.mxu0
        %v2111 = vadd.f32 %v1421, %v2110
        %v2112 = vpop.f32.mrf.mxu0
        %v2113 = vadd.f32 %v1417, %v2112
        %v2114 = vpop.f32.mrf.mxu0
        %v2115 = vadd.f32 %v1421, %v2114
        %2116 = vdwg.mxu0
        %2117 = vmatprep.subr.bf16.mxu0 %v1777
        %2118 = vmatpush1.bf16.msra.mxu0 %v1776
        %2119 = vmatprep.subr.bf16.mxu0 %v1771
        %2120 = vmatpush1.bf16.msra.mxu0 %v1770
        %2121 = vmatprep.subr.bf16.mxu0 %v1765
        %2122 = vmatpush1.bf16.msra.mxu0 %v1764
        %2123 = vmatprep.subr.bf16.mxu0 %v1759
        %2124 = vmatpush1.bf16.msra.mxu0 %v1758
        %2125 = vmatprep.subr.bf16.mxu0 %v1753
        %2126 = vmatpush1.bf16.msra.mxu0 %v1752
        %2127 = vmatprep.subr.bf16.mxu0 %v1747
        %2128 = vmatpush1.bf16.msra.mxu0 %v1746
        %2129 = vmatprep.subr.bf16.mxu0 %v1741
        %2130 = vmatpush1.bf16.msra.mxu0 %v1740
        %2131 = vmatprep.subr.bf16.mxu0 %v1735
        %2132 = vmatpush1.bf16.msra.mxu0 %v1734
        %2133 = vmatprep.subr.bf16.mxu0 %v1825
        %2134 = vmatpush2.bf16.msra.mxu0 %v1824
        %2135 = vmatprep.subr.bf16.mxu0 %v1819
        %2136 = vmatpush2.bf16.msra.mxu0 %v1818
        %2137 = vmatprep.subr.bf16.mxu0 %v1813
        %2138 = vmatpush2.bf16.msra.mxu0 %v1812
        %2139 = vmatprep.subr.bf16.mxu0 %v1807
        %2140 = vmatpush2.bf16.msra.mxu0 %v1806
        %2141 = vmatprep.subr.bf16.mxu0 %v1801
        %2142 = vmatpush2.bf16.msra.mxu0 %v1800
        %2143 = vmatprep.subr.bf16.mxu0 %v1795
        %2144 = vmatpush2.bf16.msra.mxu0 %v1794
        %2145 = vmatprep.subr.bf16.mxu0 %v1789
        %2146 = vmatpush2.bf16.msra.mxu0 %v1788
        %2147 = vmatprep.subr.bf16.mxu0 %v1783
        %2148 = vmatpush2.bf16.msra.mxu0 %v1782
        %2149 = vmatprep.mubr.bf16.mxu0 %v1285
        %2150 = vmatmul.mubr.bf16.gmra.mxu0 %v1284
        %v2151 = vpop.f32.mrf.mxu0
        %v2152 = vadd.f32 %v1425, %v2151
        %v2153 = vpop.f32.mrf.mxu0
        %v2154 = vadd.f32 %v1429, %v2153
        %v2155 = vpop.f32.mrf.mxu0
        %v2156 = vadd.f32 %v1425, %v2155
        %v2157 = vpop.f32.mrf.mxu0
        %v2158 = vadd.f32 %v1429, %v2157
        %2159 = vmatprep.mubr.bf16.mxu0 %v1287
        %2160 = vmatmul.mubr.bf16.gmra.mxu0 %v1286
        %v2161 = vpop.f32.mrf.mxu0
        %v2162 = vadd.f32 %v1425, %v2161
        %v2163 = vpop.f32.mrf.mxu0
        %v2164 = vadd.f32 %v1429, %v2163
        %v2165 = vpop.f32.mrf.mxu0
        %v2166 = vadd.f32 %v1425, %v2165
        %v2167 = vpop.f32.mrf.mxu0
        %v2168 = vadd.f32 %v1429, %v2167
        %2169 = vmatprep.mubr.bf16.mxu0 %v1289
        %2170 = vmatmul.mubr.bf16.gmra.mxu0 %v1288
        %v2171 = vpop.f32.mrf.mxu0
        %v2172 = vadd.f32 %v1425, %v2171
        %v2173 = vpop.f32.mrf.mxu0
        %v2174 = vadd.f32 %v1429, %v2173
        %v2175 = vpop.f32.mrf.mxu0
        %v2176 = vadd.f32 %v1425, %v2175
        %v2177 = vpop.f32.mrf.mxu0
        %v2178 = vadd.f32 %v1429, %v2177
        %2179 = vmatprep.mubr.bf16.mxu0 %v1291
        %2180 = vmatmul.mubr.bf16.gmra.mxu0 %v1290
        %v2181 = vpop.f32.mrf.mxu0
        %v2182 = vadd.f32 %v1425, %v2181
        %v2183 = vpop.f32.mrf.mxu0
        %v2184 = vadd.f32 %v1429, %v2183
        %v2185 = vpop.f32.mrf.mxu0
        %v2186 = vadd.f32 %v1425, %v2185
        %v2187 = vpop.f32.mrf.mxu0
        %v2188 = vadd.f32 %v1429, %v2187
        %2189 = vmatprep.mubr.bf16.mxu0 %v1293
        %2190 = vmatmul.mubr.bf16.gmra.mxu0 %v1292
        %v2191 = vpop.f32.mrf.mxu0
        %v2192 = vadd.f32 %v1425, %v2191
        %v2193 = vpop.f32.mrf.mxu0
        %v2194 = vadd.f32 %v1429, %v2193
        %v2195 = vpop.f32.mrf.mxu0
        %v2196 = vadd.f32 %v1425, %v2195
        %v2197 = vpop.f32.mrf.mxu0
        %v2198 = vadd.f32 %v1429, %v2197
        %2199 = vmatprep.mubr.bf16.mxu0 %v1295
        %2200 = vmatmul.mubr.bf16.gmra.mxu0 %v1294
        %v2201 = vpop.f32.mrf.mxu0
        %v2202 = vadd.f32 %v1425, %v2201
        %v2203 = vpop.f32.mrf.mxu0
        %v2204 = vadd.f32 %v1429, %v2203
        %v2205 = vpop.f32.mrf.mxu0
        %v2206 = vadd.f32 %v1425, %v2205
        %v2207 = vpop.f32.mrf.mxu0
        %v2208 = vadd.f32 %v1429, %v2207
        %2209 = vmatprep.mubr.bf16.mxu0 %v1297
        %2210 = vmatmul.mubr.bf16.gmra.mxu0 %v1296
        %v2211 = vpop.f32.mrf.mxu0
        %v2212 = vadd.f32 %v1425, %v2211
        %v2213 = vpop.f32.mrf.mxu0
        %v2214 = vadd.f32 %v1429, %v2213
        %v2215 = vpop.f32.mrf.mxu0
        %v2216 = vadd.f32 %v1425, %v2215
        %v2217 = vpop.f32.mrf.mxu0
        %v2218 = vadd.f32 %v1429, %v2217
        %2219 = vmatprep.mubr.bf16.mxu0 %v1299
        %2220 = vmatmul.mubr.bf16.gmra.mxu0 %v1298
        %v2221 = vpop.f32.mrf.mxu0
        %v2222 = vadd.f32 %v1425, %v2221
        %v2223 = vpop.f32.mrf.mxu0
        %v2224 = vadd.f32 %v1429, %v2223
        %v2225 = vpop.f32.mrf.mxu0
        %v2226 = vadd.f32 %v1425, %v2225
        %v2227 = vpop.f32.mrf.mxu0
        %v2228 = vadd.f32 %v1429, %v2227
        %2229 = vmatprep.mubr.bf16.mxu0 %v1301
        %2230 = vmatmul.mubr.bf16.gmra.mxu0 %v1300
        %v2231 = vpop.f32.mrf.mxu0
        %v2232 = vadd.f32 %v1425, %v2231
        %v2233 = vpop.f32.mrf.mxu0
        %v2234 = vadd.f32 %v1429, %v2233
        %v2235 = vpop.f32.mrf.mxu0
        %v2236 = vadd.f32 %v1425, %v2235
        %v2237 = vpop.f32.mrf.mxu0
        %v2238 = vadd.f32 %v1429, %v2237
        %2239 = vmatprep.mubr.bf16.mxu0 %v1303
        %2240 = vmatmul.mubr.bf16.gmra.mxu0 %v1302
        %v2241 = vpop.f32.mrf.mxu0
        %v2242 = vadd.f32 %v1425, %v2241
        %v2243 = vpop.f32.mrf.mxu0
        %v2244 = vadd.f32 %v1429, %v2243
        %v2245 = vpop.f32.mrf.mxu0
        %v2246 = vadd.f32 %v1425, %v2245
        %v2247 = vpop.f32.mrf.mxu0
        %v2248 = vadd.f32 %v1429, %v2247
        %2249 = vmatprep.mubr.bf16.mxu0 %v1305
        %2250 = vmatmul.mubr.bf16.gmra.mxu0 %v1304
        %v2251 = vpop.f32.mrf.mxu0
        %v2252 = vadd.f32 %v1425, %v2251
        %v2253 = vpop.f32.mrf.mxu0
        %v2254 = vadd.f32 %v1429, %v2253
        %v2255 = vpop.f32.mrf.mxu0
        %v2256 = vadd.f32 %v1425, %v2255
        %v2257 = vpop.f32.mrf.mxu0
        %v2258 = vadd.f32 %v1429, %v2257
        %2259 = vmatprep.mubr.bf16.mxu0 %v1307
        %2260 = vmatmul.mubr.bf16.gmra.mxu0 %v1306
        %v2261 = vpop.f32.mrf.mxu0
        %v2262 = vadd.f32 %v1425, %v2261
        %v2263 = vpop.f32.mrf.mxu0
        %v2264 = vadd.f32 %v1429, %v2263
        %v2265 = vpop.f32.mrf.mxu0
        %v2266 = vadd.f32 %v1425, %v2265
        %v2267 = vpop.f32.mrf.mxu0
        %v2268 = vadd.f32 %v1429, %v2267
        %2269 = vmatprep.mubr.bf16.mxu0 %v1309
        %2270 = vmatmul.mubr.bf16.gmra.mxu0 %v1308
        %v2271 = vpop.f32.mrf.mxu0
        %v2272 = vadd.f32 %v1425, %v2271
        %v2273 = vpop.f32.mrf.mxu0
        %v2274 = vadd.f32 %v1429, %v2273
        %v2275 = vpop.f32.mrf.mxu0
        %v2276 = vadd.f32 %v1425, %v2275
        %v2277 = vpop.f32.mrf.mxu0
        %v2278 = vadd.f32 %v1429, %v2277
        %2279 = vmatprep.mubr.bf16.mxu0 %v1311
        %2280 = vmatmul.mubr.bf16.gmra.mxu0 %v1310
        %v2281 = vpop.f32.mrf.mxu0
        %v2282 = vadd.f32 %v1425, %v2281
        %v2283 = vpop.f32.mrf.mxu0
        %v2284 = vadd.f32 %v1429, %v2283
        %v2285 = vpop.f32.mrf.mxu0
        %v2286 = vadd.f32 %v1425, %v2285
        %v2287 = vpop.f32.mrf.mxu0
        %v2288 = vadd.f32 %v1429, %v2287
        %2289 = vmatprep.mubr.bf16.mxu0 %v1313
        %2290 = vmatmul.mubr.bf16.gmra.mxu0 %v1312
        %v2291 = vpop.f32.mrf.mxu0
        %v2292 = vadd.f32 %v1425, %v2291
        %v2293 = vpop.f32.mrf.mxu0
        %v2294 = vadd.f32 %v1429, %v2293
        %v2295 = vpop.f32.mrf.mxu0
        %v2296 = vadd.f32 %v1425, %v2295
        %v2297 = vpop.f32.mrf.mxu0
        %v2298 = vadd.f32 %v1429, %v2297
        %2299 = vmatprep.mubr.bf16.mxu0 %v1315
        %2300 = vmatmul.mubr.bf16.gmra.mxu0 %v1314
        %v2301 = vpop.f32.mrf.mxu0
        %v2302 = vadd.f32 %v1425, %v2301
        %v2303 = vpop.f32.mrf.mxu0
        %v2304 = vadd.f32 %v1429, %v2303
        %v2305 = vpop.f32.mrf.mxu0
        %v2306 = vadd.f32 %v1425, %v2305
        %v2307 = vpop.f32.mrf.mxu0
        %v2308 = vadd.f32 %v1429, %v2307
        %2309 = vdwg.mxu0
        %2310 = vmatprep.subr.bf16.mxu0 %v1779
        %2311 = vmatpush1.bf16.msra.mxu0 %v1778
        %2312 = vmatprep.subr.bf16.mxu0 %v1773
        %2313 = vmatpush1.bf16.msra.mxu0 %v1772
        %2314 = vmatprep.subr.bf16.mxu0 %v1767
        %2315 = vmatpush1.bf16.msra.mxu0 %v1766
        %2316 = vmatprep.subr.bf16.mxu0 %v1761
        %2317 = vmatpush1.bf16.msra.mxu0 %v1760
        %2318 = vmatprep.subr.bf16.mxu0 %v1755
        %2319 = vmatpush1.bf16.msra.mxu0 %v1754
        %2320 = vmatprep.subr.bf16.mxu0 %v1749
        %2321 = vmatpush1.bf16.msra.mxu0 %v1748
        %2322 = vmatprep.subr.bf16.mxu0 %v1743
        %2323 = vmatpush1.bf16.msra.mxu0 %v1742
        %2324 = vmatprep.subr.bf16.mxu0 %v1737
        %2325 = vmatpush1.bf16.msra.mxu0 %v1736
        %2326 = vmatprep.subr.bf16.mxu0 %v1827
        %2327 = vmatpush2.bf16.msra.mxu0 %v1826
        %2328 = vmatprep.subr.bf16.mxu0 %v1821
        %2329 = vmatpush2.bf16.msra.mxu0 %v1820
        %2330 = vmatprep.subr.bf16.mxu0 %v1815
        %2331 = vmatpush2.bf16.msra.mxu0 %v1814
        %2332 = vmatprep.subr.bf16.mxu0 %v1809
        %2333 = vmatpush2.bf16.msra.mxu0 %v1808
        %2334 = vmatprep.subr.bf16.mxu0 %v1803
        %2335 = vmatpush2.bf16.msra.mxu0 %v1802
        %2336 = vmatprep.subr.bf16.mxu0 %v1797
        %2337 = vmatpush2.bf16.msra.mxu0 %v1796
        %2338 = vmatprep.subr.bf16.mxu0 %v1791
        %2339 = vmatpush2.bf16.msra.mxu0 %v1790
        %2340 = vmatprep.subr.bf16.mxu0 %v1785
        %2341 = vmatpush2.bf16.msra.mxu0 %v1784
        %2342 = vmatprep.mubr.bf16.mxu0 %v1285
        %2343 = vmatmul.mubr.bf16.gmra.mxu0 %v1284
        %v2344 = vpop.f32.mrf.mxu0
        %v2345 = vadd.f32 %v1433, %v2344
        %v2346 = vpop.f32.mrf.mxu0
        %v2347 = vadd.f32 %v1437, %v2346
        %v2348 = vpop.f32.mrf.mxu0
        %v2349 = vadd.f32 %v1433, %v2348
        %v2350 = vpop.f32.mrf.mxu0
        %v2351 = vadd.f32 %v1437, %v2350
        %2352 = vmatprep.mubr.bf16.mxu0 %v1287
        %2353 = vmatmul.mubr.bf16.gmra.mxu0 %v1286
        %v2354 = vpop.f32.mrf.mxu0
        %v2355 = vadd.f32 %v1433, %v2354
        %v2356 = vpop.f32.mrf.mxu0
        %v2357 = vadd.f32 %v1437, %v2356
        %v2358 = vpop.f32.mrf.mxu0
        %v2359 = vadd.f32 %v1433, %v2358
        %v2360 = vpop.f32.mrf.mxu0
        %v2361 = vadd.f32 %v1437, %v2360
        %2362 = vmatprep.mubr.bf16.mxu0 %v1289
        %2363 = vmatmul.mubr.bf16.gmra.mxu0 %v1288
        %v2364 = vpop.f32.mrf.mxu0
        %v2365 = vadd.f32 %v1433, %v2364
        %v2366 = vpop.f32.mrf.mxu0
        %v2367 = vadd.f32 %v1437, %v2366
        %v2368 = vpop.f32.mrf.mxu0
        %v2369 = vadd.f32 %v1433, %v2368
        %v2370 = vpop.f32.mrf.mxu0
        %v2371 = vadd.f32 %v1437, %v2370
        %2372 = vmatprep.mubr.bf16.mxu0 %v1291
        %2373 = vmatmul.mubr.bf16.gmra.mxu0 %v1290
        %v2374 = vpop.f32.mrf.mxu0
        %v2375 = vadd.f32 %v1433, %v2374
        %v2376 = vpop.f32.mrf.mxu0
        %v2377 = vadd.f32 %v1437, %v2376
        %v2378 = vpop.f32.mrf.mxu0
        %v2379 = vadd.f32 %v1433, %v2378
        %v2380 = vpop.f32.mrf.mxu0
        %v2381 = vadd.f32 %v1437, %v2380
        %2382 = vmatprep.mubr.bf16.mxu0 %v1293
        %2383 = vmatmul.mubr.bf16.gmra.mxu0 %v1292
        %v2384 = vpop.f32.mrf.mxu0
        %v2385 = vadd.f32 %v1433, %v2384
        %v2386 = vpop.f32.mrf.mxu0
        %v2387 = vadd.f32 %v1437, %v2386
        %v2388 = vpop.f32.mrf.mxu0
        %v2389 = vadd.f32 %v1433, %v2388
        %v2390 = vpop.f32.mrf.mxu0
        %v2391 = vadd.f32 %v1437, %v2390
        %2392 = vmatprep.mubr.bf16.mxu0 %v1295
        %2393 = vmatmul.mubr.bf16.gmra.mxu0 %v1294
        %v2394 = vpop.f32.mrf.mxu0
        %v2395 = vadd.f32 %v1433, %v2394
        %v2396 = vpop.f32.mrf.mxu0
        %v2397 = vadd.f32 %v1437, %v2396
        %v2398 = vpop.f32.mrf.mxu0
        %v2399 = vadd.f32 %v1433, %v2398
        %v2400 = vpop.f32.mrf.mxu0
        %v2401 = vadd.f32 %v1437, %v2400
        %2402 = vmatprep.mubr.bf16.mxu0 %v1297
        %2403 = vmatmul.mubr.bf16.gmra.mxu0 %v1296
        %v2404 = vpop.f32.mrf.mxu0
        %v2405 = vadd.f32 %v1433, %v2404
        %v2406 = vpop.f32.mrf.mxu0
        %v2407 = vadd.f32 %v1437, %v2406
        %v2408 = vpop.f32.mrf.mxu0
        %v2409 = vadd.f32 %v1433, %v2408
        %v2410 = vpop.f32.mrf.mxu0
        %v2411 = vadd.f32 %v1437, %v2410
        %2412 = vmatprep.mubr.bf16.mxu0 %v1299
        %2413 = vmatmul.mubr.bf16.gmra.mxu0 %v1298
        %v2414 = vpop.f32.mrf.mxu0
        %v2415 = vadd.f32 %v1433, %v2414
        %v2416 = vpop.f32.mrf.mxu0
        %v2417 = vadd.f32 %v1437, %v2416
        %v2418 = vpop.f32.mrf.mxu0
        %v2419 = vadd.f32 %v1433, %v2418
        %v2420 = vpop.f32.mrf.mxu0
        %v2421 = vadd.f32 %v1437, %v2420
        %2422 = vmatprep.mubr.bf16.mxu0 %v1301
        %2423 = vmatmul.mubr.bf16.gmra.mxu0 %v1300
        %v2424 = vpop.f32.mrf.mxu0
        %v2425 = vadd.f32 %v1433, %v2424
        %v2426 = vpop.f32.mrf.mxu0
        %v2427 = vadd.f32 %v1437, %v2426
        %v2428 = vpop.f32.mrf.mxu0
        %v2429 = vadd.f32 %v1433, %v2428
        %v2430 = vpop.f32.mrf.mxu0
        %v2431 = vadd.f32 %v1437, %v2430
        %2432 = vmatprep.mubr.bf16.mxu0 %v1303
        %2433 = vmatmul.mubr.bf16.gmra.mxu0 %v1302
        %v2434 = vpop.f32.mrf.mxu0
        %v2435 = vadd.f32 %v1433, %v2434
        %v2436 = vpop.f32.mrf.mxu0
        %v2437 = vadd.f32 %v1437, %v2436
        %v2438 = vpop.f32.mrf.mxu0
        %v2439 = vadd.f32 %v1433, %v2438
        %v2440 = vpop.f32.mrf.mxu0
        %v2441 = vadd.f32 %v1437, %v2440
        %2442 = vmatprep.mubr.bf16.mxu0 %v1305
        %2443 = vmatmul.mubr.bf16.gmra.mxu0 %v1304
        %v2444 = vpop.f32.mrf.mxu0
        %v2445 = vadd.f32 %v1433, %v2444
        %v2446 = vpop.f32.mrf.mxu0
        %v2447 = vadd.f32 %v1437, %v2446
        %v2448 = vpop.f32.mrf.mxu0
        %v2449 = vadd.f32 %v1433, %v2448
        %v2450 = vpop.f32.mrf.mxu0
        %v2451 = vadd.f32 %v1437, %v2450
        %2452 = vmatprep.mubr.bf16.mxu0 %v1307
        %2453 = vmatmul.mubr.bf16.gmra.mxu0 %v1306
        %v2454 = vpop.f32.mrf.mxu0
        %v2455 = vadd.f32 %v1433, %v2454
        %v2456 = vpop.f32.mrf.mxu0
        %v2457 = vadd.f32 %v1437, %v2456
        %v2458 = vpop.f32.mrf.mxu0
        %v2459 = vadd.f32 %v1433, %v2458
        %v2460 = vpop.f32.mrf.mxu0
        %v2461 = vadd.f32 %v1437, %v2460
        %2462 = vmatprep.mubr.bf16.mxu0 %v1309
        %2463 = vmatmul.mubr.bf16.gmra.mxu0 %v1308
        %v2464 = vpop.f32.mrf.mxu0
        %v2465 = vadd.f32 %v1433, %v2464
        %v2466 = vpop.f32.mrf.mxu0
        %v2467 = vadd.f32 %v1437, %v2466
        %v2468 = vpop.f32.mrf.mxu0
        %v2469 = vadd.f32 %v1433, %v2468
        %v2470 = vpop.f32.mrf.mxu0
        %v2471 = vadd.f32 %v1437, %v2470
        %2472 = vmatprep.mubr.bf16.mxu0 %v1311
        %2473 = vmatmul.mubr.bf16.gmra.mxu0 %v1310
        %v2474 = vpop.f32.mrf.mxu0
        %v2475 = vadd.f32 %v1433, %v2474
        %v2476 = vpop.f32.mrf.mxu0
        %v2477 = vadd.f32 %v1437, %v2476
        %v2478 = vpop.f32.mrf.mxu0
        %v2479 = vadd.f32 %v1433, %v2478
        %v2480 = vpop.f32.mrf.mxu0
        %v2481 = vadd.f32 %v1437, %v2480
        %2482 = vmatprep.mubr.bf16.mxu0 %v1313
        %2483 = vmatmul.mubr.bf16.gmra.mxu0 %v1312
        %v2484 = vpop.f32.mrf.mxu0
        %v2485 = vadd.f32 %v1433, %v2484
        %v2486 = vpop.f32.mrf.mxu0
        %v2487 = vadd.f32 %v1437, %v2486
        %v2488 = vpop.f32.mrf.mxu0
        %v2489 = vadd.f32 %v1433, %v2488
        %v2490 = vpop.f32.mrf.mxu0
        %v2491 = vadd.f32 %v1437, %v2490
        %2492 = vmatprep.mubr.bf16.mxu0 %v1315
        %2493 = vmatmul.mubr.bf16.gmra.mxu0 %v1314
        %v2494 = vpop.f32.mrf.mxu0
        %v2495 = vadd.f32 %v1433, %v2494
        %v2496 = vpop.f32.mrf.mxu0
        %v2497 = vadd.f32 %v1437, %v2496
        %v2498 = vpop.f32.mrf.mxu0
        %v2499 = vadd.f32 %v1433, %v2498
        %v2500 = vpop.f32.mrf.mxu0
        %v2501 = vadd.f32 %v1437, %v2500
        %2502 = vdwg.mxu0
        %v2503 = vld [vmem:[%s468] sm:$0xff]
        %v2504 = vld [vmem:[%s468 + $0x8] sm:$0xff]
        %v2505 = vld [vmem:[%s468 + $0x10] sm:$0xff]
        %v2506 = vld [vmem:[%s468 + $0x18] sm:$0xff]
        %v2507 = vld [vmem:[%s468 + $0x20] sm:$0xff]
        %v2508 = vld [vmem:[%s468 + $0x28] sm:$0xff]
        %v2509 = vld [vmem:[%s468 + $0x30] sm:$0xff]
        %v2510 = vld [vmem:[%s468 + $0x38] sm:$0xff]
        %v2511 = vld [vmem:[%s468 + $0x40] sm:$0xff]
        %v2512 = vld [vmem:[%s468 + $0x48] sm:$0xff]
        %v2513 = vld [vmem:[%s468 + $0x50] sm:$0xff]
        %v2514 = vld [vmem:[%s468 + $0x58] sm:$0xff]
        %v2515 = vld [vmem:[%s468 + $0x60] sm:$0xff]
        %v2516 = vld [vmem:[%s468 + $0x68] sm:$0xff]
        %v2517 = vld [vmem:[%s468 + $0x70] sm:$0xff]
        %v2518 = vld [vmem:[%s468 + $0x78] sm:$0xff]
        %v2519 = vld [vmem:[%s468 + $0x80] sm:$0xff]
        %v2520 = vld [vmem:[%s468 + $0x88] sm:$0xff]
        %v2521 = vld [vmem:[%s468 + $0x90] sm:$0xff]
        %v2522 = vld [vmem:[%s468 + $0x98] sm:$0xff]
        %v2523 = vld [vmem:[%s468 + $0xa0] sm:$0xff]
        %v2524 = vld [vmem:[%s468 + $0xa8] sm:$0xff]
        %v2525 = vld [vmem:[%s468 + $0xb0] sm:$0xff]
        %v2526 = vld [vmem:[%s468 + $0xb8] sm:$0xff]
        %v2527 = vld [vmem:[%s468 + $0xc0] sm:$0xff]
        %v2528 = vld [vmem:[%s468 + $0xc8] sm:$0xff]
        %v2529 = vld [vmem:[%s468 + $0xd0] sm:$0xff]
        %v2530 = vld [vmem:[%s468 + $0xd8] sm:$0xff]
        %v2531 = vld [vmem:[%s468 + $0xe0] sm:$0xff]
        %v2532 = vld [vmem:[%s468 + $0xe8] sm:$0xff]
        %v2533 = vld [vmem:[%s468 + $0xf0] sm:$0xff]
        %v2534 = vld [vmem:[%s468 + $0xf8] sm:$0xff]
        %v2535 = vld [vmem:[%s477] sm:$0xff]
        %v2536 = vld [vmem:[%s477 + $0x8] sm:$0xff]
        %v2537 = vld [vmem:[%s477 + $0x10] sm:$0xff]
        %v2538 = vld [vmem:[%s477 + $0x18] sm:$0xff]
        %v2539 = vld [vmem:[%s477 + $0x20] sm:$0xff]
        %v2540 = vld [vmem:[%s477 + $0x28] sm:$0xff]
        %v2541 = vld [vmem:[%s477 + $0x30] sm:$0xff]
        %v2542 = vld [vmem:[%s477 + $0x38] sm:$0xff]
        %v2543 = vld [vmem:[%s477 + $0x40] sm:$0xff]
        %v2544 = vld [vmem:[%s477 + $0x48] sm:$0xff]
        %v2545 = vld [vmem:[%s477 + $0x50] sm:$0xff]
        %v2546 = vld [vmem:[%s477 + $0x58] sm:$0xff]
        %v2547 = vld [vmem:[%s477 + $0x60] sm:$0xff]
        %v2548 = vld [vmem:[%s477 + $0x68] sm:$0xff]
        %v2549 = vld [vmem:[%s477 + $0x70] sm:$0xff]
        %v2550 = vld [vmem:[%s477 + $0x78] sm:$0xff]
        %v2551 = vld [vmem:[%s477 + $0x80] sm:$0xff]
        %v2552 = vld [vmem:[%s477 + $0x88] sm:$0xff]
        %v2553 = vld [vmem:[%s477 + $0x90] sm:$0xff]
        %v2554 = vld [vmem:[%s477 + $0x98] sm:$0xff]
        %v2555 = vld [vmem:[%s477 + $0xa0] sm:$0xff]
        %v2556 = vld [vmem:[%s477 + $0xa8] sm:$0xff]
        %v2557 = vld [vmem:[%s477 + $0xb0] sm:$0xff]
        %v2558 = vld [vmem:[%s477 + $0xb8] sm:$0xff]
        %v2559 = vld [vmem:[%s477 + $0xc0] sm:$0xff]
        %v2560 = vld [vmem:[%s477 + $0xc8] sm:$0xff]
        %v2561 = vld [vmem:[%s477 + $0xd0] sm:$0xff]
        %v2562 = vld [vmem:[%s477 + $0xd8] sm:$0xff]
        %v2563 = vld [vmem:[%s477 + $0xe0] sm:$0xff]
        %v2564 = vld [vmem:[%s477 + $0xe8] sm:$0xff]
        %v2565 = vld [vmem:[%s477 + $0xf0] sm:$0xff]
        %v2566 = vld [vmem:[%s477 + $0xf8] sm:$0xff]
        %v2567 = vld [vmem:[%s486] sm:$0xff]
        %v2568 = vld [vmem:[%s486 + $0x8] sm:$0xff]
        %v2569 = vld [vmem:[%s486 + $0x10] sm:$0xff]
        %v2570 = vld [vmem:[%s486 + $0x18] sm:$0xff]
        %v2571 = vld [vmem:[%s486 + $0x20] sm:$0xff]
        %v2572 = vld [vmem:[%s486 + $0x28] sm:$0xff]
        %v2573 = vld [vmem:[%s486 + $0x30] sm:$0xff]
        %v2574 = vld [vmem:[%s486 + $0x38] sm:$0xff]
        %v2575 = vld [vmem:[%s486 + $0x40] sm:$0xff]
        %v2576 = vld [vmem:[%s486 + $0x48] sm:$0xff]
        %v2577 = vld [vmem:[%s486 + $0x50] sm:$0xff]
        %v2578 = vld [vmem:[%s486 + $0x58] sm:$0xff]
        %v2579 = vld [vmem:[%s486 + $0x60] sm:$0xff]
        %v2580 = vld [vmem:[%s486 + $0x68] sm:$0xff]
        %v2581 = vld [vmem:[%s486 + $0x70] sm:$0xff]
        %v2582 = vld [vmem:[%s486 + $0x78] sm:$0xff]
        %v2583 = vld [vmem:[%s486 + $0x80] sm:$0xff]
        %v2584 = vld [vmem:[%s486 + $0x88] sm:$0xff]
        %v2585 = vld [vmem:[%s486 + $0x90] sm:$0xff]
        %v2586 = vld [vmem:[%s486 + $0x98] sm:$0xff]
        %v2587 = vld [vmem:[%s486 + $0xa0] sm:$0xff]
        %v2588 = vld [vmem:[%s486 + $0xa8] sm:$0xff]
        %v2589 = vld [vmem:[%s486 + $0xb0] sm:$0xff]
        %v2590 = vld [vmem:[%s486 + $0xb8] sm:$0xff]
        %v2591 = vld [vmem:[%s486 + $0xc0] sm:$0xff]
        %v2592 = vld [vmem:[%s486 + $0xc8] sm:$0xff]
        %v2593 = vld [vmem:[%s486 + $0xd0] sm:$0xff]
        %v2594 = vld [vmem:[%s486 + $0xd8] sm:$0xff]
        %v2595 = vld [vmem:[%s486 + $0xe0] sm:$0xff]
        %v2596 = vld [vmem:[%s486 + $0xe8] sm:$0xff]
        %v2597 = vld [vmem:[%s486 + $0xf0] sm:$0xff]
        %v2598 = vld [vmem:[%s486 + $0xf8] sm:$0xff]
        %v2599 = vmul.f32 %v1959, 0.088388346
        %v2600 = vmul.f32 %v1963, 0.088388346
        %v2601 = vmul.f32 %v1969, 0.088388346
        %v2602 = vmul.f32 %v1973, 0.088388346
        %v2603 = vmul.f32 %v1979, 0.088388346
        %v2604 = vmul.f32 %v1983, 0.088388346
        %v2605 = vmul.f32 %v1989, 0.088388346
        %v2606 = vmul.f32 %v1993, 0.088388346
        %v2607 = vmul.f32 %v1999, 0.088388346
        %v2608 = vmul.f32 %v2003, 0.088388346
        %v2609 = vmul.f32 %v2009, 0.088388346
        %v2610 = vmul.f32 %v2013, 0.088388346
        %v2611 = vmul.f32 %v2019, 0.088388346
        %v2612 = vmul.f32 %v2023, 0.088388346
        %v2613 = vmul.f32 %v2029, 0.088388346
        %v2614 = vmul.f32 %v2033, 0.088388346
        %v2615 = vmul.f32 %v2039, 0.088388346
        %v2616 = vmul.f32 %v2043, 0.088388346
        %v2617 = vmul.f32 %v2049, 0.088388346
        %v2618 = vmul.f32 %v2053, 0.088388346
        %v2619 = vmul.f32 %v2059, 0.088388346
        %v2620 = vmul.f32 %v2063, 0.088388346
        %v2621 = vmul.f32 %v2069, 0.088388346
        %v2622 = vmul.f32 %v2073, 0.088388346
        %v2623 = vmul.f32 %v2079, 0.088388346
        %v2624 = vmul.f32 %v2083, 0.088388346
        %v2625 = vmul.f32 %v2089, 0.088388346
        %v2626 = vmul.f32 %v2093, 0.088388346
        %v2627 = vmul.f32 %v2099, 0.088388346
        %v2628 = vmul.f32 %v2103, 0.088388346
        %v2629 = vmul.f32 %v2109, 0.088388346
        %v2630 = vmul.f32 %v2113, 0.088388346
        %2631 = vrot.lane.b32.xlu0 %v2599, 112
        %v2632 = vpop.permute.xlu0 %2631
        %2633 = vrot.lane.b32.xlu0 %v2600, 112
        %v2634 = vpop.permute.xlu0 %2633
        %2635 = vrot.lane.b32.xlu0 %v2601, 112
        %v2636 = vpop.permute.xlu0 %2635
        %2637 = vrot.lane.b32.xlu0 %v2602, 112
        %v2638 = vpop.permute.xlu0 %2637
        %2639 = vrot.lane.b32.xlu0 %v2603, 112
        %v2640 = vpop.permute.xlu0 %2639
        %2641 = vrot.lane.b32.xlu0 %v2604, 112
        %v2642 = vpop.permute.xlu0 %2641
        %2643 = vrot.lane.b32.xlu0 %v2605, 112
        %v2644 = vpop.permute.xlu0 %2643
        %2645 = vrot.lane.b32.xlu0 %v2606, 112
        %v2646 = vpop.permute.xlu0 %2645
        %2647 = vrot.lane.b32.xlu0 %v2607, 112
        %v2648 = vpop.permute.xlu0 %2647
        %2649 = vrot.lane.b32.xlu0 %v2608, 112
        %v2650 = vpop.permute.xlu0 %2649
        %2651 = vrot.lane.b32.xlu0 %v2609, 112
        %v2652 = vpop.permute.xlu0 %2651
        %2653 = vrot.lane.b32.xlu0 %v2610, 112
        %v2654 = vpop.permute.xlu0 %2653
        %2655 = vrot.lane.b32.xlu0 %v2611, 112
        %v2656 = vpop.permute.xlu0 %2655
        %2657 = vrot.lane.b32.xlu0 %v2612, 112
        %v2658 = vpop.permute.xlu0 %2657
        %2659 = vrot.lane.b32.xlu0 %v2613, 112
        %v2660 = vpop.permute.xlu0 %2659
        %2661 = vrot.lane.b32.xlu0 %v2614, 112
        %v2662 = vpop.permute.xlu0 %2661
        %2663 = vrot.lane.b32.xlu0 %v2615, 112
        %v2664 = vpop.permute.xlu0 %2663
        %2665 = vrot.lane.b32.xlu0 %v2616, 112
        %v2666 = vpop.permute.xlu0 %2665
        %2667 = vrot.lane.b32.xlu0 %v2617, 112
        %v2668 = vpop.permute.xlu0 %2667
        %2669 = vrot.lane.b32.xlu0 %v2618, 112
        %v2670 = vpop.permute.xlu0 %2669
        %2671 = vrot.lane.b32.xlu0 %v2619, 112
        %v2672 = vpop.permute.xlu0 %2671
        %2673 = vrot.lane.b32.xlu0 %v2620, 112
        %v2674 = vpop.permute.xlu0 %2673
        %2675 = vrot.lane.b32.xlu0 %v2621, 112
        %v2676 = vpop.permute.xlu0 %2675
        %2677 = vrot.lane.b32.xlu0 %v2622, 112
        %v2678 = vpop.permute.xlu0 %2677
        %2679 = vrot.lane.b32.xlu0 %v2623, 112
        %v2680 = vpop.permute.xlu0 %2679
        %2681 = vrot.lane.b32.xlu0 %v2624, 112
        %v2682 = vpop.permute.xlu0 %2681
        %2683 = vrot.lane.b32.xlu0 %v2625, 112
        %v2684 = vpop.permute.xlu0 %2683
        %2685 = vrot.lane.b32.xlu0 %v2626, 112
        %v2686 = vpop.permute.xlu0 %2685
        %2687 = vrot.lane.b32.xlu0 %v2627, 112
        %v2688 = vpop.permute.xlu0 %2687
        %2689 = vrot.lane.b32.xlu0 %v2628, 112
        %v2690 = vpop.permute.xlu0 %2689
        %2691 = vrot.lane.b32.xlu0 %v2629, 112
        %v2692 = vpop.permute.xlu0 %2691
        %2693 = vrot.lane.b32.xlu0 %v2630, 112
        %v2694 = vpop.permute.xlu0 %2693
        %2695 = vrot.lane.b32.xlu0 %v2599, 16
        %v2696 = vpop.permute.xlu0 %2695
        %2697 = vrot.lane.b32.xlu0 %v2600, 16
        %v2698 = vpop.permute.xlu0 %2697
        %2699 = vrot.lane.b32.xlu0 %v2601, 16
        %v2700 = vpop.permute.xlu0 %2699
        %2701 = vrot.lane.b32.xlu0 %v2602, 16
        %v2702 = vpop.permute.xlu0 %2701
        %2703 = vrot.lane.b32.xlu0 %v2603, 16
        %v2704 = vpop.permute.xlu0 %2703
        %2705 = vrot.lane.b32.xlu0 %v2604, 16
        %v2706 = vpop.permute.xlu0 %2705
        %2707 = vrot.lane.b32.xlu0 %v2605, 16
        %v2708 = vpop.permute.xlu0 %2707
        %2709 = vrot.lane.b32.xlu0 %v2606, 16
        %v2710 = vpop.permute.xlu0 %2709
        %2711 = vrot.lane.b32.xlu0 %v2607, 16
        %v2712 = vpop.permute.xlu0 %2711
        %2713 = vrot.lane.b32.xlu0 %v2608, 16
        %v2714 = vpop.permute.xlu0 %2713
        %2715 = vrot.lane.b32.xlu0 %v2609, 16
        %v2716 = vpop.permute.xlu0 %2715
        %2717 = vrot.lane.b32.xlu0 %v2610, 16
        %v2718 = vpop.permute.xlu0 %2717
        %2719 = vrot.lane.b32.xlu0 %v2611, 16
        %v2720 = vpop.permute.xlu0 %2719
        %2721 = vrot.lane.b32.xlu0 %v2612, 16
        %v2722 = vpop.permute.xlu0 %2721
        %2723 = vrot.lane.b32.xlu0 %v2613, 16
        %v2724 = vpop.permute.xlu0 %2723
        %2725 = vrot.lane.b32.xlu0 %v2614, 16
        %v2726 = vpop.permute.xlu0 %2725
        %2727 = vrot.lane.b32.xlu0 %v2615, 16
        %v2728 = vpop.permute.xlu0 %2727
        %2729 = vrot.lane.b32.xlu0 %v2616, 16
        %v2730 = vpop.permute.xlu0 %2729
        %2731 = vrot.lane.b32.xlu0 %v2617, 16
        %v2732 = vpop.permute.xlu0 %2731
        %2733 = vrot.lane.b32.xlu0 %v2618, 16
        %v2734 = vpop.permute.xlu0 %2733
        %2735 = vrot.lane.b32.xlu0 %v2619, 16
        %v2736 = vpop.permute.xlu0 %2735
        %2737 = vrot.lane.b32.xlu0 %v2620, 16
        %v2738 = vpop.permute.xlu0 %2737
        %2739 = vrot.lane.b32.xlu0 %v2621, 16
        %v2740 = vpop.permute.xlu0 %2739
        %2741 = vrot.lane.b32.xlu0 %v2622, 16
        %v2742 = vpop.permute.xlu0 %2741
        %2743 = vrot.lane.b32.xlu0 %v2623, 16
        %v2744 = vpop.permute.xlu0 %2743
        %2745 = vrot.lane.b32.xlu0 %v2624, 16
        %v2746 = vpop.permute.xlu0 %2745
        %2747 = vrot.lane.b32.xlu0 %v2625, 16
        %v2748 = vpop.permute.xlu0 %2747
        %2749 = vrot.lane.b32.xlu0 %v2626, 16
        %v2750 = vpop.permute.xlu0 %2749
        %2751 = vrot.lane.b32.xlu0 %v2627, 16
        %v2752 = vpop.permute.xlu0 %2751
        %2753 = vrot.lane.b32.xlu0 %v2628, 16
        %v2754 = vpop.permute.xlu0 %2753
        %2755 = vrot.lane.b32.xlu0 %v2629, 16
        %v2756 = vpop.permute.xlu0 %2755
        %2757 = vrot.lane.b32.xlu0 %v2630, 16
        %v2758 = vpop.permute.xlu0 %2757
        %v2759 = vmul.f32 %v2599, %v2503
        %v2760 = vmul.f32 %v2600, %v2504
        %v2761 = vmul.f32 %v2601, %v2505
        %v2762 = vmul.f32 %v2602, %v2506
        %v2763 = vmul.f32 %v2603, %v2507
        %v2764 = vmul.f32 %v2604, %v2508
        %v2765 = vmul.f32 %v2605, %v2509
        %v2766 = vmul.f32 %v2606, %v2510
        %v2767 = vmul.f32 %v2607, %v2511
        %v2768 = vmul.f32 %v2608, %v2512
        %v2769 = vmul.f32 %v2609, %v2513
        %v2770 = vmul.f32 %v2610, %v2514
        %v2771 = vmul.f32 %v2611, %v2515
        %v2772 = vmul.f32 %v2612, %v2516
        %v2773 = vmul.f32 %v2613, %v2517
        %v2774 = vmul.f32 %v2614, %v2518
        %v2775 = vmul.f32 %v2615, %v2519
        %v2776 = vmul.f32 %v2616, %v2520
        %v2777 = vmul.f32 %v2617, %v2521
        %v2778 = vmul.f32 %v2618, %v2522
        %v2779 = vmul.f32 %v2619, %v2523
        %v2780 = vmul.f32 %v2620, %v2524
        %v2781 = vmul.f32 %v2621, %v2525
        %v2782 = vmul.f32 %v2622, %v2526
        %v2783 = vmul.f32 %v2623, %v2527
        %v2784 = vmul.f32 %v2624, %v2528
        %v2785 = vmul.f32 %v2625, %v2529
        %v2786 = vmul.f32 %v2626, %v2530
        %v2787 = vmul.f32 %v2627, %v2531
        %v2788 = vmul.f32 %v2628, %v2532
        %v2789 = vmul.f32 %v2629, %v2533
        %v2790 = vmul.f32 %v2630, %v2534
        %v2791 = vmul.f32 %v2632, %v2535
        %v2792 = vmul.f32 %v2634, %v2536
        %v2793 = vmul.f32 %v2636, %v2537
        %v2794 = vmul.f32 %v2638, %v2538
        %v2795 = vmul.f32 %v2640, %v2539
        %v2796 = vmul.f32 %v2642, %v2540
        %v2797 = vmul.f32 %v2644, %v2541
        %v2798 = vmul.f32 %v2646, %v2542
        %v2799 = vmul.f32 %v2648, %v2543
        %v2800 = vmul.f32 %v2650, %v2544
        %v2801 = vmul.f32 %v2652, %v2545
        %v2802 = vmul.f32 %v2654, %v2546
        %v2803 = vmul.f32 %v2656, %v2547
        %v2804 = vmul.f32 %v2658, %v2548
        %v2805 = vmul.f32 %v2660, %v2549
        %v2806 = vmul.f32 %v2662, %v2550
        %v2807 = vmul.f32 %v2664, %v2551
        %v2808 = vmul.f32 %v2666, %v2552
        %v2809 = vmul.f32 %v2668, %v2553
        %v2810 = vmul.f32 %v2670, %v2554
        %v2811 = vmul.f32 %v2672, %v2555
        %v2812 = vmul.f32 %v2674, %v2556
        %v2813 = vmul.f32 %v2676, %v2557
        %v2814 = vmul.f32 %v2678, %v2558
        %v2815 = vmul.f32 %v2680, %v2559
        %v2816 = vmul.f32 %v2682, %v2560
        %v2817 = vmul.f32 %v2684, %v2561
        %v2818 = vmul.f32 %v2686, %v2562
        %v2819 = vmul.f32 %v2688, %v2563
        %v2820 = vmul.f32 %v2690, %v2564
        %v2821 = vmul.f32 %v2692, %v2565
        %v2822 = vmul.f32 %v2694, %v2566
        %v2823 = vadd.f32 %v2759, %v2791
        %v2824 = vadd.f32 %v2760, %v2792
        %v2825 = vadd.f32 %v2761, %v2793
        %v2826 = vadd.f32 %v2762, %v2794
        %v2827 = vadd.f32 %v2763, %v2795
        %v2828 = vadd.f32 %v2764, %v2796
        %v2829 = vadd.f32 %v2765, %v2797
        %v2830 = vadd.f32 %v2766, %v2798
        %v2831 = vadd.f32 %v2767, %v2799
        %v2832 = vadd.f32 %v2768, %v2800
        %v2833 = vadd.f32 %v2769, %v2801
        %v2834 = vadd.f32 %v2770, %v2802
        %v2835 = vadd.f32 %v2771, %v2803
        %v2836 = vadd.f32 %v2772, %v2804
        %v2837 = vadd.f32 %v2773, %v2805
        %v2838 = vadd.f32 %v2774, %v2806
        %v2839 = vadd.f32 %v2775, %v2807
        %v2840 = vadd.f32 %v2776, %v2808
        %v2841 = vadd.f32 %v2777, %v2809
        %v2842 = vadd.f32 %v2778, %v2810
        %v2843 = vadd.f32 %v2779, %v2811
        %v2844 = vadd.f32 %v2780, %v2812
        %v2845 = vadd.f32 %v2781, %v2813
        %v2846 = vadd.f32 %v2782, %v2814
        %v2847 = vadd.f32 %v2783, %v2815
        %v2848 = vadd.f32 %v2784, %v2816
        %v2849 = vadd.f32 %v2785, %v2817
        %v2850 = vadd.f32 %v2786, %v2818
        %v2851 = vadd.f32 %v2787, %v2819
        %v2852 = vadd.f32 %v2788, %v2820
        %v2853 = vadd.f32 %v2789, %v2821
        %v2854 = vadd.f32 %v2790, %v2822
        %v2855 = vmul.f32 %v2696, %v2567
        %v2856 = vmul.f32 %v2698, %v2568
        %v2857 = vmul.f32 %v2700, %v2569
        %v2858 = vmul.f32 %v2702, %v2570
        %v2859 = vmul.f32 %v2704, %v2571
        %v2860 = vmul.f32 %v2706, %v2572
        %v2861 = vmul.f32 %v2708, %v2573
        %v2862 = vmul.f32 %v2710, %v2574
        %v2863 = vmul.f32 %v2712, %v2575
        %v2864 = vmul.f32 %v2714, %v2576
        %v2865 = vmul.f32 %v2716, %v2577
        %v2866 = vmul.f32 %v2718, %v2578
        %v2867 = vmul.f32 %v2720, %v2579
        %v2868 = vmul.f32 %v2722, %v2580
        %v2869 = vmul.f32 %v2724, %v2581
        %v2870 = vmul.f32 %v2726, %v2582
        %v2871 = vmul.f32 %v2728, %v2583
        %v2872 = vmul.f32 %v2730, %v2584
        %v2873 = vmul.f32 %v2732, %v2585
        %v2874 = vmul.f32 %v2734, %v2586
        %v2875 = vmul.f32 %v2736, %v2587
        %v2876 = vmul.f32 %v2738, %v2588
        %v2877 = vmul.f32 %v2740, %v2589
        %v2878 = vmul.f32 %v2742, %v2590
        %v2879 = vmul.f32 %v2744, %v2591
        %v2880 = vmul.f32 %v2746, %v2592
        %v2881 = vmul.f32 %v2748, %v2593
        %v2882 = vmul.f32 %v2750, %v2594
        %v2883 = vmul.f32 %v2752, %v2595
        %v2884 = vmul.f32 %v2754, %v2596
        %v2885 = vmul.f32 %v2756, %v2597
        %v2886 = vmul.f32 %v2758, %v2598
        %v2887 = vadd.f32 %v2823, %v2855
        %v2888 = vadd.f32 %v2824, %v2856
        %v2889 = vadd.f32 %v2825, %v2857
        %v2890 = vadd.f32 %v2826, %v2858
        %v2891 = vadd.f32 %v2827, %v2859
        %v2892 = vadd.f32 %v2828, %v2860
        %v2893 = vadd.f32 %v2829, %v2861
        %v2894 = vadd.f32 %v2830, %v2862
        %v2895 = vadd.f32 %v2831, %v2863
        %v2896 = vadd.f32 %v2832, %v2864
        %v2897 = vadd.f32 %v2833, %v2865
        %v2898 = vadd.f32 %v2834, %v2866
        %v2899 = vadd.f32 %v2835, %v2867
        %v2900 = vadd.f32 %v2836, %v2868
        %v2901 = vadd.f32 %v2837, %v2869
        %v2902 = vadd.f32 %v2838, %v2870
        %v2903 = vadd.f32 %v2839, %v2871
        %v2904 = vadd.f32 %v2840, %v2872
        %v2905 = vadd.f32 %v2841, %v2873
        %v2906 = vadd.f32 %v2842, %v2874
        %v2907 = vadd.f32 %v2843, %v2875
        %v2908 = vadd.f32 %v2844, %v2876
        %v2909 = vadd.f32 %v2845, %v2877
        %v2910 = vadd.f32 %v2846, %v2878
        %v2911 = vadd.f32 %v2847, %v2879
        %v2912 = vadd.f32 %v2848, %v2880
        %v2913 = vadd.f32 %v2849, %v2881
        %v2914 = vadd.f32 %v2850, %v2882
        %v2915 = vadd.f32 %v2851, %v2883
        %v2916 = vadd.f32 %v2852, %v2884
        %v2917 = vadd.f32 %v2853, %v2885
        %v2918 = vadd.f32 %v2854, %v2886
        %v2919 = vpack.c.bf16 %v2888, %v2887
        %v2920 = vpack.c.bf16 %v2890, %v2889
        %v2921 = vpack.c.bf16 %v2892, %v2891
        %v2922 = vpack.c.bf16 %v2894, %v2893
        %v2923 = vpack.c.bf16 %v2896, %v2895
        %v2924 = vpack.c.bf16 %v2898, %v2897
        %v2925 = vpack.c.bf16 %v2900, %v2899
        %v2926 = vpack.c.bf16 %v2902, %v2901
        %v2927 = vpack.c.bf16 %v2904, %v2903
        %v2928 = vpack.c.bf16 %v2906, %v2905
        %v2929 = vpack.c.bf16 %v2908, %v2907
        %v2930 = vpack.c.bf16 %v2910, %v2909
        %v2931 = vpack.c.bf16 %v2912, %v2911
        %v2932 = vpack.c.bf16 %v2914, %v2913
        %v2933 = vpack.c.bf16 %v2916, %v2915
        %v2934 = vpack.c.bf16 %v2918, %v2917
        %v2951 = vunpack.c.l.b16 %v2919
        %v2952 = vunpack.c.h.b16 %v2919
        %v2953 = vunpack.c.l.b16 %v2920
        %v2954 = vunpack.c.h.b16 %v2920
        %v2955 = vunpack.c.l.b16 %v2921
        %v2956 = vunpack.c.h.b16 %v2921
        %v2957 = vunpack.c.l.b16 %v2922
        %v2958 = vunpack.c.h.b16 %v2922
        %v2959 = vunpack.c.l.b16 %v2923
        %v2960 = vunpack.c.h.b16 %v2923
        %v2961 = vunpack.c.l.b16 %v2924
        %v2962 = vunpack.c.h.b16 %v2924
        %v2963 = vunpack.c.l.b16 %v2925
        %v2964 = vunpack.c.h.b16 %v2925
        %v2965 = vunpack.c.l.b16 %v2926
        %v2966 = vunpack.c.h.b16 %v2926
        %v2967 = vunpack.c.l.b16 %v2927
        %v2968 = vunpack.c.h.b16 %v2927
        %v2969 = vunpack.c.l.b16 %v2928
        %v2970 = vunpack.c.h.b16 %v2928
        %v2971 = vunpack.c.l.b16 %v2929
        %v2972 = vunpack.c.h.b16 %v2929
        %v2973 = vunpack.c.l.b16 %v2930
        %v2974 = vunpack.c.h.b16 %v2930
        %v2975 = vunpack.c.l.b16 %v2931
        %v2976 = vunpack.c.h.b16 %v2931
        %v2977 = vunpack.c.l.b16 %v2932
        %v2978 = vunpack.c.h.b16 %v2932
        %v2979 = vunpack.c.l.b16 %v2933
        %v2980 = vunpack.c.h.b16 %v2933
        %v2981 = vunpack.c.l.b16 %v2934
        %v2982 = vunpack.c.h.b16 %v2934
        %v2983 = vpack.c.b16 %v2951, %v2951
        %v2984 = vpack.c.b16 %v2952, %v2952
        %v2985 = vpack.c.b16 %v2953, %v2953
        %v2986 = vpack.c.b16 %v2954, %v2954
        %v2987 = vpack.c.b16 %v2955, %v2955
        %v2988 = vpack.c.b16 %v2956, %v2956
        %v2989 = vpack.c.b16 %v2957, %v2957
        %v2990 = vpack.c.b16 %v2958, %v2958
        %v2991 = vpack.c.b16 %v2959, %v2959
        %v2992 = vpack.c.b16 %v2960, %v2960
        %v2993 = vpack.c.b16 %v2961, %v2961
        %v2994 = vpack.c.b16 %v2962, %v2962
        %v2995 = vpack.c.b16 %v2963, %v2963
        %v2996 = vpack.c.b16 %v2964, %v2964
        %v2997 = vpack.c.b16 %v2965, %v2965
        %v2998 = vpack.c.b16 %v2966, %v2966
        %v2999 = vpack.c.b16 %v2967, %v2967
        %v3000 = vpack.c.b16 %v2968, %v2968
        %v3001 = vpack.c.b16 %v2969, %v2969
        %v3002 = vpack.c.b16 %v2970, %v2970
        %v3003 = vpack.c.b16 %v2971, %v2971
        %v3004 = vpack.c.b16 %v2972, %v2972
        %v3005 = vpack.c.b16 %v2973, %v2973
        %v3006 = vpack.c.b16 %v2974, %v2974
        %v3007 = vpack.c.b16 %v2975, %v2975
        %v3008 = vpack.c.b16 %v2976, %v2976
        %v3009 = vpack.c.b16 %v2977, %v2977
        %v3010 = vpack.c.b16 %v2978, %v2978
        %v3011 = vpack.c.b16 %v2979, %v2979
        %v3012 = vpack.c.b16 %v2980, %v2980
        %v3013 = vpack.c.b16 %v2981, %v2981
        %v3014 = vpack.c.b16 %v2982, %v2982
        %3047 = vst [vmem:[%s533] sm:$0xf] %v2983
        %3048 = vst [vmem:[%s533 + $0x4] sm:$0xf] %v2984
        %3049 = vst [vmem:[%s533 + $0x8] sm:$0xf] %v2985
        %3050 = vst [vmem:[%s533 + $0xc] sm:$0xf] %v2986
        %3051 = vst [vmem:[%s533 + $0x10] sm:$0xf] %v2987
        %3052 = vst [vmem:[%s533 + $0x14] sm:$0xf] %v2988
        %3053 = vst [vmem:[%s533 + $0x18] sm:$0xf] %v2989
        %3054 = vst [vmem:[%s533 + $0x1c] sm:$0xf] %v2990
        %3055 = vst [vmem:[%s533 + $0x20] sm:$0xf] %v2991
        %3056 = vst [vmem:[%s533 + $0x24] sm:$0xf] %v2992
        %3057 = vst [vmem:[%s533 + $0x28] sm:$0xf] %v2993
        %3058 = vst [vmem:[%s533 + $0x2c] sm:$0xf] %v2994
        %3059 = vst [vmem:[%s533 + $0x30] sm:$0xf] %v2995
        %3060 = vst [vmem:[%s533 + $0x34] sm:$0xf] %v2996
        %3061 = vst [vmem:[%s533 + $0x38] sm:$0xf] %v2997
        %3062 = vst [vmem:[%s533 + $0x3c] sm:$0xf] %v2998
        %3063 = vst [vmem:[%s533 + $0x40] sm:$0xf] %v2999
        %3064 = vst [vmem:[%s533 + $0x44] sm:$0xf] %v3000
        %3065 = vst [vmem:[%s533 + $0x48] sm:$0xf] %v3001
        %3066 = vst [vmem:[%s533 + $0x4c] sm:$0xf] %v3002
        %3067 = vst [vmem:[%s533 + $0x50] sm:$0xf] %v3003
        %3068 = vst [vmem:[%s533 + $0x54] sm:$0xf] %v3004
        %3069 = vst [vmem:[%s533 + $0x58] sm:$0xf] %v3005
        %3070 = vst [vmem:[%s533 + $0x5c] sm:$0xf] %v3006
        %3071 = vst [vmem:[%s533 + $0x60] sm:$0xf] %v3007
        %3072 = vst [vmem:[%s533 + $0x64] sm:$0xf] %v3008
        %3073 = vst [vmem:[%s533 + $0x68] sm:$0xf] %v3009
        %3074 = vst [vmem:[%s533 + $0x6c] sm:$0xf] %v3010
        %3075 = vst [vmem:[%s533 + $0x70] sm:$0xf] %v3011
        %3076 = vst [vmem:[%s533 + $0x74] sm:$0xf] %v3012
        %3077 = vst [vmem:[%s533 + $0x78] sm:$0xf] %v3013
        %3078 = vst [vmem:[%s533 + $0x7c] sm:$0xf] %v3014
        %3079 = vrot.lane.b32.xlu0 %v2152, 112
        %v3080 = vpop.permute.xlu0 %3079
        %3081 = vrot.lane.b32.xlu0 %v2156, 112
        %v3082 = vpop.permute.xlu0 %3081
        %3083 = vrot.lane.b32.xlu0 %v2162, 112
        %v3084 = vpop.permute.xlu0 %3083
        %3085 = vrot.lane.b32.xlu0 %v2166, 112
        %v3086 = vpop.permute.xlu0 %3085
        %3087 = vrot.lane.b32.xlu0 %v2172, 112
        %v3088 = vpop.permute.xlu0 %3087
        %3089 = vrot.lane.b32.xlu0 %v2176, 112
        %v3090 = vpop.permute.xlu0 %3089
        %3091 = vrot.lane.b32.xlu0 %v2182, 112
        %v3092 = vpop.permute.xlu0 %3091
        %3093 = vrot.lane.b32.xlu0 %v2186, 112
        %v3094 = vpop.permute.xlu0 %3093
        %3095 = vrot.lane.b32.xlu0 %v2192, 112
        %v3096 = vpop.permute.xlu0 %3095
        %3097 = vrot.lane.b32.xlu0 %v2196, 112
        %v3098 = vpop.permute.xlu0 %3097
        %3099 = vrot.lane.b32.xlu0 %v2202, 112
        %v3100 = vpop.permute.xlu0 %3099
        %3101 = vrot.lane.b32.xlu0 %v2206, 112
        %v3102 = vpop.permute.xlu0 %3101
        %3103 = vrot.lane.b32.xlu0 %v2212, 112
        %v3104 = vpop.permute.xlu0 %3103
        %3105 = vrot.lane.b32.xlu0 %v2216, 112
        %v3106 = vpop.permute.xlu0 %3105
        %3107 = vrot.lane.b32.xlu0 %v2222, 112
        %v3108 = vpop.permute.xlu0 %3107
        %3109 = vrot.lane.b32.xlu0 %v2226, 112
        %v3110 = vpop.permute.xlu0 %3109
        %3111 = vrot.lane.b32.xlu0 %v2232, 112
        %v3112 = vpop.permute.xlu0 %3111
        %3113 = vrot.lane.b32.xlu0 %v2236, 112
        %v3114 = vpop.permute.xlu0 %3113
        %3115 = vrot.lane.b32.xlu0 %v2242, 112
        %v3116 = vpop.permute.xlu0 %3115
        %3117 = vrot.lane.b32.xlu0 %v2246, 112
        %v3118 = vpop.permute.xlu0 %3117
        %3119 = vrot.lane.b32.xlu0 %v2252, 112
        %v3120 = vpop.permute.xlu0 %3119
        %3121 = vrot.lane.b32.xlu0 %v2256, 112
        %v3122 = vpop.permute.xlu0 %3121
        %3123 = vrot.lane.b32.xlu0 %v2262, 112
        %v3124 = vpop.permute.xlu0 %3123
        %3125 = vrot.lane.b32.xlu0 %v2266, 112
        %v3126 = vpop.permute.xlu0 %3125
        %3127 = vrot.lane.b32.xlu0 %v2272, 112
        %v3128 = vpop.permute.xlu0 %3127
        %3129 = vrot.lane.b32.xlu0 %v2276, 112
        %v3130 = vpop.permute.xlu0 %3129
        %3131 = vrot.lane.b32.xlu0 %v2282, 112
        %v3132 = vpop.permute.xlu0 %3131
        %3133 = vrot.lane.b32.xlu0 %v2286, 112
        %v3134 = vpop.permute.xlu0 %3133
        %3135 = vrot.lane.b32.xlu0 %v2292, 112
        %v3136 = vpop.permute.xlu0 %3135
        %3137 = vrot.lane.b32.xlu0 %v2296, 112
        %v3138 = vpop.permute.xlu0 %3137
        %3139 = vrot.lane.b32.xlu0 %v2302, 112
        %v3140 = vpop.permute.xlu0 %3139
        %3141 = vrot.lane.b32.xlu0 %v2306, 112
        %v3142 = vpop.permute.xlu0 %3141
        %3143 = vrot.lane.b32.xlu0 %v2152, 16
        %v3144 = vpop.permute.xlu0 %3143
        %3145 = vrot.lane.b32.xlu0 %v2156, 16
        %v3146 = vpop.permute.xlu0 %3145
        %3147 = vrot.lane.b32.xlu0 %v2162, 16
        %v3148 = vpop.permute.xlu0 %3147
        %3149 = vrot.lane.b32.xlu0 %v2166, 16
        %v3150 = vpop.permute.xlu0 %3149
        %3151 = vrot.lane.b32.xlu0 %v2172, 16
        %v3152 = vpop.permute.xlu0 %3151
        %3153 = vrot.lane.b32.xlu0 %v2176, 16
        %v3154 = vpop.permute.xlu0 %3153
        %3155 = vrot.lane.b32.xlu0 %v2182, 16
        %v3156 = vpop.permute.xlu0 %3155
        %3157 = vrot.lane.b32.xlu0 %v2186, 16
        %v3158 = vpop.permute.xlu0 %3157
        %3159 = vrot.lane.b32.xlu0 %v2192, 16
        %v3160 = vpop.permute.xlu0 %3159
        %3161 = vrot.lane.b32.xlu0 %v2196, 16
        %v3162 = vpop.permute.xlu0 %3161
        %3163 = vrot.lane.b32.xlu0 %v2202, 16
        %v3164 = vpop.permute.xlu0 %3163
        %3165 = vrot.lane.b32.xlu0 %v2206, 16
        %v3166 = vpop.permute.xlu0 %3165
        %3167 = vrot.lane.b32.xlu0 %v2212, 16
        %v3168 = vpop.permute.xlu0 %3167
        %3169 = vrot.lane.b32.xlu0 %v2216, 16
        %v3170 = vpop.permute.xlu0 %3169
        %3171 = vrot.lane.b32.xlu0 %v2222, 16
        %v3172 = vpop.permute.xlu0 %3171
        %3173 = vrot.lane.b32.xlu0 %v2226, 16
        %v3174 = vpop.permute.xlu0 %3173
        %3175 = vrot.lane.b32.xlu0 %v2232, 16
        %v3176 = vpop.permute.xlu0 %3175
        %3177 = vrot.lane.b32.xlu0 %v2236, 16
        %v3178 = vpop.permute.xlu0 %3177
        %3179 = vrot.lane.b32.xlu0 %v2242, 16
        %v3180 = vpop.permute.xlu0 %3179
        %3181 = vrot.lane.b32.xlu0 %v2246, 16
        %v3182 = vpop.permute.xlu0 %3181
        %3183 = vrot.lane.b32.xlu0 %v2252, 16
        %v3184 = vpop.permute.xlu0 %3183
        %3185 = vrot.lane.b32.xlu0 %v2256, 16
        %v3186 = vpop.permute.xlu0 %3185
        %3187 = vrot.lane.b32.xlu0 %v2262, 16
        %v3188 = vpop.permute.xlu0 %3187
        %3189 = vrot.lane.b32.xlu0 %v2266, 16
        %v3190 = vpop.permute.xlu0 %3189
        %3191 = vrot.lane.b32.xlu0 %v2272, 16
        %v3192 = vpop.permute.xlu0 %3191
        %3193 = vrot.lane.b32.xlu0 %v2276, 16
        %v3194 = vpop.permute.xlu0 %3193
        %3195 = vrot.lane.b32.xlu0 %v2282, 16
        %v3196 = vpop.permute.xlu0 %3195
        %3197 = vrot.lane.b32.xlu0 %v2286, 16
        %v3198 = vpop.permute.xlu0 %3197
        %3199 = vrot.lane.b32.xlu0 %v2292, 16
        %v3200 = vpop.permute.xlu0 %3199
        %3201 = vrot.lane.b32.xlu0 %v2296, 16
        %v3202 = vpop.permute.xlu0 %3201
        %3203 = vrot.lane.b32.xlu0 %v2302, 16
        %v3204 = vpop.permute.xlu0 %3203
        %3205 = vrot.lane.b32.xlu0 %v2306, 16
        %v3206 = vpop.permute.xlu0 %3205
        %v3207 = vmul.f32 %v2152, %v2503
        %v3208 = vmul.f32 %v2156, %v2504
        %v3209 = vmul.f32 %v2162, %v2505
        %v3210 = vmul.f32 %v2166, %v2506
        %v3211 = vmul.f32 %v2172, %v2507
        %v3212 = vmul.f32 %v2176, %v2508
        %v3213 = vmul.f32 %v2182, %v2509
        %v3214 = vmul.f32 %v2186, %v2510
        %v3215 = vmul.f32 %v2192, %v2511
        %v3216 = vmul.f32 %v2196, %v2512
        %v3217 = vmul.f32 %v2202, %v2513
        %v3218 = vmul.f32 %v2206, %v2514
        %v3219 = vmul.f32 %v2212, %v2515
        %v3220 = vmul.f32 %v2216, %v2516
        %v3221 = vmul.f32 %v2222, %v2517
        %v3222 = vmul.f32 %v2226, %v2518
        %v3223 = vmul.f32 %v2232, %v2519
        %v3224 = vmul.f32 %v2236, %v2520
        %v3225 = vmul.f32 %v2242, %v2521
        %v3226 = vmul.f32 %v2246, %v2522
        %v3227 = vmul.f32 %v2252, %v2523
        %v3228 = vmul.f32 %v2256, %v2524
        %v3229 = vmul.f32 %v2262, %v2525
        %v3230 = vmul.f32 %v2266, %v2526
        %v3231 = vmul.f32 %v2272, %v2527
        %v3232 = vmul.f32 %v2276, %v2528
        %v3233 = vmul.f32 %v2282, %v2529
        %v3234 = vmul.f32 %v2286, %v2530
        %v3235 = vmul.f32 %v2292, %v2531
        %v3236 = vmul.f32 %v2296, %v2532
        %v3237 = vmul.f32 %v2302, %v2533
        %v3238 = vmul.f32 %v2306, %v2534
        %v3239 = vmul.f32 %v3080, %v2535
        %v3240 = vmul.f32 %v3082, %v2536
        %v3241 = vmul.f32 %v3084, %v2537
        %v3242 = vmul.f32 %v3086, %v2538
        %v3243 = vmul.f32 %v3088, %v2539
        %v3244 = vmul.f32 %v3090, %v2540
        %v3245 = vmul.f32 %v3092, %v2541
        %v3246 = vmul.f32 %v3094, %v2542
        %v3247 = vmul.f32 %v3096, %v2543
        %v3248 = vmul.f32 %v3098, %v2544
        %v3249 = vmul.f32 %v3100, %v2545
        %v3250 = vmul.f32 %v3102, %v2546
        %v3251 = vmul.f32 %v3104, %v2547
        %v3252 = vmul.f32 %v3106, %v2548
        %v3253 = vmul.f32 %v3108, %v2549
        %v3254 = vmul.f32 %v3110, %v2550
        %v3255 = vmul.f32 %v3112, %v2551
        %v3256 = vmul.f32 %v3114, %v2552
        %v3257 = vmul.f32 %v3116, %v2553
        %v3258 = vmul.f32 %v3118, %v2554
        %v3259 = vmul.f32 %v3120, %v2555
        %v3260 = vmul.f32 %v3122, %v2556
        %v3261 = vmul.f32 %v3124, %v2557
        %v3262 = vmul.f32 %v3126, %v2558
        %v3263 = vmul.f32 %v3128, %v2559
        %v3264 = vmul.f32 %v3130, %v2560
        %v3265 = vmul.f32 %v3132, %v2561
        %v3266 = vmul.f32 %v3134, %v2562
        %v3267 = vmul.f32 %v3136, %v2563
        %v3268 = vmul.f32 %v3138, %v2564
        %v3269 = vmul.f32 %v3140, %v2565
        %v3270 = vmul.f32 %v3142, %v2566
        %v3271 = vadd.f32 %v3207, %v3239
        %v3272 = vadd.f32 %v3208, %v3240
        %v3273 = vadd.f32 %v3209, %v3241
        %v3274 = vadd.f32 %v3210, %v3242
        %v3275 = vadd.f32 %v3211, %v3243
        %v3276 = vadd.f32 %v3212, %v3244
        %v3277 = vadd.f32 %v3213, %v3245
        %v3278 = vadd.f32 %v3214, %v3246
        %v3279 = vadd.f32 %v3215, %v3247
        %v3280 = vadd.f32 %v3216, %v3248
        %v3281 = vadd.f32 %v3217, %v3249
        %v3282 = vadd.f32 %v3218, %v3250
        %v3283 = vadd.f32 %v3219, %v3251
        %v3284 = vadd.f32 %v3220, %v3252
        %v3285 = vadd.f32 %v3221, %v3253
        %v3286 = vadd.f32 %v3222, %v3254
        %v3287 = vadd.f32 %v3223, %v3255
        %v3288 = vadd.f32 %v3224, %v3256
        %v3289 = vadd.f32 %v3225, %v3257
        %v3290 = vadd.f32 %v3226, %v3258
        %v3291 = vadd.f32 %v3227, %v3259
        %v3292 = vadd.f32 %v3228, %v3260
        %v3293 = vadd.f32 %v3229, %v3261
        %v3294 = vadd.f32 %v3230, %v3262
        %v3295 = vadd.f32 %v3231, %v3263
        %v3296 = vadd.f32 %v3232, %v3264
        %v3297 = vadd.f32 %v3233, %v3265
        %v3298 = vadd.f32 %v3234, %v3266
        %v3299 = vadd.f32 %v3235, %v3267
        %v3300 = vadd.f32 %v3236, %v3268
        %v3301 = vadd.f32 %v3237, %v3269
        %v3302 = vadd.f32 %v3238, %v3270
        %v3303 = vmul.f32 %v3144, %v2567
        %v3304 = vmul.f32 %v3146, %v2568
        %v3305 = vmul.f32 %v3148, %v2569
        %v3306 = vmul.f32 %v3150, %v2570
        %v3307 = vmul.f32 %v3152, %v2571
        %v3308 = vmul.f32 %v3154, %v2572
        %v3309 = vmul.f32 %v3156, %v2573
        %v3310 = vmul.f32 %v3158, %v2574
        %v3311 = vmul.f32 %v3160, %v2575
        %v3312 = vmul.f32 %v3162, %v2576
        %v3313 = vmul.f32 %v3164, %v2577
        %v3314 = vmul.f32 %v3166, %v2578
        %v3315 = vmul.f32 %v3168, %v2579
        %v3316 = vmul.f32 %v3170, %v2580
        %v3317 = vmul.f32 %v3172, %v2581
        %v3318 = vmul.f32 %v3174, %v2582
        %v3319 = vmul.f32 %v3176, %v2583
        %v3320 = vmul.f32 %v3178, %v2584
        %v3321 = vmul.f32 %v3180, %v2585
        %v3322 = vmul.f32 %v3182, %v2586
        %v3323 = vmul.f32 %v3184, %v2587
        %v3324 = vmul.f32 %v3186, %v2588
        %v3325 = vmul.f32 %v3188, %v2589
        %v3326 = vmul.f32 %v3190, %v2590
        %v3327 = vmul.f32 %v3192, %v2591
        %v3328 = vmul.f32 %v3194, %v2592
        %v3329 = vmul.f32 %v3196, %v2593
        %v3330 = vmul.f32 %v3198, %v2594
        %v3331 = vmul.f32 %v3200, %v2595
        %v3332 = vmul.f32 %v3202, %v2596
        %v3333 = vmul.f32 %v3204, %v2597
        %v3334 = vmul.f32 %v3206, %v2598
        %v3335 = vadd.f32 %v3271, %v3303
        %v3336 = vadd.f32 %v3272, %v3304
        %v3337 = vadd.f32 %v3273, %v3305
        %v3338 = vadd.f32 %v3274, %v3306
        %v3339 = vadd.f32 %v3275, %v3307
        %v3340 = vadd.f32 %v3276, %v3308
        %v3341 = vadd.f32 %v3277, %v3309
        %v3342 = vadd.f32 %v3278, %v3310
        %v3343 = vadd.f32 %v3279, %v3311
        %v3344 = vadd.f32 %v3280, %v3312
        %v3345 = vadd.f32 %v3281, %v3313
        %v3346 = vadd.f32 %v3282, %v3314
        %v3347 = vadd.f32 %v3283, %v3315
        %v3348 = vadd.f32 %v3284, %v3316
        %v3349 = vadd.f32 %v3285, %v3317
        %v3350 = vadd.f32 %v3286, %v3318
        %v3351 = vadd.f32 %v3287, %v3319
        %v3352 = vadd.f32 %v3288, %v3320
        %v3353 = vadd.f32 %v3289, %v3321
        %v3354 = vadd.f32 %v3290, %v3322
        %v3355 = vadd.f32 %v3291, %v3323
        %v3356 = vadd.f32 %v3292, %v3324
        %v3357 = vadd.f32 %v3293, %v3325
        %v3358 = vadd.f32 %v3294, %v3326
        %v3359 = vadd.f32 %v3295, %v3327
        %v3360 = vadd.f32 %v3296, %v3328
        %v3361 = vadd.f32 %v3297, %v3329
        %v3362 = vadd.f32 %v3298, %v3330
        %v3363 = vadd.f32 %v3299, %v3331
        %v3364 = vadd.f32 %v3300, %v3332
        %v3365 = vadd.f32 %v3301, %v3333
        %v3366 = vadd.f32 %v3302, %v3334
        %v3367 = vpack.c.bf16 %v3336, %v3335
        %v3368 = vpack.c.bf16 %v3338, %v3337
        %v3369 = vpack.c.bf16 %v3340, %v3339
        %v3370 = vpack.c.bf16 %v3342, %v3341
        %v3371 = vpack.c.bf16 %v3344, %v3343
        %v3372 = vpack.c.bf16 %v3346, %v3345
        %v3373 = vpack.c.bf16 %v3348, %v3347
        %v3374 = vpack.c.bf16 %v3350, %v3349
        %v3375 = vpack.c.bf16 %v3352, %v3351
        %v3376 = vpack.c.bf16 %v3354, %v3353
        %v3377 = vpack.c.bf16 %v3356, %v3355
        %v3378 = vpack.c.bf16 %v3358, %v3357
        %v3379 = vpack.c.bf16 %v3360, %v3359
        %v3380 = vpack.c.bf16 %v3362, %v3361
        %v3381 = vpack.c.bf16 %v3364, %v3363
        %v3382 = vpack.c.bf16 %v3366, %v3365
        %v3399 = vunpack.c.l.b16 %v3367
        %v3400 = vunpack.c.h.b16 %v3367
        %v3401 = vunpack.c.l.b16 %v3368
        %v3402 = vunpack.c.h.b16 %v3368
        %v3403 = vunpack.c.l.b16 %v3369
        %v3404 = vunpack.c.h.b16 %v3369
        %v3405 = vunpack.c.l.b16 %v3370
        %v3406 = vunpack.c.h.b16 %v3370
        %v3407 = vunpack.c.l.b16 %v3371
        %v3408 = vunpack.c.h.b16 %v3371
        %v3409 = vunpack.c.l.b16 %v3372
        %v3410 = vunpack.c.h.b16 %v3372
        %v3411 = vunpack.c.l.b16 %v3373
        %v3412 = vunpack.c.h.b16 %v3373
        %v3413 = vunpack.c.l.b16 %v3374
        %v3414 = vunpack.c.h.b16 %v3374
        %v3415 = vunpack.c.l.b16 %v3375
        %v3416 = vunpack.c.h.b16 %v3375
        %v3417 = vunpack.c.l.b16 %v3376
        %v3418 = vunpack.c.h.b16 %v3376
        %v3419 = vunpack.c.l.b16 %v3377
        %v3420 = vunpack.c.h.b16 %v3377
        %v3421 = vunpack.c.l.b16 %v3378
        %v3422 = vunpack.c.h.b16 %v3378
        %v3423 = vunpack.c.l.b16 %v3379
        %v3424 = vunpack.c.h.b16 %v3379
        %v3425 = vunpack.c.l.b16 %v3380
        %v3426 = vunpack.c.h.b16 %v3380
        %v3427 = vunpack.c.l.b16 %v3381
        %v3428 = vunpack.c.h.b16 %v3381
        %v3429 = vunpack.c.l.b16 %v3382
        %v3430 = vunpack.c.h.b16 %v3382
        %v3431 = vpack.c.b16 %v3399, %v3399
        %v3432 = vpack.c.b16 %v3400, %v3400
        %v3433 = vpack.c.b16 %v3401, %v3401
        %v3434 = vpack.c.b16 %v3402, %v3402
        %v3435 = vpack.c.b16 %v3403, %v3403
        %v3436 = vpack.c.b16 %v3404, %v3404
        %v3437 = vpack.c.b16 %v3405, %v3405
        %v3438 = vpack.c.b16 %v3406, %v3406
        %v3439 = vpack.c.b16 %v3407, %v3407
        %v3440 = vpack.c.b16 %v3408, %v3408
        %v3441 = vpack.c.b16 %v3409, %v3409
        %v3442 = vpack.c.b16 %v3410, %v3410
        %v3443 = vpack.c.b16 %v3411, %v3411
        %v3444 = vpack.c.b16 %v3412, %v3412
        %v3445 = vpack.c.b16 %v3413, %v3413
        %v3446 = vpack.c.b16 %v3414, %v3414
        %v3447 = vpack.c.b16 %v3415, %v3415
        %v3448 = vpack.c.b16 %v3416, %v3416
        %v3449 = vpack.c.b16 %v3417, %v3417
        %v3450 = vpack.c.b16 %v3418, %v3418
        %v3451 = vpack.c.b16 %v3419, %v3419
        %v3452 = vpack.c.b16 %v3420, %v3420
        %v3453 = vpack.c.b16 %v3421, %v3421
        %v3454 = vpack.c.b16 %v3422, %v3422
        %v3455 = vpack.c.b16 %v3423, %v3423
        %v3456 = vpack.c.b16 %v3424, %v3424
        %v3457 = vpack.c.b16 %v3425, %v3425
        %v3458 = vpack.c.b16 %v3426, %v3426
        %v3459 = vpack.c.b16 %v3427, %v3427
        %v3460 = vpack.c.b16 %v3428, %v3428
        %v3461 = vpack.c.b16 %v3429, %v3429
        %v3462 = vpack.c.b16 %v3430, %v3430
        %3495 = vst [vmem:[%s540] sm:$0xf] %v3431
        %3496 = vst [vmem:[%s540 + $0x4] sm:$0xf] %v3432
        %3497 = vst [vmem:[%s540 + $0x8] sm:$0xf] %v3433
        %3498 = vst [vmem:[%s540 + $0xc] sm:$0xf] %v3434
        %3499 = vst [vmem:[%s540 + $0x10] sm:$0xf] %v3435
        %3500 = vst [vmem:[%s540 + $0x14] sm:$0xf] %v3436
        %3501 = vst [vmem:[%s540 + $0x18] sm:$0xf] %v3437
        %3502 = vst [vmem:[%s540 + $0x1c] sm:$0xf] %v3438
        %3503 = vst [vmem:[%s540 + $0x20] sm:$0xf] %v3439
        %3504 = vst [vmem:[%s540 + $0x24] sm:$0xf] %v3440
        %3505 = vst [vmem:[%s540 + $0x28] sm:$0xf] %v3441
        %3506 = vst [vmem:[%s540 + $0x2c] sm:$0xf] %v3442
        %3507 = vst [vmem:[%s540 + $0x30] sm:$0xf] %v3443
        %3508 = vst [vmem:[%s540 + $0x34] sm:$0xf] %v3444
        %3509 = vst [vmem:[%s540 + $0x38] sm:$0xf] %v3445
        %3510 = vst [vmem:[%s540 + $0x3c] sm:$0xf] %v3446
        %3511 = vst [vmem:[%s540 + $0x40] sm:$0xf] %v3447
        %3512 = vst [vmem:[%s540 + $0x44] sm:$0xf] %v3448
        %3513 = vst [vmem:[%s540 + $0x48] sm:$0xf] %v3449
        %3514 = vst [vmem:[%s540 + $0x4c] sm:$0xf] %v3450
        %3515 = vst [vmem:[%s540 + $0x50] sm:$0xf] %v3451
        %3516 = vst [vmem:[%s540 + $0x54] sm:$0xf] %v3452
        %3517 = vst [vmem:[%s540 + $0x58] sm:$0xf] %v3453
        %3518 = vst [vmem:[%s540 + $0x5c] sm:$0xf] %v3454
        %3519 = vst [vmem:[%s540 + $0x60] sm:$0xf] %v3455
        %3520 = vst [vmem:[%s540 + $0x64] sm:$0xf] %v3456
        %3521 = vst [vmem:[%s540 + $0x68] sm:$0xf] %v3457
        %3522 = vst [vmem:[%s540 + $0x6c] sm:$0xf] %v3458
        %3523 = vst [vmem:[%s540 + $0x70] sm:$0xf] %v3459
        %3524 = vst [vmem:[%s540 + $0x74] sm:$0xf] %v3460
        %3525 = vst [vmem:[%s540 + $0x78] sm:$0xf] %v3461
        %3526 = vst [vmem:[%s540 + $0x7c] sm:$0xf] %v3462
        %v3527 = vpack.c.bf16 %v2349, %v2345
        %v3528 = vpack.c.bf16 %v2359, %v2355
        %v3529 = vpack.c.bf16 %v2369, %v2365
        %v3530 = vpack.c.bf16 %v2379, %v2375
        %v3531 = vpack.c.bf16 %v2389, %v2385
        %v3532 = vpack.c.bf16 %v2399, %v2395
        %v3533 = vpack.c.bf16 %v2409, %v2405
        %v3534 = vpack.c.bf16 %v2419, %v2415
        %v3535 = vpack.c.bf16 %v2429, %v2425
        %v3536 = vpack.c.bf16 %v2439, %v2435
        %v3537 = vpack.c.bf16 %v2449, %v2445
        %v3538 = vpack.c.bf16 %v2459, %v2455
        %v3539 = vpack.c.bf16 %v2469, %v2465
        %v3540 = vpack.c.bf16 %v2479, %v2475
        %v3541 = vpack.c.bf16 %v2489, %v2485
        %v3542 = vpack.c.bf16 %v2499, %v2495
        %v3559 = vunpack.c.l.b16 %v3527
        %v3560 = vunpack.c.h.b16 %v3527
        %v3561 = vunpack.c.l.b16 %v3528
        %v3562 = vunpack.c.h.b16 %v3528
        %v3563 = vunpack.c.l.b16 %v3529
        %v3564 = vunpack.c.h.b16 %v3529
        %v3565 = vunpack.c.l.b16 %v3530
        %v3566 = vunpack.c.h.b16 %v3530
        %v3567 = vunpack.c.l.b16 %v3531
        %v3568 = vunpack.c.h.b16 %v3531
        %v3569 = vunpack.c.l.b16 %v3532
        %v3570 = vunpack.c.h.b16 %v3532
        %v3571 = vunpack.c.l.b16 %v3533
        %v3572 = vunpack.c.h.b16 %v3533
        %v3573 = vunpack.c.l.b16 %v3534
        %v3574 = vunpack.c.h.b16 %v3534
        %v3575 = vunpack.c.l.b16 %v3535
        %v3576 = vunpack.c.h.b16 %v3535
        %v3577 = vunpack.c.l.b16 %v3536
        %v3578 = vunpack.c.h.b16 %v3536
        %v3579 = vunpack.c.l.b16 %v3537
        %v3580 = vunpack.c.h.b16 %v3537
        %v3581 = vunpack.c.l.b16 %v3538
        %v3582 = vunpack.c.h.b16 %v3538
        %v3583 = vunpack.c.l.b16 %v3539
        %v3584 = vunpack.c.h.b16 %v3539
        %v3585 = vunpack.c.l.b16 %v3540
        %v3586 = vunpack.c.h.b16 %v3540
        %v3587 = vunpack.c.l.b16 %v3541
        %v3588 = vunpack.c.h.b16 %v3541
        %v3589 = vunpack.c.l.b16 %v3542
        %v3590 = vunpack.c.h.b16 %v3542
        %v3591 = vpack.c.b16 %v3559, %v3559
        %v3592 = vpack.c.b16 %v3560, %v3560
        %v3593 = vpack.c.b16 %v3561, %v3561
        %v3594 = vpack.c.b16 %v3562, %v3562
        %v3595 = vpack.c.b16 %v3563, %v3563
        %v3596 = vpack.c.b16 %v3564, %v3564
        %v3597 = vpack.c.b16 %v3565, %v3565
        %v3598 = vpack.c.b16 %v3566, %v3566
        %v3599 = vpack.c.b16 %v3567, %v3567
        %v3600 = vpack.c.b16 %v3568, %v3568
        %v3601 = vpack.c.b16 %v3569, %v3569
        %v3602 = vpack.c.b16 %v3570, %v3570
        %v3603 = vpack.c.b16 %v3571, %v3571
        %v3604 = vpack.c.b16 %v3572, %v3572
        %v3605 = vpack.c.b16 %v3573, %v3573
        %v3606 = vpack.c.b16 %v3574, %v3574
        %v3607 = vpack.c.b16 %v3575, %v3575
        %v3608 = vpack.c.b16 %v3576, %v3576
        %v3609 = vpack.c.b16 %v3577, %v3577
        %v3610 = vpack.c.b16 %v3578, %v3578
        %v3611 = vpack.c.b16 %v3579, %v3579
        %v3612 = vpack.c.b16 %v3580, %v3580
        %v3613 = vpack.c.b16 %v3581, %v3581
        %v3614 = vpack.c.b16 %v3582, %v3582
        %v3615 = vpack.c.b16 %v3583, %v3583
        %v3616 = vpack.c.b16 %v3584, %v3584
        %v3617 = vpack.c.b16 %v3585, %v3585
        %v3618 = vpack.c.b16 %v3586, %v3586
        %v3619 = vpack.c.b16 %v3587, %v3587
        %v3620 = vpack.c.b16 %v3588, %v3588
        %v3621 = vpack.c.b16 %v3589, %v3589
        %v3622 = vpack.c.b16 %v3590, %v3590
        %3655 = vst [vmem:[%s547] sm:$0xf] %v3591
        %3656 = vst [vmem:[%s547 + $0x4] sm:$0xf] %v3592
        %3657 = vst [vmem:[%s547 + $0x8] sm:$0xf] %v3593
        %3658 = vst [vmem:[%s547 + $0xc] sm:$0xf] %v3594
        %3659 = vst [vmem:[%s547 + $0x10] sm:$0xf] %v3595
        %3660 = vst [vmem:[%s547 + $0x14] sm:$0xf] %v3596
        %3661 = vst [vmem:[%s547 + $0x18] sm:$0xf] %v3597
        %3662 = vst [vmem:[%s547 + $0x1c] sm:$0xf] %v3598
        %3663 = vst [vmem:[%s547 + $0x20] sm:$0xf] %v3599
        %3664 = vst [vmem:[%s547 + $0x24] sm:$0xf] %v3600
        %3665 = vst [vmem:[%s547 + $0x28] sm:$0xf] %v3601
        %3666 = vst [vmem:[%s547 + $0x2c] sm:$0xf] %v3602
        %3667 = vst [vmem:[%s547 + $0x30] sm:$0xf] %v3603
        %3668 = vst [vmem:[%s547 + $0x34] sm:$0xf] %v3604
        %3669 = vst [vmem:[%s547 + $0x38] sm:$0xf] %v3605
        %3670 = vst [vmem:[%s547 + $0x3c] sm:$0xf] %v3606
        %3671 = vst [vmem:[%s547 + $0x40] sm:$0xf] %v3607
        %3672 = vst [vmem:[%s547 + $0x44] sm:$0xf] %v3608
        %3673 = vst [vmem:[%s547 + $0x48] sm:$0xf] %v3609
        %3674 = vst [vmem:[%s547 + $0x4c] sm:$0xf] %v3610
        %3675 = vst [vmem:[%s547 + $0x50] sm:$0xf] %v3611
        %3676 = vst [vmem:[%s547 + $0x54] sm:$0xf] %v3612
        %3677 = vst [vmem:[%s547 + $0x58] sm:$0xf] %v3613
        %3678 = vst [vmem:[%s547 + $0x5c] sm:$0xf] %v3614
        %3679 = vst [vmem:[%s547 + $0x60] sm:$0xf] %v3615
        %3680 = vst [vmem:[%s547 + $0x64] sm:$0xf] %v3616
        %3681 = vst [vmem:[%s547 + $0x68] sm:$0xf] %v3617
        %3682 = vst [vmem:[%s547 + $0x6c] sm:$0xf] %v3618
        %3683 = vst [vmem:[%s547 + $0x70] sm:$0xf] %v3619
        %3684 = vst [vmem:[%s547 + $0x74] sm:$0xf] %v3620
        %3685 = vst [vmem:[%s547 + $0x78] sm:$0xf] %v3621
        %3686 = vst [vmem:[%s547 + $0x7c] sm:$0xf] %v3622
        %v3687 = vmul.f32 %v1961, 0.088388346
        %v3688 = vmul.f32 %v1965, 0.088388346
        %v3689 = vmul.f32 %v1971, 0.088388346
        %v3690 = vmul.f32 %v1975, 0.088388346
        %v3691 = vmul.f32 %v1981, 0.088388346
        %v3692 = vmul.f32 %v1985, 0.088388346
        %v3693 = vmul.f32 %v1991, 0.088388346
        %v3694 = vmul.f32 %v1995, 0.088388346
        %v3695 = vmul.f32 %v2001, 0.088388346
        %v3696 = vmul.f32 %v2005, 0.088388346
        %v3697 = vmul.f32 %v2011, 0.088388346
        %v3698 = vmul.f32 %v2015, 0.088388346
        %v3699 = vmul.f32 %v2021, 0.088388346
        %v3700 = vmul.f32 %v2025, 0.088388346
        %v3701 = vmul.f32 %v2031, 0.088388346
        %v3702 = vmul.f32 %v2035, 0.088388346
        %v3703 = vmul.f32 %v2041, 0.088388346
        %v3704 = vmul.f32 %v2045, 0.088388346
        %v3705 = vmul.f32 %v2051, 0.088388346
        %v3706 = vmul.f32 %v2055, 0.088388346
        %v3707 = vmul.f32 %v2061, 0.088388346
        %v3708 = vmul.f32 %v2065, 0.088388346
        %v3709 = vmul.f32 %v2071, 0.088388346
        %v3710 = vmul.f32 %v2075, 0.088388346
        %v3711 = vmul.f32 %v2081, 0.088388346
        %v3712 = vmul.f32 %v2085, 0.088388346
        %v3713 = vmul.f32 %v2091, 0.088388346
        %v3714 = vmul.f32 %v2095, 0.088388346
        %v3715 = vmul.f32 %v2101, 0.088388346
        %v3716 = vmul.f32 %v2105, 0.088388346
        %v3717 = vmul.f32 %v2111, 0.088388346
        %v3718 = vmul.f32 %v2115, 0.088388346
        %3719 = vrot.lane.b32.xlu0 %v3687, 112
        %v3720 = vpop.permute.xlu0 %3719
        %3721 = vrot.lane.b32.xlu0 %v3688, 112
        %v3722 = vpop.permute.xlu0 %3721
        %3723 = vrot.lane.b32.xlu0 %v3689, 112
        %v3724 = vpop.permute.xlu0 %3723
        %3725 = vrot.lane.b32.xlu0 %v3690, 112
        %v3726 = vpop.permute.xlu0 %3725
        %3727 = vrot.lane.b32.xlu0 %v3691, 112
        %v3728 = vpop.permute.xlu0 %3727
        %3729 = vrot.lane.b32.xlu0 %v3692, 112
        %v3730 = vpop.permute.xlu0 %3729
        %3731 = vrot.lane.b32.xlu0 %v3693, 112
        %v3732 = vpop.permute.xlu0 %3731
        %3733 = vrot.lane.b32.xlu0 %v3694, 112
        %v3734 = vpop.permute.xlu0 %3733
        %3735 = vrot.lane.b32.xlu0 %v3695, 112
        %v3736 = vpop.permute.xlu0 %3735
        %3737 = vrot.lane.b32.xlu0 %v3696, 112
        %v3738 = vpop.permute.xlu0 %3737
        %3739 = vrot.lane.b32.xlu0 %v3697, 112
        %v3740 = vpop.permute.xlu0 %3739
        %3741 = vrot.lane.b32.xlu0 %v3698, 112
        %v3742 = vpop.permute.xlu0 %3741
        %3743 = vrot.lane.b32.xlu0 %v3699, 112
        %v3744 = vpop.permute.xlu0 %3743
        %3745 = vrot.lane.b32.xlu0 %v3700, 112
        %v3746 = vpop.permute.xlu0 %3745
        %3747 = vrot.lane.b32.xlu0 %v3701, 112
        %v3748 = vpop.permute.xlu0 %3747
        %3749 = vrot.lane.b32.xlu0 %v3702, 112
        %v3750 = vpop.permute.xlu0 %3749
        %3751 = vrot.lane.b32.xlu0 %v3703, 112
        %v3752 = vpop.permute.xlu0 %3751
        %3753 = vrot.lane.b32.xlu0 %v3704, 112
        %v3754 = vpop.permute.xlu0 %3753
        %3755 = vrot.lane.b32.xlu0 %v3705, 112
        %v3756 = vpop.permute.xlu0 %3755
        %3757 = vrot.lane.b32.xlu0 %v3706, 112
        %v3758 = vpop.permute.xlu0 %3757
        %3759 = vrot.lane.b32.xlu0 %v3707, 112
        %v3760 = vpop.permute.xlu0 %3759
        %3761 = vrot.lane.b32.xlu0 %v3708, 112
        %v3762 = vpop.permute.xlu0 %3761
        %3763 = vrot.lane.b32.xlu0 %v3709, 112
        %v3764 = vpop.permute.xlu0 %3763
        %3765 = vrot.lane.b32.xlu0 %v3710, 112
        %v3766 = vpop.permute.xlu0 %3765
        %3767 = vrot.lane.b32.xlu0 %v3711, 112
        %v3768 = vpop.permute.xlu0 %3767
        %3769 = vrot.lane.b32.xlu0 %v3712, 112
        %v3770 = vpop.permute.xlu0 %3769
        %3771 = vrot.lane.b32.xlu0 %v3713, 112
        %v3772 = vpop.permute.xlu0 %3771
        %3773 = vrot.lane.b32.xlu0 %v3714, 112
        %v3774 = vpop.permute.xlu0 %3773
        %3775 = vrot.lane.b32.xlu0 %v3715, 112
        %v3776 = vpop.permute.xlu0 %3775
        %3777 = vrot.lane.b32.xlu0 %v3716, 112
        %v3778 = vpop.permute.xlu0 %3777
        %3779 = vrot.lane.b32.xlu0 %v3717, 112
        %v3780 = vpop.permute.xlu0 %3779
        %3781 = vrot.lane.b32.xlu0 %v3718, 112
        %v3782 = vpop.permute.xlu0 %3781
        %3783 = vrot.lane.b32.xlu0 %v3687, 16
        %v3784 = vpop.permute.xlu0 %3783
        %3785 = vrot.lane.b32.xlu0 %v3688, 16
        %v3786 = vpop.permute.xlu0 %3785
        %3787 = vrot.lane.b32.xlu0 %v3689, 16
        %v3788 = vpop.permute.xlu0 %3787
        %3789 = vrot.lane.b32.xlu0 %v3690, 16
        %v3790 = vpop.permute.xlu0 %3789
        %3791 = vrot.lane.b32.xlu0 %v3691, 16
        %v3792 = vpop.permute.xlu0 %3791
        %3793 = vrot.lane.b32.xlu0 %v3692, 16
        %v3794 = vpop.permute.xlu0 %3793
        %3795 = vrot.lane.b32.xlu0 %v3693, 16
        %v3796 = vpop.permute.xlu0 %3795
        %3797 = vrot.lane.b32.xlu0 %v3694, 16
        %v3798 = vpop.permute.xlu0 %3797
        %3799 = vrot.lane.b32.xlu0 %v3695, 16
        %v3800 = vpop.permute.xlu0 %3799
        %3801 = vrot.lane.b32.xlu0 %v3696, 16
        %v3802 = vpop.permute.xlu0 %3801
        %3803 = vrot.lane.b32.xlu0 %v3697, 16
        %v3804 = vpop.permute.xlu0 %3803
        %3805 = vrot.lane.b32.xlu0 %v3698, 16
        %v3806 = vpop.permute.xlu0 %3805
        %3807 = vrot.lane.b32.xlu0 %v3699, 16
        %v3808 = vpop.permute.xlu0 %3807
        %3809 = vrot.lane.b32.xlu0 %v3700, 16
        %v3810 = vpop.permute.xlu0 %3809
        %3811 = vrot.lane.b32.xlu0 %v3701, 16
        %v3812 = vpop.permute.xlu0 %3811
        %3813 = vrot.lane.b32.xlu0 %v3702, 16
        %v3814 = vpop.permute.xlu0 %3813
        %3815 = vrot.lane.b32.xlu0 %v3703, 16
        %v3816 = vpop.permute.xlu0 %3815
        %3817 = vrot.lane.b32.xlu0 %v3704, 16
        %v3818 = vpop.permute.xlu0 %3817
        %3819 = vrot.lane.b32.xlu0 %v3705, 16
        %v3820 = vpop.permute.xlu0 %3819
        %3821 = vrot.lane.b32.xlu0 %v3706, 16
        %v3822 = vpop.permute.xlu0 %3821
        %3823 = vrot.lane.b32.xlu0 %v3707, 16
        %v3824 = vpop.permute.xlu0 %3823
        %3825 = vrot.lane.b32.xlu0 %v3708, 16
        %v3826 = vpop.permute.xlu0 %3825
        %3827 = vrot.lane.b32.xlu0 %v3709, 16
        %v3828 = vpop.permute.xlu0 %3827
        %3829 = vrot.lane.b32.xlu0 %v3710, 16
        %v3830 = vpop.permute.xlu0 %3829
        %3831 = vrot.lane.b32.xlu0 %v3711, 16
        %v3832 = vpop.permute.xlu0 %3831
        %3833 = vrot.lane.b32.xlu0 %v3712, 16
        %v3834 = vpop.permute.xlu0 %3833
        %3835 = vrot.lane.b32.xlu0 %v3713, 16
        %v3836 = vpop.permute.xlu0 %3835
        %3837 = vrot.lane.b32.xlu0 %v3714, 16
        %v3838 = vpop.permute.xlu0 %3837
        %3839 = vrot.lane.b32.xlu0 %v3715, 16
        %v3840 = vpop.permute.xlu0 %3839
        %3841 = vrot.lane.b32.xlu0 %v3716, 16
        %v3842 = vpop.permute.xlu0 %3841
        %3843 = vrot.lane.b32.xlu0 %v3717, 16
        %v3844 = vpop.permute.xlu0 %3843
        %3845 = vrot.lane.b32.xlu0 %v3718, 16
        %v3846 = vpop.permute.xlu0 %3845
        %v3847 = vmul.f32 %v3687, %v2503
        %v3848 = vmul.f32 %v3688, %v2504
        %v3849 = vmul.f32 %v3689, %v2505
        %v3850 = vmul.f32 %v3690, %v2506
        %v3851 = vmul.f32 %v3691, %v2507
        %v3852 = vmul.f32 %v3692, %v2508
        %v3853 = vmul.f32 %v3693, %v2509
        %v3854 = vmul.f32 %v3694, %v2510
        %v3855 = vmul.f32 %v3695, %v2511
        %v3856 = vmul.f32 %v3696, %v2512
        %v3857 = vmul.f32 %v3697, %v2513
        %v3858 = vmul.f32 %v3698, %v2514
        %v3859 = vmul.f32 %v3699, %v2515
        %v3860 = vmul.f32 %v3700, %v2516
        %v3861 = vmul.f32 %v3701, %v2517
        %v3862 = vmul.f32 %v3702, %v2518
        %v3863 = vmul.f32 %v3703, %v2519
        %v3864 = vmul.f32 %v3704, %v2520
        %v3865 = vmul.f32 %v3705, %v2521
        %v3866 = vmul.f32 %v3706, %v2522
        %v3867 = vmul.f32 %v3707, %v2523
        %v3868 = vmul.f32 %v3708, %v2524
        %v3869 = vmul.f32 %v3709, %v2525
        %v3870 = vmul.f32 %v3710, %v2526
        %v3871 = vmul.f32 %v3711, %v2527
        %v3872 = vmul.f32 %v3712, %v2528
        %v3873 = vmul.f32 %v3713, %v2529
        %v3874 = vmul.f32 %v3714, %v2530
        %v3875 = vmul.f32 %v3715, %v2531
        %v3876 = vmul.f32 %v3716, %v2532
        %v3877 = vmul.f32 %v3717, %v2533
        %v3878 = vmul.f32 %v3718, %v2534
        %v3879 = vmul.f32 %v3720, %v2535
        %v3880 = vmul.f32 %v3722, %v2536
        %v3881 = vmul.f32 %v3724, %v2537
        %v3882 = vmul.f32 %v3726, %v2538
        %v3883 = vmul.f32 %v3728, %v2539
        %v3884 = vmul.f32 %v3730, %v2540
        %v3885 = vmul.f32 %v3732, %v2541
        %v3886 = vmul.f32 %v3734, %v2542
        %v3887 = vmul.f32 %v3736, %v2543
        %v3888 = vmul.f32 %v3738, %v2544
        %v3889 = vmul.f32 %v3740, %v2545
        %v3890 = vmul.f32 %v3742, %v2546
        %v3891 = vmul.f32 %v3744, %v2547
        %v3892 = vmul.f32 %v3746, %v2548
        %v3893 = vmul.f32 %v3748, %v2549
        %v3894 = vmul.f32 %v3750, %v2550
        %v3895 = vmul.f32 %v3752, %v2551
        %v3896 = vmul.f32 %v3754, %v2552
        %v3897 = vmul.f32 %v3756, %v2553
        %v3898 = vmul.f32 %v3758, %v2554
        %v3899 = vmul.f32 %v3760, %v2555
        %v3900 = vmul.f32 %v3762, %v2556
        %v3901 = vmul.f32 %v3764, %v2557
        %v3902 = vmul.f32 %v3766, %v2558
        %v3903 = vmul.f32 %v3768, %v2559
        %v3904 = vmul.f32 %v3770, %v2560
        %v3905 = vmul.f32 %v3772, %v2561
        %v3906 = vmul.f32 %v3774, %v2562
        %v3907 = vmul.f32 %v3776, %v2563
        %v3908 = vmul.f32 %v3778, %v2564
        %v3909 = vmul.f32 %v3780, %v2565
        %v3910 = vmul.f32 %v3782, %v2566
        %v3911 = vadd.f32 %v3847, %v3879
        %v3912 = vadd.f32 %v3848, %v3880
        %v3913 = vadd.f32 %v3849, %v3881
        %v3914 = vadd.f32 %v3850, %v3882
        %v3915 = vadd.f32 %v3851, %v3883
        %v3916 = vadd.f32 %v3852, %v3884
        %v3917 = vadd.f32 %v3853, %v3885
        %v3918 = vadd.f32 %v3854, %v3886
        %v3919 = vadd.f32 %v3855, %v3887
        %v3920 = vadd.f32 %v3856, %v3888
        %v3921 = vadd.f32 %v3857, %v3889
        %v3922 = vadd.f32 %v3858, %v3890
        %v3923 = vadd.f32 %v3859, %v3891
        %v3924 = vadd.f32 %v3860, %v3892
        %v3925 = vadd.f32 %v3861, %v3893
        %v3926 = vadd.f32 %v3862, %v3894
        %v3927 = vadd.f32 %v3863, %v3895
        %v3928 = vadd.f32 %v3864, %v3896
        %v3929 = vadd.f32 %v3865, %v3897
        %v3930 = vadd.f32 %v3866, %v3898
        %v3931 = vadd.f32 %v3867, %v3899
        %v3932 = vadd.f32 %v3868, %v3900
        %v3933 = vadd.f32 %v3869, %v3901
        %v3934 = vadd.f32 %v3870, %v3902
        %v3935 = vadd.f32 %v3871, %v3903
        %v3936 = vadd.f32 %v3872, %v3904
        %v3937 = vadd.f32 %v3873, %v3905
        %v3938 = vadd.f32 %v3874, %v3906
        %v3939 = vadd.f32 %v3875, %v3907
        %v3940 = vadd.f32 %v3876, %v3908
        %v3941 = vadd.f32 %v3877, %v3909
        %v3942 = vadd.f32 %v3878, %v3910
        %v3943 = vmul.f32 %v3784, %v2567
        %v3944 = vmul.f32 %v3786, %v2568
        %v3945 = vmul.f32 %v3788, %v2569
        %v3946 = vmul.f32 %v3790, %v2570
        %v3947 = vmul.f32 %v3792, %v2571
        %v3948 = vmul.f32 %v3794, %v2572
        %v3949 = vmul.f32 %v3796, %v2573
        %v3950 = vmul.f32 %v3798, %v2574
        %v3951 = vmul.f32 %v3800, %v2575
        %v3952 = vmul.f32 %v3802, %v2576
        %v3953 = vmul.f32 %v3804, %v2577
        %v3954 = vmul.f32 %v3806, %v2578
        %v3955 = vmul.f32 %v3808, %v2579
        %v3956 = vmul.f32 %v3810, %v2580
        %v3957 = vmul.f32 %v3812, %v2581
        %v3958 = vmul.f32 %v3814, %v2582
        %v3959 = vmul.f32 %v3816, %v2583
        %v3960 = vmul.f32 %v3818, %v2584
        %v3961 = vmul.f32 %v3820, %v2585
        %v3962 = vmul.f32 %v3822, %v2586
        %v3963 = vmul.f32 %v3824, %v2587
        %v3964 = vmul.f32 %v3826, %v2588
        %v3965 = vmul.f32 %v3828, %v2589
        %v3966 = vmul.f32 %v3830, %v2590
        %v3967 = vmul.f32 %v3832, %v2591
        %v3968 = vmul.f32 %v3834, %v2592
        %v3969 = vmul.f32 %v3836, %v2593
        %v3970 = vmul.f32 %v3838, %v2594
        %v3971 = vmul.f32 %v3840, %v2595
        %v3972 = vmul.f32 %v3842, %v2596
        %v3973 = vmul.f32 %v3844, %v2597
        %v3974 = vmul.f32 %v3846, %v2598
        %v3975 = vadd.f32 %v3911, %v3943
        %v3976 = vadd.f32 %v3912, %v3944
        %v3977 = vadd.f32 %v3913, %v3945
        %v3978 = vadd.f32 %v3914, %v3946
        %v3979 = vadd.f32 %v3915, %v3947
        %v3980 = vadd.f32 %v3916, %v3948
        %v3981 = vadd.f32 %v3917, %v3949
        %v3982 = vadd.f32 %v3918, %v3950
        %v3983 = vadd.f32 %v3919, %v3951
        %v3984 = vadd.f32 %v3920, %v3952
        %v3985 = vadd.f32 %v3921, %v3953
        %v3986 = vadd.f32 %v3922, %v3954
        %v3987 = vadd.f32 %v3923, %v3955
        %v3988 = vadd.f32 %v3924, %v3956
        %v3989 = vadd.f32 %v3925, %v3957
        %v3990 = vadd.f32 %v3926, %v3958
        %v3991 = vadd.f32 %v3927, %v3959
        %v3992 = vadd.f32 %v3928, %v3960
        %v3993 = vadd.f32 %v3929, %v3961
        %v3994 = vadd.f32 %v3930, %v3962
        %v3995 = vadd.f32 %v3931, %v3963
        %v3996 = vadd.f32 %v3932, %v3964
        %v3997 = vadd.f32 %v3933, %v3965
        %v3998 = vadd.f32 %v3934, %v3966
        %v3999 = vadd.f32 %v3935, %v3967
        %v4000 = vadd.f32 %v3936, %v3968
        %v4001 = vadd.f32 %v3937, %v3969
        %v4002 = vadd.f32 %v3938, %v3970
        %v4003 = vadd.f32 %v3939, %v3971
        %v4004 = vadd.f32 %v3940, %v3972
        %v4005 = vadd.f32 %v3941, %v3973
        %v4006 = vadd.f32 %v3942, %v3974
        %v4007 = vpack.c.bf16 %v3976, %v3975
        %v4008 = vpack.c.bf16 %v3978, %v3977
        %v4009 = vpack.c.bf16 %v3980, %v3979
        %v4010 = vpack.c.bf16 %v3982, %v3981
        %v4011 = vpack.c.bf16 %v3984, %v3983
        %v4012 = vpack.c.bf16 %v3986, %v3985
        %v4013 = vpack.c.bf16 %v3988, %v3987
        %v4014 = vpack.c.bf16 %v3990, %v3989
        %v4015 = vpack.c.bf16 %v3992, %v3991
        %v4016 = vpack.c.bf16 %v3994, %v3993
        %v4017 = vpack.c.bf16 %v3996, %v3995
        %v4018 = vpack.c.bf16 %v3998, %v3997
        %v4019 = vpack.c.bf16 %v4000, %v3999
        %v4020 = vpack.c.bf16 %v4002, %v4001
        %v4021 = vpack.c.bf16 %v4004, %v4003
        %v4022 = vpack.c.bf16 %v4006, %v4005
        %v4039 = vunpack.c.l.b16 %v4007
        %v4040 = vunpack.c.h.b16 %v4007
        %v4041 = vunpack.c.l.b16 %v4008
        %v4042 = vunpack.c.h.b16 %v4008
        %v4043 = vunpack.c.l.b16 %v4009
        %v4044 = vunpack.c.h.b16 %v4009
        %v4045 = vunpack.c.l.b16 %v4010
        %v4046 = vunpack.c.h.b16 %v4010
        %v4047 = vunpack.c.l.b16 %v4011
        %v4048 = vunpack.c.h.b16 %v4011
        %v4049 = vunpack.c.l.b16 %v4012
        %v4050 = vunpack.c.h.b16 %v4012
        %v4051 = vunpack.c.l.b16 %v4013
        %v4052 = vunpack.c.h.b16 %v4013
        %v4053 = vunpack.c.l.b16 %v4014
        %v4054 = vunpack.c.h.b16 %v4014
        %v4055 = vunpack.c.l.b16 %v4015
        %v4056 = vunpack.c.h.b16 %v4015
        %v4057 = vunpack.c.l.b16 %v4016
        %v4058 = vunpack.c.h.b16 %v4016
        %v4059 = vunpack.c.l.b16 %v4017
        %v4060 = vunpack.c.h.b16 %v4017
        %v4061 = vunpack.c.l.b16 %v4018
        %v4062 = vunpack.c.h.b16 %v4018
        %v4063 = vunpack.c.l.b16 %v4019
        %v4064 = vunpack.c.h.b16 %v4019
        %v4065 = vunpack.c.l.b16 %v4020
        %v4066 = vunpack.c.h.b16 %v4020
        %v4067 = vunpack.c.l.b16 %v4021
        %v4068 = vunpack.c.h.b16 %v4021
        %v4069 = vunpack.c.l.b16 %v4022
        %v4070 = vunpack.c.h.b16 %v4022
        %v4071 = vpack.c.b16 %v4039, %v4039
        %v4072 = vpack.c.b16 %v4040, %v4040
        %v4073 = vpack.c.b16 %v4041, %v4041
        %v4074 = vpack.c.b16 %v4042, %v4042
        %v4075 = vpack.c.b16 %v4043, %v4043
        %v4076 = vpack.c.b16 %v4044, %v4044
        %v4077 = vpack.c.b16 %v4045, %v4045
        %v4078 = vpack.c.b16 %v4046, %v4046
        %v4079 = vpack.c.b16 %v4047, %v4047
        %v4080 = vpack.c.b16 %v4048, %v4048
        %v4081 = vpack.c.b16 %v4049, %v4049
        %v4082 = vpack.c.b16 %v4050, %v4050
        %v4083 = vpack.c.b16 %v4051, %v4051
        %v4084 = vpack.c.b16 %v4052, %v4052
        %v4085 = vpack.c.b16 %v4053, %v4053
        %v4086 = vpack.c.b16 %v4054, %v4054
        %v4087 = vpack.c.b16 %v4055, %v4055
        %v4088 = vpack.c.b16 %v4056, %v4056
        %v4089 = vpack.c.b16 %v4057, %v4057
        %v4090 = vpack.c.b16 %v4058, %v4058
        %v4091 = vpack.c.b16 %v4059, %v4059
        %v4092 = vpack.c.b16 %v4060, %v4060
        %v4093 = vpack.c.b16 %v4061, %v4061
        %v4094 = vpack.c.b16 %v4062, %v4062
        %v4095 = vpack.c.b16 %v4063, %v4063
        %v4096 = vpack.c.b16 %v4064, %v4064
        %v4097 = vpack.c.b16 %v4065, %v4065
        %v4098 = vpack.c.b16 %v4066, %v4066
        %v4099 = vpack.c.b16 %v4067, %v4067
        %v4100 = vpack.c.b16 %v4068, %v4068
        %v4101 = vpack.c.b16 %v4069, %v4069
        %v4102 = vpack.c.b16 %v4070, %v4070
        %s4135 = scalar_lea.vmem %s533, 128 [#allocation13]
        %4136 = vst [vmem:[%s4135] sm:$0xf] %v4071
        %4137 = vst [vmem:[%s4135 + $0x4] sm:$0xf] %v4072
        %4138 = vst [vmem:[%s4135 + $0x8] sm:$0xf] %v4073
        %4139 = vst [vmem:[%s4135 + $0xc] sm:$0xf] %v4074
        %4140 = vst [vmem:[%s4135 + $0x10] sm:$0xf] %v4075
        %4141 = vst [vmem:[%s4135 + $0x14] sm:$0xf] %v4076
        %4142 = vst [vmem:[%s4135 + $0x18] sm:$0xf] %v4077
        %4143 = vst [vmem:[%s4135 + $0x1c] sm:$0xf] %v4078
        %4144 = vst [vmem:[%s4135 + $0x20] sm:$0xf] %v4079
        %4145 = vst [vmem:[%s4135 + $0x24] sm:$0xf] %v4080
        %4146 = vst [vmem:[%s4135 + $0x28] sm:$0xf] %v4081
        %4147 = vst [vmem:[%s4135 + $0x2c] sm:$0xf] %v4082
        %4148 = vst [vmem:[%s4135 + $0x30] sm:$0xf] %v4083
        %4149 = vst [vmem:[%s4135 + $0x34] sm:$0xf] %v4084
        %4150 = vst [vmem:[%s4135 + $0x38] sm:$0xf] %v4085
        %4151 = vst [vmem:[%s4135 + $0x3c] sm:$0xf] %v4086
        %4152 = vst [vmem:[%s4135 + $0x40] sm:$0xf] %v4087
        %4153 = vst [vmem:[%s4135 + $0x44] sm:$0xf] %v4088
        %4154 = vst [vmem:[%s4135 + $0x48] sm:$0xf] %v4089
        %4155 = vst [vmem:[%s4135 + $0x4c] sm:$0xf] %v4090
        %4156 = vst [vmem:[%s4135 + $0x50] sm:$0xf] %v4091
        %4157 = vst [vmem:[%s4135 + $0x54] sm:$0xf] %v4092
        %4158 = vst [vmem:[%s4135 + $0x58] sm:$0xf] %v4093
        %4159 = vst [vmem:[%s4135 + $0x5c] sm:$0xf] %v4094
        %4160 = vst [vmem:[%s4135 + $0x60] sm:$0xf] %v4095
        %4161 = vst [vmem:[%s4135 + $0x64] sm:$0xf] %v4096
        %4162 = vst [vmem:[%s4135 + $0x68] sm:$0xf] %v4097
        %4163 = vst [vmem:[%s4135 + $0x6c] sm:$0xf] %v4098
        %4164 = vst [vmem:[%s4135 + $0x70] sm:$0xf] %v4099
        %4165 = vst [vmem:[%s4135 + $0x74] sm:$0xf] %v4100
        %4166 = vst [vmem:[%s4135 + $0x78] sm:$0xf] %v4101
        %4167 = vst [vmem:[%s4135 + $0x7c] sm:$0xf] %v4102
        %4168 = vrot.lane.b32.xlu0 %v2154, 112
        %v4169 = vpop.permute.xlu0 %4168
        %4170 = vrot.lane.b32.xlu0 %v2158, 112
        %v4171 = vpop.permute.xlu0 %4170
        %4172 = vrot.lane.b32.xlu0 %v2164, 112
        %v4173 = vpop.permute.xlu0 %4172
        %4174 = vrot.lane.b32.xlu0 %v2168, 112
        %v4175 = vpop.permute.xlu0 %4174
        %4176 = vrot.lane.b32.xlu0 %v2174, 112
        %v4177 = vpop.permute.xlu0 %4176
        %4178 = vrot.lane.b32.xlu0 %v2178, 112
        %v4179 = vpop.permute.xlu0 %4178
        %4180 = vrot.lane.b32.xlu0 %v2184, 112
        %v4181 = vpop.permute.xlu0 %4180
        %4182 = vrot.lane.b32.xlu0 %v2188, 112
        %v4183 = vpop.permute.xlu0 %4182
        %4184 = vrot.lane.b32.xlu0 %v2194, 112
        %v4185 = vpop.permute.xlu0 %4184
        %4186 = vrot.lane.b32.xlu0 %v2198, 112
        %v4187 = vpop.permute.xlu0 %4186
        %4188 = vrot.lane.b32.xlu0 %v2204, 112
        %v4189 = vpop.permute.xlu0 %4188
        %4190 = vrot.lane.b32.xlu0 %v2208, 112
        %v4191 = vpop.permute.xlu0 %4190
        %4192 = vrot.lane.b32.xlu0 %v2214, 112
        %v4193 = vpop.permute.xlu0 %4192
        %4194 = vrot.lane.b32.xlu0 %v2218, 112
        %v4195 = vpop.permute.xlu0 %4194
        %4196 = vrot.lane.b32.xlu0 %v2224, 112
        %v4197 = vpop.permute.xlu0 %4196
        %4198 = vrot.lane.b32.xlu0 %v2228, 112
        %v4199 = vpop.permute.xlu0 %4198
        %4200 = vrot.lane.b32.xlu0 %v2234, 112
        %v4201 = vpop.permute.xlu0 %4200
        %4202 = vrot.lane.b32.xlu0 %v2238, 112
        %v4203 = vpop.permute.xlu0 %4202
        %4204 = vrot.lane.b32.xlu0 %v2244, 112
        %v4205 = vpop.permute.xlu0 %4204
        %4206 = vrot.lane.b32.xlu0 %v2248, 112
        %v4207 = vpop.permute.xlu0 %4206
        %4208 = vrot.lane.b32.xlu0 %v2254, 112
        %v4209 = vpop.permute.xlu0 %4208
        %4210 = vrot.lane.b32.xlu0 %v2258, 112
        %v4211 = vpop.permute.xlu0 %4210
        %4212 = vrot.lane.b32.xlu0 %v2264, 112
        %v4213 = vpop.permute.xlu0 %4212
        %4214 = vrot.lane.b32.xlu0 %v2268, 112
        %v4215 = vpop.permute.xlu0 %4214
        %4216 = vrot.lane.b32.xlu0 %v2274, 112
        %v4217 = vpop.permute.xlu0 %4216
        %4218 = vrot.lane.b32.xlu0 %v2278, 112
        %v4219 = vpop.permute.xlu0 %4218
        %4220 = vrot.lane.b32.xlu0 %v2284, 112
        %v4221 = vpop.permute.xlu0 %4220
        %4222 = vrot.lane.b32.xlu0 %v2288, 112
        %v4223 = vpop.permute.xlu0 %4222
        %4224 = vrot.lane.b32.xlu0 %v2294, 112
        %v4225 = vpop.permute.xlu0 %4224
        %4226 = vrot.lane.b32.xlu0 %v2298, 112
        %v4227 = vpop.permute.xlu0 %4226
        %4228 = vrot.lane.b32.xlu0 %v2304, 112
        %v4229 = vpop.permute.xlu0 %4228
        %4230 = vrot.lane.b32.xlu0 %v2308, 112
        %v4231 = vpop.permute.xlu0 %4230
        %4232 = vrot.lane.b32.xlu0 %v2154, 16
        %v4233 = vpop.permute.xlu0 %4232
        %4234 = vrot.lane.b32.xlu0 %v2158, 16
        %v4235 = vpop.permute.xlu0 %4234
        %4236 = vrot.lane.b32.xlu0 %v2164, 16
        %v4237 = vpop.permute.xlu0 %4236
        %4238 = vrot.lane.b32.xlu0 %v2168, 16
        %v4239 = vpop.permute.xlu0 %4238
        %4240 = vrot.lane.b32.xlu0 %v2174, 16
        %v4241 = vpop.permute.xlu0 %4240
        %4242 = vrot.lane.b32.xlu0 %v2178, 16
        %v4243 = vpop.permute.xlu0 %4242
        %4244 = vrot.lane.b32.xlu0 %v2184, 16
        %v4245 = vpop.permute.xlu0 %4244
        %4246 = vrot.lane.b32.xlu0 %v2188, 16
        %v4247 = vpop.permute.xlu0 %4246
        %4248 = vrot.lane.b32.xlu0 %v2194, 16
        %v4249 = vpop.permute.xlu0 %4248
        %4250 = vrot.lane.b32.xlu0 %v2198, 16
        %v4251 = vpop.permute.xlu0 %4250
        %4252 = vrot.lane.b32.xlu0 %v2204, 16
        %v4253 = vpop.permute.xlu0 %4252
        %4254 = vrot.lane.b32.xlu0 %v2208, 16
        %v4255 = vpop.permute.xlu0 %4254
        %4256 = vrot.lane.b32.xlu0 %v2214, 16
        %v4257 = vpop.permute.xlu0 %4256
        %4258 = vrot.lane.b32.xlu0 %v2218, 16
        %v4259 = vpop.permute.xlu0 %4258
        %4260 = vrot.lane.b32.xlu0 %v2224, 16
        %v4261 = vpop.permute.xlu0 %4260
        %4262 = vrot.lane.b32.xlu0 %v2228, 16
        %v4263 = vpop.permute.xlu0 %4262
        %4264 = vrot.lane.b32.xlu0 %v2234, 16
        %v4265 = vpop.permute.xlu0 %4264
        %4266 = vrot.lane.b32.xlu0 %v2238, 16
        %v4267 = vpop.permute.xlu0 %4266
        %4268 = vrot.lane.b32.xlu0 %v2244, 16
        %v4269 = vpop.permute.xlu0 %4268
        %4270 = vrot.lane.b32.xlu0 %v2248, 16
        %v4271 = vpop.permute.xlu0 %4270
        %4272 = vrot.lane.b32.xlu0 %v2254, 16
        %v4273 = vpop.permute.xlu0 %4272
        %4274 = vrot.lane.b32.xlu0 %v2258, 16
        %v4275 = vpop.permute.xlu0 %4274
        %4276 = vrot.lane.b32.xlu0 %v2264, 16
        %v4277 = vpop.permute.xlu0 %4276
        %4278 = vrot.lane.b32.xlu0 %v2268, 16
        %v4279 = vpop.permute.xlu0 %4278
        %4280 = vrot.lane.b32.xlu0 %v2274, 16
        %v4281 = vpop.permute.xlu0 %4280
        %4282 = vrot.lane.b32.xlu0 %v2278, 16
        %v4283 = vpop.permute.xlu0 %4282
        %4284 = vrot.lane.b32.xlu0 %v2284, 16
        %v4285 = vpop.permute.xlu0 %4284
        %4286 = vrot.lane.b32.xlu0 %v2288, 16
        %v4287 = vpop.permute.xlu0 %4286
        %4288 = vrot.lane.b32.xlu0 %v2294, 16
        %v4289 = vpop.permute.xlu0 %4288
        %4290 = vrot.lane.b32.xlu0 %v2298, 16
        %v4291 = vpop.permute.xlu0 %4290
        %4292 = vrot.lane.b32.xlu0 %v2304, 16
        %v4293 = vpop.permute.xlu0 %4292
        %4294 = vrot.lane.b32.xlu0 %v2308, 16
        %v4295 = vpop.permute.xlu0 %4294
        %v4296 = vmul.f32 %v2154, %v2503
        %v4297 = vmul.f32 %v2158, %v2504
        %v4298 = vmul.f32 %v2164, %v2505
        %v4299 = vmul.f32 %v2168, %v2506
        %v4300 = vmul.f32 %v2174, %v2507
        %v4301 = vmul.f32 %v2178, %v2508
        %v4302 = vmul.f32 %v2184, %v2509
        %v4303 = vmul.f32 %v2188, %v2510
        %v4304 = vmul.f32 %v2194, %v2511
        %v4305 = vmul.f32 %v2198, %v2512
        %v4306 = vmul.f32 %v2204, %v2513
        %v4307 = vmul.f32 %v2208, %v2514
        %v4308 = vmul.f32 %v2214, %v2515
        %v4309 = vmul.f32 %v2218, %v2516
        %v4310 = vmul.f32 %v2224, %v2517
        %v4311 = vmul.f32 %v2228, %v2518
        %v4312 = vmul.f32 %v2234, %v2519
        %v4313 = vmul.f32 %v2238, %v2520
        %v4314 = vmul.f32 %v2244, %v2521
        %v4315 = vmul.f32 %v2248, %v2522
        %v4316 = vmul.f32 %v2254, %v2523
        %v4317 = vmul.f32 %v2258, %v2524
        %v4318 = vmul.f32 %v2264, %v2525
        %v4319 = vmul.f32 %v2268, %v2526
        %v4320 = vmul.f32 %v2274, %v2527
        %v4321 = vmul.f32 %v2278, %v2528
        %v4322 = vmul.f32 %v2284, %v2529
        %v4323 = vmul.f32 %v2288, %v2530
        %v4324 = vmul.f32 %v2294, %v2531
        %v4325 = vmul.f32 %v2298, %v2532
        %v4326 = vmul.f32 %v2304, %v2533
        %v4327 = vmul.f32 %v2308, %v2534
        %v4328 = vmul.f32 %v4169, %v2535
        %v4329 = vmul.f32 %v4171, %v2536
        %v4330 = vmul.f32 %v4173, %v2537
        %v4331 = vmul.f32 %v4175, %v2538
        %v4332 = vmul.f32 %v4177, %v2539
        %v4333 = vmul.f32 %v4179, %v2540
        %v4334 = vmul.f32 %v4181, %v2541
        %v4335 = vmul.f32 %v4183, %v2542
        %v4336 = vmul.f32 %v4185, %v2543
        %v4337 = vmul.f32 %v4187, %v2544
        %v4338 = vmul.f32 %v4189, %v2545
        %v4339 = vmul.f32 %v4191, %v2546
        %v4340 = vmul.f32 %v4193, %v2547
        %v4341 = vmul.f32 %v4195, %v2548
        %v4342 = vmul.f32 %v4197, %v2549
        %v4343 = vmul.f32 %v4199, %v2550
        %v4344 = vmul.f32 %v4201, %v2551
        %v4345 = vmul.f32 %v4203, %v2552
        %v4346 = vmul.f32 %v4205, %v2553
        %v4347 = vmul.f32 %v4207, %v2554
        %v4348 = vmul.f32 %v4209, %v2555
        %v4349 = vmul.f32 %v4211, %v2556
        %v4350 = vmul.f32 %v4213, %v2557
        %v4351 = vmul.f32 %v4215, %v2558
        %v4352 = vmul.f32 %v4217, %v2559
        %v4353 = vmul.f32 %v4219, %v2560
        %v4354 = vmul.f32 %v4221, %v2561
        %v4355 = vmul.f32 %v4223, %v2562
        %v4356 = vmul.f32 %v4225, %v2563
        %v4357 = vmul.f32 %v4227, %v2564
        %v4358 = vmul.f32 %v4229, %v2565
        %v4359 = vmul.f32 %v4231, %v2566
        %v4360 = vadd.f32 %v4296, %v4328
        %v4361 = vadd.f32 %v4297, %v4329
        %v4362 = vadd.f32 %v4298, %v4330
        %v4363 = vadd.f32 %v4299, %v4331
        %v4364 = vadd.f32 %v4300, %v4332
        %v4365 = vadd.f32 %v4301, %v4333
        %v4366 = vadd.f32 %v4302, %v4334
        %v4367 = vadd.f32 %v4303, %v4335
        %v4368 = vadd.f32 %v4304, %v4336
        %v4369 = vadd.f32 %v4305, %v4337
        %v4370 = vadd.f32 %v4306, %v4338
        %v4371 = vadd.f32 %v4307, %v4339
        %v4372 = vadd.f32 %v4308, %v4340
        %v4373 = vadd.f32 %v4309, %v4341
        %v4374 = vadd.f32 %v4310, %v4342
        %v4375 = vadd.f32 %v4311, %v4343
        %v4376 = vadd.f32 %v4312, %v4344
        %v4377 = vadd.f32 %v4313, %v4345
        %v4378 = vadd.f32 %v4314, %v4346
        %v4379 = vadd.f32 %v4315, %v4347
        %v4380 = vadd.f32 %v4316, %v4348
        %v4381 = vadd.f32 %v4317, %v4349
        %v4382 = vadd.f32 %v4318, %v4350
        %v4383 = vadd.f32 %v4319, %v4351
        %v4384 = vadd.f32 %v4320, %v4352
        %v4385 = vadd.f32 %v4321, %v4353
        %v4386 = vadd.f32 %v4322, %v4354
        %v4387 = vadd.f32 %v4323, %v4355
        %v4388 = vadd.f32 %v4324, %v4356
        %v4389 = vadd.f32 %v4325, %v4357
        %v4390 = vadd.f32 %v4326, %v4358
        %v4391 = vadd.f32 %v4327, %v4359
        %v4392 = vmul.f32 %v4233, %v2567
        %v4393 = vmul.f32 %v4235, %v2568
        %v4394 = vmul.f32 %v4237, %v2569
        %v4395 = vmul.f32 %v4239, %v2570
        %v4396 = vmul.f32 %v4241, %v2571
        %v4397 = vmul.f32 %v4243, %v2572
        %v4398 = vmul.f32 %v4245, %v2573
        %v4399 = vmul.f32 %v4247, %v2574
        %v4400 = vmul.f32 %v4249, %v2575
        %v4401 = vmul.f32 %v4251, %v2576
        %v4402 = vmul.f32 %v4253, %v2577
        %v4403 = vmul.f32 %v4255, %v2578
        %v4404 = vmul.f32 %v4257, %v2579
        %v4405 = vmul.f32 %v4259, %v2580
        %v4406 = vmul.f32 %v4261, %v2581
        %v4407 = vmul.f32 %v4263, %v2582
        %v4408 = vmul.f32 %v4265, %v2583
        %v4409 = vmul.f32 %v4267, %v2584
        %v4410 = vmul.f32 %v4269, %v2585
        %v4411 = vmul.f32 %v4271, %v2586
        %v4412 = vmul.f32 %v4273, %v2587
        %v4413 = vmul.f32 %v4275, %v2588
        %v4414 = vmul.f32 %v4277, %v2589
        %v4415 = vmul.f32 %v4279, %v2590
        %v4416 = vmul.f32 %v4281, %v2591
        %v4417 = vmul.f32 %v4283, %v2592
        %v4418 = vmul.f32 %v4285, %v2593
        %v4419 = vmul.f32 %v4287, %v2594
        %v4420 = vmul.f32 %v4289, %v2595
        %v4421 = vmul.f32 %v4291, %v2596
        %v4422 = vmul.f32 %v4293, %v2597
        %v4423 = vmul.f32 %v4295, %v2598
        %v4424 = vadd.f32 %v4360, %v4392
        %v4425 = vadd.f32 %v4361, %v4393
        %v4426 = vadd.f32 %v4362, %v4394
        %v4427 = vadd.f32 %v4363, %v4395
        %v4428 = vadd.f32 %v4364, %v4396
        %v4429 = vadd.f32 %v4365, %v4397
        %v4430 = vadd.f32 %v4366, %v4398
        %v4431 = vadd.f32 %v4367, %v4399
        %v4432 = vadd.f32 %v4368, %v4400
        %v4433 = vadd.f32 %v4369, %v4401
        %v4434 = vadd.f32 %v4370, %v4402
        %v4435 = vadd.f32 %v4371, %v4403
        %v4436 = vadd.f32 %v4372, %v4404
        %v4437 = vadd.f32 %v4373, %v4405
        %v4438 = vadd.f32 %v4374, %v4406
        %v4439 = vadd.f32 %v4375, %v4407
        %v4440 = vadd.f32 %v4376, %v4408
        %v4441 = vadd.f32 %v4377, %v4409
        %v4442 = vadd.f32 %v4378, %v4410
        %v4443 = vadd.f32 %v4379, %v4411
        %v4444 = vadd.f32 %v4380, %v4412
        %v4445 = vadd.f32 %v4381, %v4413
        %v4446 = vadd.f32 %v4382, %v4414
        %v4447 = vadd.f32 %v4383, %v4415
        %v4448 = vadd.f32 %v4384, %v4416
        %v4449 = vadd.f32 %v4385, %v4417
        %v4450 = vadd.f32 %v4386, %v4418
        %v4451 = vadd.f32 %v4387, %v4419
        %v4452 = vadd.f32 %v4388, %v4420
        %v4453 = vadd.f32 %v4389, %v4421
        %v4454 = vadd.f32 %v4390, %v4422
        %v4455 = vadd.f32 %v4391, %v4423
        %v4456 = vpack.c.bf16 %v4425, %v4424
        %v4457 = vpack.c.bf16 %v4427, %v4426
        %v4458 = vpack.c.bf16 %v4429, %v4428
        %v4459 = vpack.c.bf16 %v4431, %v4430
        %v4460 = vpack.c.bf16 %v4433, %v4432
        %v4461 = vpack.c.bf16 %v4435, %v4434
        %v4462 = vpack.c.bf16 %v4437, %v4436
        %v4463 = vpack.c.bf16 %v4439, %v4438
        %v4464 = vpack.c.bf16 %v4441, %v4440
        %v4465 = vpack.c.bf16 %v4443, %v4442
        %v4466 = vpack.c.bf16 %v4445, %v4444
        %v4467 = vpack.c.bf16 %v4447, %v4446
        %v4468 = vpack.c.bf16 %v4449, %v4448
        %v4469 = vpack.c.bf16 %v4451, %v4450
        %v4470 = vpack.c.bf16 %v4453, %v4452
        %v4471 = vpack.c.bf16 %v4455, %v4454
        %v4488 = vunpack.c.l.b16 %v4456
        %v4489 = vunpack.c.h.b16 %v4456
        %v4490 = vunpack.c.l.b16 %v4457
        %v4491 = vunpack.c.h.b16 %v4457
        %v4492 = vunpack.c.l.b16 %v4458
        %v4493 = vunpack.c.h.b16 %v4458
        %v4494 = vunpack.c.l.b16 %v4459
        %v4495 = vunpack.c.h.b16 %v4459
        %v4496 = vunpack.c.l.b16 %v4460
        %v4497 = vunpack.c.h.b16 %v4460
        %v4498 = vunpack.c.l.b16 %v4461
        %v4499 = vunpack.c.h.b16 %v4461
        %v4500 = vunpack.c.l.b16 %v4462
        %v4501 = vunpack.c.h.b16 %v4462
        %v4502 = vunpack.c.l.b16 %v4463
        %v4503 = vunpack.c.h.b16 %v4463
        %v4504 = vunpack.c.l.b16 %v4464
        %v4505 = vunpack.c.h.b16 %v4464
        %v4506 = vunpack.c.l.b16 %v4465
        %v4507 = vunpack.c.h.b16 %v4465
        %v4508 = vunpack.c.l.b16 %v4466
        %v4509 = vunpack.c.h.b16 %v4466
        %v4510 = vunpack.c.l.b16 %v4467
        %v4511 = vunpack.c.h.b16 %v4467
        %v4512 = vunpack.c.l.b16 %v4468
        %v4513 = vunpack.c.h.b16 %v4468
        %v4514 = vunpack.c.l.b16 %v4469
        %v4515 = vunpack.c.h.b16 %v4469
        %v4516 = vunpack.c.l.b16 %v4470
        %v4517 = vunpack.c.h.b16 %v4470
        %v4518 = vunpack.c.l.b16 %v4471
        %v4519 = vunpack.c.h.b16 %v4471
        %v4520 = vpack.c.b16 %v4488, %v4488
        %v4521 = vpack.c.b16 %v4489, %v4489
        %v4522 = vpack.c.b16 %v4490, %v4490
        %v4523 = vpack.c.b16 %v4491, %v4491
        %v4524 = vpack.c.b16 %v4492, %v4492
        %v4525 = vpack.c.b16 %v4493, %v4493
        %v4526 = vpack.c.b16 %v4494, %v4494
        %v4527 = vpack.c.b16 %v4495, %v4495
        %v4528 = vpack.c.b16 %v4496, %v4496
        %v4529 = vpack.c.b16 %v4497, %v4497
        %v4530 = vpack.c.b16 %v4498, %v4498
        %v4531 = vpack.c.b16 %v4499, %v4499
        %v4532 = vpack.c.b16 %v4500, %v4500
        %v4533 = vpack.c.b16 %v4501, %v4501
        %v4534 = vpack.c.b16 %v4502, %v4502
        %v4535 = vpack.c.b16 %v4503, %v4503
        %v4536 = vpack.c.b16 %v4504, %v4504
        %v4537 = vpack.c.b16 %v4505, %v4505
        %v4538 = vpack.c.b16 %v4506, %v4506
        %v4539 = vpack.c.b16 %v4507, %v4507
        %v4540 = vpack.c.b16 %v4508, %v4508
        %v4541 = vpack.c.b16 %v4509, %v4509
        %v4542 = vpack.c.b16 %v4510, %v4510
        %v4543 = vpack.c.b16 %v4511, %v4511
        %v4544 = vpack.c.b16 %v4512, %v4512
        %v4545 = vpack.c.b16 %v4513, %v4513
        %v4546 = vpack.c.b16 %v4514, %v4514
        %v4547 = vpack.c.b16 %v4515, %v4515
        %v4548 = vpack.c.b16 %v4516, %v4516
        %v4549 = vpack.c.b16 %v4517, %v4517
        %v4550 = vpack.c.b16 %v4518, %v4518
        %v4551 = vpack.c.b16 %v4519, %v4519
        %s4584 = scalar_lea.vmem %s540, 128 [#allocation14]
        %4585 = vst [vmem:[%s4584] sm:$0xf] %v4520
        %4586 = vst [vmem:[%s4584 + $0x4] sm:$0xf] %v4521
        %4587 = vst [vmem:[%s4584 + $0x8] sm:$0xf] %v4522
        %4588 = vst [vmem:[%s4584 + $0xc] sm:$0xf] %v4523
        %4589 = vst [vmem:[%s4584 + $0x10] sm:$0xf] %v4524
        %4590 = vst [vmem:[%s4584 + $0x14] sm:$0xf] %v4525
        %4591 = vst [vmem:[%s4584 + $0x18] sm:$0xf] %v4526
        %4592 = vst [vmem:[%s4584 + $0x1c] sm:$0xf] %v4527
        %4593 = vst [vmem:[%s4584 + $0x20] sm:$0xf] %v4528
        %4594 = vst [vmem:[%s4584 + $0x24] sm:$0xf] %v4529
        %4595 = vst [vmem:[%s4584 + $0x28] sm:$0xf] %v4530
        %4596 = vst [vmem:[%s4584 + $0x2c] sm:$0xf] %v4531
        %4597 = vst [vmem:[%s4584 + $0x30] sm:$0xf] %v4532
        %4598 = vst [vmem:[%s4584 + $0x34] sm:$0xf] %v4533
        %4599 = vst [vmem:[%s4584 + $0x38] sm:$0xf] %v4534
        %4600 = vst [vmem:[%s4584 + $0x3c] sm:$0xf] %v4535
        %4601 = vst [vmem:[%s4584 + $0x40] sm:$0xf] %v4536
        %4602 = vst [vmem:[%s4584 + $0x44] sm:$0xf] %v4537
        %4603 = vst [vmem:[%s4584 + $0x48] sm:$0xf] %v4538
        %4604 = vst [vmem:[%s4584 + $0x4c] sm:$0xf] %v4539
        %4605 = vst [vmem:[%s4584 + $0x50] sm:$0xf] %v4540
        %4606 = vst [vmem:[%s4584 + $0x54] sm:$0xf] %v4541
        %4607 = vst [vmem:[%s4584 + $0x58] sm:$0xf] %v4542
        %4608 = vst [vmem:[%s4584 + $0x5c] sm:$0xf] %v4543
        %4609 = vst [vmem:[%s4584 + $0x60] sm:$0xf] %v4544
        %4610 = vst [vmem:[%s4584 + $0x64] sm:$0xf] %v4545
        %4611 = vst [vmem:[%s4584 + $0x68] sm:$0xf] %v4546
        %4612 = vst [vmem:[%s4584 + $0x6c] sm:$0xf] %v4547
        %4613 = vst [vmem:[%s4584 + $0x70] sm:$0xf] %v4548
        %4614 = vst [vmem:[%s4584 + $0x74] sm:$0xf] %v4549
        %4615 = vst [vmem:[%s4584 + $0x78] sm:$0xf] %v4550
        %4616 = vst [vmem:[%s4584 + $0x7c] sm:$0xf] %v4551
        %v4617 = vpack.c.bf16 %v2351, %v2347
        %v4618 = vpack.c.bf16 %v2361, %v2357
        %v4619 = vpack.c.bf16 %v2371, %v2367
        %v4620 = vpack.c.bf16 %v2381, %v2377
        %v4621 = vpack.c.bf16 %v2391, %v2387
        %v4622 = vpack.c.bf16 %v2401, %v2397
        %v4623 = vpack.c.bf16 %v2411, %v2407
        %v4624 = vpack.c.bf16 %v2421, %v2417
        %v4625 = vpack.c.bf16 %v2431, %v2427
        %v4626 = vpack.c.bf16 %v2441, %v2437
        %v4627 = vpack.c.bf16 %v2451, %v2447
        %v4628 = vpack.c.bf16 %v2461, %v2457
        %v4629 = vpack.c.bf16 %v2471, %v2467
        %v4630 = vpack.c.bf16 %v2481, %v2477
        %v4631 = vpack.c.bf16 %v2491, %v2487
        %v4632 = vpack.c.bf16 %v2501, %v2497
        %v4649 = vunpack.c.l.b16 %v4617
        %v4650 = vunpack.c.h.b16 %v4617
        %v4651 = vunpack.c.l.b16 %v4618
        %v4652 = vunpack.c.h.b16 %v4618
        %v4653 = vunpack.c.l.b16 %v4619
        %v4654 = vunpack.c.h.b16 %v4619
        %v4655 = vunpack.c.l.b16 %v4620
        %v4656 = vunpack.c.h.b16 %v4620
        %v4657 = vunpack.c.l.b16 %v4621
        %v4658 = vunpack.c.h.b16 %v4621
        %v4659 = vunpack.c.l.b16 %v4622
        %v4660 = vunpack.c.h.b16 %v4622
        %v4661 = vunpack.c.l.b16 %v4623
        %v4662 = vunpack.c.h.b16 %v4623
        %v4663 = vunpack.c.l.b16 %v4624
        %v4664 = vunpack.c.h.b16 %v4624
        %v4665 = vunpack.c.l.b16 %v4625
        %v4666 = vunpack.c.h.b16 %v4625
        %v4667 = vunpack.c.l.b16 %v4626
        %v4668 = vunpack.c.h.b16 %v4626
        %v4669 = vunpack.c.l.b16 %v4627
        %v4670 = vunpack.c.h.b16 %v4627
        %v4671 = vunpack.c.l.b16 %v4628
        %v4672 = vunpack.c.h.b16 %v4628
        %v4673 = vunpack.c.l.b16 %v4629
        %v4674 = vunpack.c.h.b16 %v4629
        %v4675 = vunpack.c.l.b16 %v4630
        %v4676 = vunpack.c.h.b16 %v4630
        %v4677 = vunpack.c.l.b16 %v4631
        %v4678 = vunpack.c.h.b16 %v4631
        %v4679 = vunpack.c.l.b16 %v4632
        %v4680 = vunpack.c.h.b16 %v4632
        %v4681 = vpack.c.b16 %v4649, %v4649
        %v4682 = vpack.c.b16 %v4650, %v4650
        %v4683 = vpack.c.b16 %v4651, %v4651
        %v4684 = vpack.c.b16 %v4652, %v4652
        %v4685 = vpack.c.b16 %v4653, %v4653
        %v4686 = vpack.c.b16 %v4654, %v4654
        %v4687 = vpack.c.b16 %v4655, %v4655
        %v4688 = vpack.c.b16 %v4656, %v4656
        %v4689 = vpack.c.b16 %v4657, %v4657
        %v4690 = vpack.c.b16 %v4658, %v4658
        %v4691 = vpack.c.b16 %v4659, %v4659
        %v4692 = vpack.c.b16 %v4660, %v4660
        %v4693 = vpack.c.b16 %v4661, %v4661
        %v4694 = vpack.c.b16 %v4662, %v4662
        %v4695 = vpack.c.b16 %v4663, %v4663
        %v4696 = vpack.c.b16 %v4664, %v4664
        %v4697 = vpack.c.b16 %v4665, %v4665
        %v4698 = vpack.c.b16 %v4666, %v4666
        %v4699 = vpack.c.b16 %v4667, %v4667
        %v4700 = vpack.c.b16 %v4668, %v4668
        %v4701 = vpack.c.b16 %v4669, %v4669
        %v4702 = vpack.c.b16 %v4670, %v4670
        %v4703 = vpack.c.b16 %v4671, %v4671
        %v4704 = vpack.c.b16 %v4672, %v4672
        %v4705 = vpack.c.b16 %v4673, %v4673
        %v4706 = vpack.c.b16 %v4674, %v4674
        %v4707 = vpack.c.b16 %v4675, %v4675
        %v4708 = vpack.c.b16 %v4676, %v4676
        %v4709 = vpack.c.b16 %v4677, %v4677
        %v4710 = vpack.c.b16 %v4678, %v4678
        %v4711 = vpack.c.b16 %v4679, %v4679
        %v4712 = vpack.c.b16 %v4680, %v4680
        %s4745 = scalar_lea.vmem %s547, 128 [#allocation16]
        %4746 = vst [vmem:[%s4745] sm:$0xf] %v4681
        %4747 = vst [vmem:[%s4745 + $0x4] sm:$0xf] %v4682
        %4748 = vst [vmem:[%s4745 + $0x8] sm:$0xf] %v4683
        %4749 = vst [vmem:[%s4745 + $0xc] sm:$0xf] %v4684
        %4750 = vst [vmem:[%s4745 + $0x10] sm:$0xf] %v4685
        %4751 = vst [vmem:[%s4745 + $0x14] sm:$0xf] %v4686
        %4752 = vst [vmem:[%s4745 + $0x18] sm:$0xf] %v4687
        %4753 = vst [vmem:[%s4745 + $0x1c] sm:$0xf] %v4688
        %4754 = vst [vmem:[%s4745 + $0x20] sm:$0xf] %v4689
        %4755 = vst [vmem:[%s4745 + $0x24] sm:$0xf] %v4690
        %4756 = vst [vmem:[%s4745 + $0x28] sm:$0xf] %v4691
        %4757 = vst [vmem:[%s4745 + $0x2c] sm:$0xf] %v4692
        %4758 = vst [vmem:[%s4745 + $0x30] sm:$0xf] %v4693
        %4759 = vst [vmem:[%s4745 + $0x34] sm:$0xf] %v4694
        %4760 = vst [vmem:[%s4745 + $0x38] sm:$0xf] %v4695
        %4761 = vst [vmem:[%s4745 + $0x3c] sm:$0xf] %v4696
        %4762 = vst [vmem:[%s4745 + $0x40] sm:$0xf] %v4697
        %4763 = vst [vmem:[%s4745 + $0x44] sm:$0xf] %v4698
        %4764 = vst [vmem:[%s4745 + $0x48] sm:$0xf] %v4699
        %4765 = vst [vmem:[%s4745 + $0x4c] sm:$0xf] %v4700
        %4766 = vst [vmem:[%s4745 + $0x50] sm:$0xf] %v4701
        %4767 = vst [vmem:[%s4745 + $0x54] sm:$0xf] %v4702
        %4768 = vst [vmem:[%s4745 + $0x58] sm:$0xf] %v4703
        %4769 = vst [vmem:[%s4745 + $0x5c] sm:$0xf] %v4704
        %4770 = vst [vmem:[%s4745 + $0x60] sm:$0xf] %v4705
        %4771 = vst [vmem:[%s4745 + $0x64] sm:$0xf] %v4706
        %4772 = vst [vmem:[%s4745 + $0x68] sm:$0xf] %v4707
        %4773 = vst [vmem:[%s4745 + $0x6c] sm:$0xf] %v4708
        %4774 = vst [vmem:[%s4745 + $0x70] sm:$0xf] %v4709
        %4775 = vst [vmem:[%s4745 + $0x74] sm:$0xf] %v4710
        %4776 = vst [vmem:[%s4745 + $0x78] sm:$0xf] %v4711
        %4777 = vst [vmem:[%s4745 + $0x7c] sm:$0xf] %v4712
        %s4778 = sand.u32 %s229, 1
        %s4779 = scalar_lea.sflag [#allocation4], %s4778
        %s4780 = sand.u32 %s229, 1
        %s4781 = smul.addr %s4780, 256
        %s4782 = scalar_lea.vmem [#allocation13], %s4781
        %s4783 = sand.u32 %s33, 1
        %s4784 = scalar_lea.sflag [#allocation15], %s4783
        %s4785 = sand.u32 %s255, 1
        %s4786 = smul.addr %s4785, 256
        %s4787 = scalar_lea.vmem [#allocation14], %s4786
        %s4788 = sand.u32 %s33, 1
        %s4789 = scalar_lea.sflag [#allocation15], %s4788
        %s4790 = sand.u32 %s281, 1
        %s4791 = smul.addr %s4790, 256
        %s4792 = scalar_lea.vmem [#allocation16], %s4791
        // Predicated region
        $region81: #{tpu_custom_call.1} parent=51 // pred_check
          %p4793 = pneg %p239
        $region82: #{tpu_custom_call.1} parent=51 // pred_check_branch
          %4795 = sbr.rel (%p4793) target = $region84
        $region83: #{tpu_custom_call.1} parent=51 // pred_region
          #allocation18 [shape = 'u32[6]{0}', space=smem, size = 0x18, scoped, tag = 'DMA stride descriptor']
          %s4796 = smul.u32 32, %s33
          %s4798 = ssub.s32 4096, 4096
          %4799 = vsyncadd %s4779, %s4798
          %s4800 = smul.addr %s4796, 64
          %s4801 = scalar_lea.hbm %s8, %s4800
          %s4803 = sshll.u32 1, 14
          %s4804 = sxor.u32 4294967295, %s4803
          %s4807 = sshll.u32 7, 18
          %s4808 = sxor.u32 4294967295, %s4807
          %s4809 = sand.u32 0, %s4808
          %s4811 = sor.u32 %s4809, 0
          %s4812 = sshll.u32 %s4782, 4
          %s4813 = int_to_ptr.vmem [resolvable:$true] %s4812
          %4819 = sst [smem:[#allocation18]] 2048
          %s4820 = scalar_lea.smem [#allocation18], 1
          %4821 = sst [smem:[%s4820]] 4096
          %s4822 = scalar_lea.smem [#allocation18], 2
          %4823 = sst [smem:[%s4822]] 32
          %s4824 = scalar_lea.smem [#allocation18], 3
          %4825 = sst [smem:[%s4824]] 64
          %s4826 = scalar_lea.smem [#allocation18], 4
          %4827 = sst [smem:[%s4826]] 64
          %s4828 = scalar_lea.smem [#allocation18], 5
          %4829 = sst [smem:[%s4828]] 4
          %4831 = dma.general %s4813, 4096, %s4801, %s4779, 131072, [#allocation18], %s4811, 0
        $region84: #{tpu_custom_call.1} parent=51 // pred_fallthru
          _
        // Predicated region
        $region85: #{tpu_custom_call.1} parent=51 // pred_check
          %p4832 = pneg %p265
        $region86: #{tpu_custom_call.1} parent=51 // pred_check_branch
          %4834 = sbr.rel (%p4832) target = $region88
        $region87: #{tpu_custom_call.1} parent=51 // pred_region
          #allocation20 [shape = 'u32[6]{0}', space=smem, size = 0x18, scoped, tag = 'DMA stride descriptor']
          %s4835 = smul.u32 32, %s33
          %s4837 = ssub.s32 4096, 4096
          %4838 = vsyncadd %s4784, %s4837
          %s4839 = smul.addr %s4835, 64
          %s4840 = scalar_lea.hbm %s9, %s4839
          %s4842 = sshll.u32 1, 14
          %s4843 = sxor.u32 4294967295, %s4842
          %s4846 = sshll.u32 7, 18
          %s4847 = sxor.u32 4294967295, %s4846
          %s4848 = sand.u32 0, %s4847
          %s4850 = sor.u32 %s4848, 0
          %s4851 = sshll.u32 %s4787, 4
          %s4852 = int_to_ptr.vmem [resolvable:$true] %s4851
          %4858 = sst [smem:[#allocation20]] 2048
          %s4859 = scalar_lea.smem [#allocation20], 1
          %4860 = sst [smem:[%s4859]] 4096
          %s4861 = scalar_lea.smem [#allocation20], 2
          %4862 = sst [smem:[%s4861]] 32
          %s4863 = scalar_lea.smem [#allocation20], 3
          %4864 = sst [smem:[%s4863]] 64
          %s4865 = scalar_lea.smem [#allocation20], 4
          %4866 = sst [smem:[%s4865]] 64
          %s4867 = scalar_lea.smem [#allocation20], 5
          %4868 = sst [smem:[%s4867]] 4
          %4870 = dma.general %s4852, 4096, %s4840, %s4784, 131072, [#allocation20], %s4850, 0
        $region88: #{tpu_custom_call.1} parent=51 // pred_fallthru
          _
        // Predicated region
        $region89: #{tpu_custom_call.1} parent=51 // pred_check
          %p4871 = pneg %p291
        $region90: #{tpu_custom_call.1} parent=51 // pred_check_branch
          %4873 = sbr.rel (%p4871) target = $region92
        $region91: #{tpu_custom_call.1} parent=51 // pred_region
          #allocation22 [shape = 'u32[6]{0}', space=smem, size = 0x18, scoped, tag = 'DMA stride descriptor']
          %s4874 = smul.u32 32, %s33
          %s4876 = ssub.s32 4096, 4096
          %4877 = vsyncadd %s4789, %s4876
          %s4878 = smul.addr %s4874, 64
          %s4879 = scalar_lea.hbm %s10, %s4878
          %s4881 = sshll.u32 1, 14
          %s4882 = sxor.u32 4294967295, %s4881
          %s4885 = sshll.u32 7, 18
          %s4886 = sxor.u32 4294967295, %s4885
          %s4887 = sand.u32 0, %s4886
          %s4889 = sor.u32 %s4887, 0
          %s4890 = sshll.u32 %s4792, 4
          %s4891 = int_to_ptr.vmem [resolvable:$true] %s4890
          %4897 = sst [smem:[#allocation22]] 2048
          %s4898 = scalar_lea.smem [#allocation22], 1
          %4899 = sst [smem:[%s4898]] 4096
          %s4900 = scalar_lea.smem [#allocation22], 2
          %4901 = sst [smem:[%s4900]] 32
          %s4902 = scalar_lea.smem [#allocation22], 3
          %4903 = sst [smem:[%s4902]] 64
          %s4904 = scalar_lea.smem [#allocation22], 4
          %4905 = sst [smem:[%s4904]] 64
          %s4906 = scalar_lea.smem [#allocation22], 5
          %4907 = sst [smem:[%s4906]] 4
          %4909 = dma.general %s4891, 4096, %s4879, %s4789, 131072, [#allocation22], %s4889, 0
        $region92: #{tpu_custom_call.1} parent=51 // pred_fallthru
          _
      $region52: #{tpu_custom_call.1} parent=5 // pred_fallthru
        _
      %p4910 = scmp.le.s32.totalorder 2, %s28
      // Predicated region
      $region93: #{tpu_custom_call.1} parent=5 // pred_check
        %p4911 = pneg %p4910
      $region94: #{tpu_custom_call.1} parent=5 // pred_check_branch
        %4913 = sbr.rel (%p4911) target = $region96
      $region95: #{tpu_custom_call.1} parent=5 // pred_region
        %s4914 = ssub.s32 %s28, 2
        // Predicated region
        $region97: #{tpu_custom_call.1} parent=95 // pred_check
          %p4915 = pneg %p245
        $region98: #{tpu_custom_call.1} parent=95 // pred_check_branch
          %4917 = sbr.rel (%p4915) target = $region100
        $region99: #{tpu_custom_call.1} parent=95 // pred_region
          %s4918 = sand.u32 %s230, 1
          %s4919 = scalar_lea.sflag [#allocation4], %s4918
          %s4920 = sand.u32 %s230, 1
          %s4921 = smul.addr %s4920, 256
          %s4922 = scalar_lea.vmem [#allocation13], %s4921
          %4923 = dma.done %s4919, 4096
        $region100: #{tpu_custom_call.1} parent=95 // pred_fallthru
          _
        // Predicated region
        $region101: #{tpu_custom_call.1} parent=95 // pred_check
          %p4924 = pneg %p271
        $region102: #{tpu_custom_call.1} parent=95 // pred_check_branch
          %4926 = sbr.rel (%p4924) target = $region104
        $region103: #{tpu_custom_call.1} parent=95 // pred_region
          %s4927 = sand.u32 %s34, 1
          %s4928 = scalar_lea.sflag [#allocation15], %s4927
          %s4929 = sand.u32 %s256, 1
          %s4930 = smul.addr %s4929, 256
          %s4931 = scalar_lea.vmem [#allocation14], %s4930
          %4932 = dma.done %s4928, 4096
        $region104: #{tpu_custom_call.1} parent=95 // pred_fallthru
          _
        // Predicated region
        $region105: #{tpu_custom_call.1} parent=95 // pred_check
          %p4933 = pneg %p297
        $region106: #{tpu_custom_call.1} parent=95 // pred_check_branch
          %4935 = sbr.rel (%p4933) target = $region108
        $region107: #{tpu_custom_call.1} parent=95 // pred_region
          %s4936 = sand.u32 %s34, 1
          %s4937 = scalar_lea.sflag [#allocation15], %s4936
          %s4938 = sand.u32 %s282, 1
          %s4939 = smul.addr %s4938, 256
          %s4940 = scalar_lea.vmem [#allocation16], %s4939
          %4941 = dma.done %s4937, 4096
        $region108: #{tpu_custom_call.1} parent=95 // pred_fallthru
          _
      $region96: #{tpu_custom_call.1} parent=5 // pred_fallthru
        _
    $region6: #{tpu_custom_call.1} parent=1 // loop_footer
      %s32 = sadd.s32 1, %s28
    $region7: #{tpu_custom_call.1} parent=1 // loop_footer_branch
      %27 = sbr.rel target = $region3
    $region8: #{tpu_custom_call.1} parent=1 // loop_exit
      _
    %4942 = vsyncpa [#allocation3], 1
    %s4943 = scalar_lea.sflag [#allocation3], 1
    %4944 = vsyncpa %s4943, 1
    %4945 = vsyncpa [#allocation6], 1
    %4946 = vsyncpa [#allocation9], 1
    %4947 = vsyncpa [#allocation4], 1
    %s4948 = scalar_lea.sflag [#allocation4], 1
    %4949 = vsyncpa %s4948, 1
    %4950 = vsyncpa [#allocation15], 1
    %s4951 = scalar_lea.sflag [#allocation15], 1
    %4952 = vsyncpa %s4951, 1

</llo_original>
